<compile_context>
chip_gen: v5e
topology: v5e:2x2
jax: 0.10.0
libtpu: 0.0.40
codegen_flags: <defaults>
</compile_context>

<pallas_src>
import jax
import jax.numpy as jnp
from jax import lax
from jax.experimental import pallas as pl
from jax.experimental.pallas import tpu as pltpu


# ----------------------------------------------------------------------------
# Fused GEMM (bf16 in, f32 acc) + per-channel bias + LeakyReLU(0.2), bf16 out
# ----------------------------------------------------------------------------
def _gemm_bias_lrelu_kernel(w_ref, x_ref, b_ref, o_ref):
    # w: (OC, K) bf16, x: (K, tm) bf16, b: (OC, 1) f32  ->  o: (OC, tm) bf16
    acc = jnp.dot(w_ref[...], x_ref[...], preferred_element_type=jnp.float32)
    acc = acc + b_ref[...]                      # f32 epilogue (lane-dense)
    acc = jnp.where(acc > 0, acc, 0.2 * acc)    # LeakyReLU(0.2)
    o_ref[...] = acc.astype(o_ref.dtype)        # bf16 writeback


def fused_gemm_lrelu(w2_bf16, patches_bf16, bias_f32):
    """out[OC, M] = lrelu(w2 @ patches + bias), bf16.  Lane axis = M (pixels)."""
    OC, K = w2_bf16.shape
    K2, M = patches_bf16.shape
    assert K == K2
    M0 = M

    # Always pad the pixel axis to a multiple of 128 -> lane-dense stores on every
    # layer (padded columns are independent garbage and sliced off below).
    padn = (-M) % 128
    if padn:
        patches_bf16 = jnp.pad(patches_bf16, ((0, 0), (0, padn)))
    Mp = M + padn

    # Tile selection: largest 128-multiple divisor of Mp, capped at 4096.
    #  - layer 1 (Mp=8192): tm=4096, grid=(2,)  -> one block per TC on v7x,
    #    only one extra ~0.35us grid step on single-TC v5e/v6e.
    #  - all other layers:  tm=Mp,   grid=(1,).
    tm = Mp
    for cand in (4096, 2048, 1024, 512, 256, 128):
        if Mp >= cand and Mp % cand == 0:
            tm = cand
            break
    grid = (Mp // tm,)

    cost = pl.CostEstimate(
        flops=2 * OC * K * Mp,
        transcendentals=0,
        bytes_accessed=(OC * K * 2) + (K * Mp * 2) + (OC * 4) + (OC * Mp * 2),
    )

    out = pl.pallas_call(
        _gemm_bias_lrelu_kernel,
        out_shape=jax.ShapeDtypeStruct((OC, Mp), jnp.bfloat16),
        grid_spec=pltpu.PrefetchScalarGridSpec(
            num_scalar_prefetch=0,
            grid=grid,
            in_specs=[
                pl.BlockSpec((OC, K), lambda i: (0, 0)),   # weights: resident
                pl.BlockSpec((K, tm), lambda i: (0, i)),   # patch columns
                pl.BlockSpec((OC, 1), lambda i: (0, 0)),   # folded-BN bias
            ],
            out_specs=pl.BlockSpec((OC, tm), lambda i: (0, i)),
        ),
        compiler_params=pltpu.CompilerParams(
            dimension_semantics=("parallel",)),
        cost_estimate=cost,
    )(w2_bf16, patches_bf16, bias_f32)

    return out[:, :M0] if M0 != Mp else out


# ----------------------------------------------------------------------------
# Conv2d(4,2,1, bias=False) + folded BatchNorm + LeakyReLU via im2col + Pallas.
# Activations flow in channel-first (C, N, H, W) bf16 layout (no transposes).
# ----------------------------------------------------------------------------
def conv_bn_lrelu(x_cnhw, w_oihw, scale, bias, *, stride=2, pad=1):
    C, N, H, W = x_cnhw.shape
    OC, IC, KH, KW = w_oihw.shape
    assert IC == C
    OH = (H + 2 * pad - KH) // stride + 1
    OW = (W + 2 * pad - KW) // stride + 1

    # Transposed patch matrix (K, M), rows ordered (kh, kw, c), cols (n, oh, ow).
    # No activation transpose: stacking the taps of a C-first tensor gives the
    # required layout directly.
    xp = jnp.pad(x_cnhw, ((0, 0), (0, 0), (pad, pad), (pad, pad)))
    taps = []
    for ki in range(KH):
        for kj in range(KW):
            taps.append(xp[:, :, ki:ki + stride * OH:stride,
                           kj:kj + stride * OW:stride])
    pat = jnp.stack(taps, axis=0)                  # (KH*KW, C, N, OH, OW)
    patches_T = pat.reshape(KH * KW * IC, N * OH * OW)

    # Reorder the (tiny) weight columns once to (kh, kw, c), fold the BN scale
    # in f32, then cast to bf16.
    w2 = (w_oihw.transpose(0, 2, 3, 1).reshape(OC, KH * KW * IC)
          .astype(jnp.float32) * scale.astype(jnp.float32)[:, None]
          ).astype(jnp.bfloat16)
    b = bias.reshape(OC, 1).astype(jnp.float32)

    out = fused_gemm_lrelu(w2, patches_T, b)       # (OC, N*OH*OW) bf16
    return out.reshape(OC, N, OH, OW)              # stays channel-first


# ----------------------------------------------------------------------------
# Parameter init (deterministic, DCGAN-style) and forward pass
# ----------------------------------------------------------------------------
def init_params(key, c_dim, df_dim):
    chans = [c_dim, df_dim, df_dim * 2, df_dim * 4, df_dim * 8, df_dim * 16]
    eps = 1e-5
    convs = []
    for li in range(5):
        key, kw, kg, kb, km, kv = jax.random.split(key, 6)
        ic, oc = chans[li], chans[li + 1]
        w = 0.02 * jax.random.normal(kw, (oc, ic, 4, 4), jnp.float32)
        if li == 0:
            # layer1 has no BatchNorm -> identity affine
            scale = jnp.ones((oc,), jnp.float32)
            bias = jnp.zeros((oc,), jnp.float32)
        else:
            gamma = jax.random.uniform(kg, (oc,), jnp.float32, 0.8, 1.2)
            beta = 0.1 * jax.random.normal(kb, (oc,), jnp.float32)
            r_mean = 0.1 * jax.random.normal(km, (oc,), jnp.float32)
            r_var = jax.random.uniform(kv, (oc,), jnp.float32, 0.5, 1.5)
            scale = gamma / jnp.sqrt(r_var + eps)
            bias = beta - r_mean * scale
        convs.append({"w": w, "scale": scale, "bias": bias})
    key, kw5 = jax.random.split(key)
    w5 = 0.02 * jax.random.normal(kw5, (1, chans[5], 4, 4), jnp.float32)
    return {"convs": convs, "w5": w5}


def discriminator_forward(x_nchw, params):
    # Single entry transpose + bf16 cast; everything downstream stays (C,N,H,W) bf16.
    h = x_nchw.transpose(1, 0, 2, 3).astype(jnp.bfloat16)
    for layer in params["convs"]:
        h = conv_bn_lrelu(h, layer["w"], layer["scale"], layer["bias"])
        # Dropout2d(0.25): identity in eval mode.
    h4 = h.transpose(1, 0, 2, 3).astype(jnp.float32)   # (N, df_dim*16, 4, 4) NCHW

    # layer5: 4x4 'valid' Conv2d -> 1 channel + Sigmoid.  Degenerate (N, 1) GEMM:
    # evaluated with plain jnp (Pallas launch overhead would dwarf the ~8 KFLOP).
    logits = jnp.einsum("nchw,ochw->no", h4, params["w5"].astype(jnp.float32))
    outputs = jax.nn.sigmoid(logits).reshape(-1)        # == .view(-1, 1).squeeze(1)
    return h4, outputs


# ----------------------------------------------------------------------------
# Plain-JAX f32 reference (for an in-script correctness check)
# ----------------------------------------------------------------------------
def _reference_forward(x, params):
    h = x
    for layer in params["convs"]:
        y = lax.conv_general_dilated(
            h, layer["w"], window_strides=(2, 2), padding=((1, 1), (1, 1)),
            dimension_numbers=("NCHW", "OIHW", "NCHW"))
        y = (y * layer["scale"][None, :, None, None]
             + layer["bias"][None, :, None, None])
        h = jnp.where(y > 0, y, 0.2 * y)
    logits = jnp.einsum("nchw,ochw->no", h, params["w5"])
    return h, jax.nn.sigmoid(logits).reshape(-1)


if __name__ == "__main__":
    c_dim, df_dim = 3, 8
    N = 2
    # 5 stride-2 convs followed by a 4x4 'valid' conv require 128x128 input.
    key = jax.random.PRNGKey(0)
    key, kx = jax.random.split(key)
    x = jax.random.normal(kx, (N, c_dim, 128, 128), jnp.float32)
    params = init_params(key, c_dim, df_dim)

    fwd = jax.jit(discriminator_forward)
    h4, outputs = fwd(x, params)
    jax.block_until_ready((h4, outputs))

    assert h4.shape == (N, df_dim * 16, 4, 4), h4.shape
    assert outputs.shape == (N,), outputs.shape

    # Correctness check against the f32 reference (bf16 activations -> loose tol).
    h4_ref, out_ref = jax.jit(_reference_forward)(x, params)
    jax.block_until_ready((h4_ref, out_ref))
    h4_err = float(jnp.max(jnp.abs(h4 - h4_ref)) /
                   (jnp.max(jnp.abs(h4_ref)) + 1e-6))
    out_err = float(jnp.max(jnp.abs(outputs - out_ref)))
    assert h4_err < 0.15, f"h4 mismatch: normalized max err {h4_err}"
    assert out_err < 0.10, f"outputs mismatch: max abs err {out_err}"

    print("KERNEL_OK")
</pallas_src>

<mosaic_0001>
module attributes {stable_mosaic.version = 11 : i64} {
  func.func @_gemm_bias_lrelu_kernel(%arg0: i32, %arg1: memref<8x48xbf16, #tpu.memory_space<vmem>>, %arg2: memref<48x4096xbf16, #tpu.memory_space<vmem>>, %arg3: memref<8x1xf32, #tpu.memory_space<vmem>>, %arg4: memref<8x4096xbf16, #tpu.memory_space<vmem>>) attributes {dimension_semantics = [#tpu.dimension_semantics<parallel>], iteration_bounds = array<i64: 2>, scalar_prefetch = 0 : i64, scratch_operands = 0 : i64, tpu.core_type = #tpu.core_type<tc>, window_params = [{pipeline_mode = #tpu.pipeline_mode<synchronous>, transform_indices = @transform_0, window_bounds = array<i64: 8, 48>}, {transform_indices = @transform_1, window_bounds = array<i64: 48, 4096>}, {pipeline_mode = #tpu.pipeline_mode<synchronous>, transform_indices = @transform_2, window_bounds = array<i64: 8, 1>}, {transform_indices = @transform_3, window_bounds = array<i64: 8, 4096>}]} {
    %c0 = arith.constant 0 : index
    %c0_0 = arith.constant 0 : index
    %0 = vector.load %arg1[%c0, %c0_0] : memref<8x48xbf16, #tpu.memory_space<vmem>>, vector<8x48xbf16>
    %c0_1 = arith.constant 0 : index
    %c0_2 = arith.constant 0 : index
    %1 = vector.load %arg2[%c0_1, %c0_2] : memref<48x4096xbf16, #tpu.memory_space<vmem>>, vector<48x4096xbf16>
    %cst = arith.constant dense<0.000000e+00> : vector<8x4096xf32>
    %2 = tpu.matmul %0, %1, %cst {dimension_numbers = #tpu.dot_dimension_numbers<[1], [0], [0], [1], [0, 0, 1, 1], [], []>} : vector<8x48xbf16>, vector<48x4096xbf16>, vector<8x4096xf32> -> vector<8x4096xf32>
    %c0_3 = arith.constant 0 : index
    %c0_4 = arith.constant 0 : index
    %3 = vector.load %arg3[%c0_3, %c0_4] : memref<8x1xf32, #tpu.memory_space<vmem>>, vector<8x1xf32>
    %4 = vector.broadcast %3 : vector<8x1xf32> to vector<8x4096xf32>
    %5 = arith.addf %2, %4 : vector<8x4096xf32>
    %cst_5 = arith.constant 0.000000e+00 : f32
    %6 = vector.broadcast %cst_5 : f32 to vector<8x4096xf32>
    %7 = arith.cmpf ogt, %5, %6 : vector<8x4096xf32>
    %cst_6 = arith.constant 2.000000e-01 : f32
    %8 = vector.broadcast %cst_6 : f32 to vector<8x4096xf32>
    %9 = arith.mulf %8, %5 : vector<8x4096xf32>
    %10 = arith.select %7, %5, %9 : vector<8x4096xi1>, vector<8x4096xf32>
    %11 = arith.truncf %10 : vector<8x4096xf32> to vector<8x4096xbf16>
    %c0_7 = arith.constant 0 : index
    %c0_8 = arith.constant 0 : index
    %12 = vector.load %arg4[%c0_7, %c0_8] : memref<8x4096xbf16, #tpu.memory_space<vmem>>, vector<8x4096xbf16>
    tpu.vector_store %arg4[%c0_7, %c0_8], %11 {strides = array<i32>} : memref<8x4096xbf16, #tpu.memory_space<vmem>>, vector<8x4096xbf16>,
    return
  }
  func.func @transform_0(%arg0: i32) -> (i32, i32) {
    %c0_i32 = arith.constant 0 : i32
    %c0_i32_0 = arith.constant 0 : i32
    %c0_i32_1 = arith.constant 0 : i32
    return %c0_i32, %c0_i32_0 : i32, i32
  }
  func.func @transform_1(%arg0: i32) -> (i32, i32) {
    %c0_i32 = arith.constant 0 : i32
    %c0_i32_0 = arith.constant 0 : i32
    return %c0_i32, %arg0 : i32, i32
  }
  func.func @transform_2(%arg0: i32) -> (i32, i32) {
    %c0_i32 = arith.constant 0 : i32
    %c0_i32_0 = arith.constant 0 : i32
    %c0_i32_1 = arith.constant 0 : i32
    return %c0_i32, %c0_i32_0 : i32, i32
  }
  func.func @transform_3(%arg0: i32) -> (i32, i32) {
    %c0_i32 = arith.constant 0 : i32
    %c0_i32_0 = arith.constant 0 : i32
    return %c0_i32, %arg0 : i32, i32
  }
}

module attributes {stable_mosaic.version = 11 : i64} {
  func.func @_gemm_bias_lrelu_kernel(%arg0: i32, %arg1: memref<16x128xbf16, #tpu.memory_space<vmem>>, %arg2: memref<128x2048xbf16, #tpu.memory_space<vmem>>, %arg3: memref<16x1xf32, #tpu.memory_space<vmem>>, %arg4: memref<16x2048xbf16, #tpu.memory_space<vmem>>) attributes {dimension_semantics = [#tpu.dimension_semantics<parallel>], iteration_bounds = array<i64: 1>, scalar_prefetch = 0 : i64, scratch_operands = 0 : i64, tpu.core_type = #tpu.core_type<tc>, window_params = [{pipeline_mode = #tpu.pipeline_mode<synchronous>, transform_indices = @transform_0, window_bounds = array<i64: 16, 128>}, {transform_indices = @transform_1, window_bounds = array<i64: 128, 2048>}, {pipeline_mode = #tpu.pipeline_mode<synchronous>, transform_indices = @transform_2, window_bounds = array<i64: 16, 1>}, {transform_indices = @transform_3, window_bounds = array<i64: 16, 2048>}]} {
    %c0 = arith.constant 0 : index
    %c0_0 = arith.constant 0 : index
    %0 = vector.load %arg1[%c0, %c0_0] : memref<16x128xbf16, #tpu.memory_space<vmem>>, vector<16x128xbf16>
    %c0_1 = arith.constant 0 : index
    %c0_2 = arith.constant 0 : index
    %1 = vector.load %arg2[%c0_1, %c0_2] : memref<128x2048xbf16, #tpu.memory_space<vmem>>, vector<128x2048xbf16>
    %cst = arith.constant dense<0.000000e+00> : vector<16x2048xf32>
    %2 = tpu.matmul %0, %1, %cst {dimension_numbers = #tpu.dot_dimension_numbers<[1], [0], [0], [1], [0, 0, 1, 1], [], []>} : vector<16x128xbf16>, vector<128x2048xbf16>, vector<16x2048xf32> -> vector<16x2048xf32>
    %c0_3 = arith.constant 0 : index
    %c0_4 = arith.constant 0 : index
    %3 = vector.load %arg3[%c0_3, %c0_4] : memref<16x1xf32, #tpu.memory_space<vmem>>, vector<16x1xf32>
    %4 = vector.broadcast %3 : vector<16x1xf32> to vector<16x2048xf32>
    %5 = arith.addf %2, %4 : vector<16x2048xf32>
    %cst_5 = arith.constant 0.000000e+00 : f32
    %6 = vector.broadcast %cst_5 : f32 to vector<16x2048xf32>
    %7 = arith.cmpf ogt, %5, %6 : vector<16x2048xf32>
    %cst_6 = arith.constant 2.000000e-01 : f32
    %8 = vector.broadcast %cst_6 : f32 to vector<16x2048xf32>
    %9 = arith.mulf %8, %5 : vector<16x2048xf32>
    %10 = arith.select %7, %5, %9 : vector<16x2048xi1>, vector<16x2048xf32>
    %11 = arith.truncf %10 : vector<16x2048xf32> to vector<16x2048xbf16>
    %c0_7 = arith.constant 0 : index
    %c0_8 = arith.constant 0 : index
    %12 = vector.load %arg4[%c0_7, %c0_8] : memref<16x2048xbf16, #tpu.memory_space<vmem>>, vector<16x2048xbf16>
    tpu.vector_store %arg4[%c0_7, %c0_8], %11 {strides = array<i32>} : memref<16x2048xbf16, #tpu.memory_space<vmem>>, vector<16x2048xbf16>,
    return
  }
  func.func @transform_0(%arg0: i32) -> (i32, i32) {
    %c0_i32 = arith.constant 0 : i32
    %c0_i32_0 = arith.constant 0 : i32
    %c0_i32_1 = arith.constant 0 : i32
    return %c0_i32, %c0_i32_0 : i32, i32
  }
  func.func @transform_1(%arg0: i32) -> (i32, i32) {
    %c0_i32 = arith.constant 0 : i32
    %c0_i32_0 = arith.constant 0 : i32
    return %c0_i32, %arg0 : i32, i32
  }
  func.func @transform_2(%arg0: i32) -> (i32, i32) {
    %c0_i32 = arith.constant 0 : i32
    %c0_i32_0 = arith.constant 0 : i32
    %c0_i32_1 = arith.constant 0 : i32
    return %c0_i32, %c0_i32_0 : i32, i32
  }
  func.func @transform_3(%arg0: i32) -> (i32, i32) {
    %c0_i32 = arith.constant 0 : i32
    %c0_i32_0 = arith.constant 0 : i32
    return %c0_i32, %arg0 : i32, i32
  }
}

module attributes {stable_mosaic.version = 11 : i64} {
  func.func @_gemm_bias_lrelu_kernel(%arg0: i32, %arg1: memref<32x256xbf16, #tpu.memory_space<vmem>>, %arg2: memref<256x512xbf16, #tpu.memory_space<vmem>>, %arg3: memref<32x1xf32, #tpu.memory_space<vmem>>, %arg4: memref<32x512xbf16, #tpu.memory_space<vmem>>) attributes {dimension_semantics = [#tpu.dimension_semantics<parallel>], iteration_bounds = array<i64: 1>, scalar_prefetch = 0 : i64, scratch_operands = 0 : i64, tpu.core_type = #tpu.core_type<tc>, window_params = [{pipeline_mode = #tpu.pipeline_mode<synchronous>, transform_indices = @transform_0, window_bounds = array<i64: 32, 256>}, {transform_indices = @transform_1, window_bounds = array<i64: 256, 512>}, {pipeline_mode = #tpu.pipeline_mode<synchronous>, transform_indices = @transform_2, window_bounds = array<i64: 32, 1>}, {transform_indices = @transform_3, window_bounds = array<i64: 32, 512>}]} {
    %c0 = arith.constant 0 : index
    %c0_0 = arith.constant 0 : index
    %0 = vector.load %arg1[%c0, %c0_0] : memref<32x256xbf16, #tpu.memory_space<vmem>>, vector<32x256xbf16>
    %c0_1 = arith.constant 0 : index
    %c0_2 = arith.constant 0 : index
    %1 = vector.load %arg2[%c0_1, %c0_2] : memref<256x512xbf16, #tpu.memory_space<vmem>>, vector<256x512xbf16>
    %cst = arith.constant dense<0.000000e+00> : vector<32x512xf32>
    %2 = tpu.matmul %0, %1, %cst {dimension_numbers = #tpu.dot_dimension_numbers<[1], [0], [0], [1], [0, 0, 1, 1], [], []>} : vector<32x256xbf16>, vector<256x512xbf16>, vector<32x512xf32> -> vector<32x512xf32>
    %c0_3 = arith.constant 0 : index
    %c0_4 = arith.constant 0 : index
    %3 = vector.load %arg3[%c0_3, %c0_4] : memref<32x1xf32, #tpu.memory_space<vmem>>, vector<32x1xf32>
    %4 = vector.broadcast %3 : vector<32x1xf32> to vector<32x512xf32>
    %5 = arith.addf %2, %4 : vector<32x512xf32>
    %cst_5 = arith.constant 0.000000e+00 : f32
    %6 = vector.broadcast %cst_5 : f32 to vector<32x512xf32>
    %7 = arith.cmpf ogt, %5, %6 : vector<32x512xf32>
    %cst_6 = arith.constant 2.000000e-01 : f32
    %8 = vector.broadcast %cst_6 : f32 to vector<32x512xf32>
    %9 = arith.mulf %8, %5 : vector<32x512xf32>
    %10 = arith.select %7, %5, %9 : vector<32x512xi1>, vector<32x512xf32>
    %11 = arith.truncf %10 : vector<32x512xf32> to vector<32x512xbf16>
    %c0_7 = arith.constant 0 : index
    %c0_8 = arith.constant 0 : index
    %12 = vector.load %arg4[%c0_7, %c0_8] : memref<32x512xbf16, #tpu.memory_space<vmem>>, vector<32x512xbf16>
    tpu.vector_store %arg4[%c0_7, %c0_8], %11 {strides = array<i32>} : memref<32x512xbf16, #tpu.memory_space<vmem>>, vector<32x512xbf16>,
    return
  }
  func.func @transform_0(%arg0: i32) -> (i32, i32) {
    %c0_i32 = arith.constant 0 : i32
    %c0_i32_0 = arith.constant 0 : i32
    %c0_i32_1 = arith.constant 0 : i32
    return %c0_i32, %c0_i32_0 : i32, i32
  }
  func.func @transform_1(%arg0: i32) -> (i32, i32) {
    %c0_i32 = arith.constant 0 : i32
    %c0_i32_0 = arith.constant 0 : i32
    return %c0_i32, %arg0 : i32, i32
  }
  func.func @transform_2(%arg0: i32) -> (i32, i32) {
    %c0_i32 = arith.constant 0 : i32
    %c0_i32_0 = arith.constant 0 : i32
    %c0_i32_1 = arith.constant 0 : i32
    return %c0_i32, %c0_i32_0 : i32, i32
  }
  func.func @transform_3(%arg0: i32) -> (i32, i32) {
    %c0_i32 = arith.constant 0 : i32
    %c0_i32_0 = arith.constant 0 : i32
    return %c0_i32, %arg0 : i32, i32
  }
}

module attributes {stable_mosaic.version = 11 : i64} {
  func.func @_gemm_bias_lrelu_kernel(%arg0: i32, %arg1: memref<64x512xbf16, #tpu.memory_space<vmem>>, %arg2: memref<512x128xbf16, #tpu.memory_space<vmem>>, %arg3: memref<64x1xf32, #tpu.memory_space<vmem>>, %arg4: memref<64x128xbf16, #tpu.memory_space<vmem>>) attributes {dimension_semantics = [#tpu.dimension_semantics<parallel>], iteration_bounds = array<i64: 1>, scalar_prefetch = 0 : i64, scratch_operands = 0 : i64, tpu.core_type = #tpu.core_type<tc>, window_params = [{pipeline_mode = #tpu.pipeline_mode<synchronous>, transform_indices = @transform_0, window_bounds = array<i64: 64, 512>}, {transform_indices = @transform_1, window_bounds = array<i64: 512, 128>}, {pipeline_mode = #tpu.pipeline_mode<synchronous>, transform_indices = @transform_2, window_bounds = array<i64: 64, 1>}, {transform_indices = @transform_3, window_bounds = array<i64: 64, 128>}]} {
    %c0 = arith.constant 0 : index
    %c0_0 = arith.constant 0 : index
    %0 = vector.load %arg1[%c0, %c0_0] : memref<64x512xbf16, #tpu.memory_space<vmem>>, vector<64x512xbf16>
    %c0_1 = arith.constant 0 : index
    %c0_2 = arith.constant 0 : index
    %1 = vector.load %arg2[%c0_1, %c0_2] : memref<512x128xbf16, #tpu.memory_space<vmem>>, vector<512x128xbf16>
    %cst = arith.constant dense<0.000000e+00> : vector<64x128xf32>
    %2 = tpu.matmul %0, %1, %cst {dimension_numbers = #tpu.dot_dimension_numbers<[1], [0], [0], [1], [0, 0, 1, 1], [], []>} : vector<64x512xbf16>, vector<512x128xbf16>, vector<64x128xf32> -> vector<64x128xf32>
    %c0_3 = arith.constant 0 : index
    %c0_4 = arith.constant 0 : index
    %3 = vector.load %arg3[%c0_3, %c0_4] : memref<64x1xf32, #tpu.memory_space<vmem>>, vector<64x1xf32>
    %4 = vector.broadcast %3 : vector<64x1xf32> to vector<64x128xf32>
    %5 = arith.addf %2, %4 : vector<64x128xf32>
    %cst_5 = arith.constant 0.000000e+00 : f32
    %6 = vector.broadcast %cst_5 : f32 to vector<64x128xf32>
    %7 = arith.cmpf ogt, %5, %6 : vector<64x128xf32>
    %cst_6 = arith.constant 2.000000e-01 : f32
    %8 = vector.broadcast %cst_6 : f32 to vector<64x128xf32>
    %9 = arith.mulf %8, %5 : vector<64x128xf32>
    %10 = arith.select %7, %5, %9 : vector<64x128xi1>, vector<64x128xf32>
    %11 = arith.truncf %10 : vector<64x128xf32> to vector<64x128xbf16>
    %c0_7 = arith.constant 0 : index
    %c0_8 = arith.constant 0 : index
    %12 = vector.load %arg4[%c0_7, %c0_8] : memref<64x128xbf16, #tpu.memory_space<vmem>>, vector<64x128xbf16>
    tpu.vector_store %arg4[%c0_7, %c0_8], %11 {strides = array<i32>} : memref<64x128xbf16, #tpu.memory_space<vmem>>, vector<64x128xbf16>,
    return
  }
  func.func @transform_0(%arg0: i32) -> (i32, i32) {
    %c0_i32 = arith.constant 0 : i32
    %c0_i32_0 = arith.constant 0 : i32
    %c0_i32_1 = arith.constant 0 : i32
    return %c0_i32, %c0_i32_0 : i32, i32
  }
  func.func @transform_1(%arg0: i32) -> (i32, i32) {
    %c0_i32 = arith.constant 0 : i32
    %c0_i32_0 = arith.constant 0 : i32
    return %c0_i32, %arg0 : i32, i32
  }
  func.func @transform_2(%arg0: i32) -> (i32, i32) {
    %c0_i32 = arith.constant 0 : i32
    %c0_i32_0 = arith.constant 0 : i32
    %c0_i32_1 = arith.constant 0 : i32
    return %c0_i32, %c0_i32_0 : i32, i32
  }
  func.func @transform_3(%arg0: i32) -> (i32, i32) {
    %c0_i32 = arith.constant 0 : i32
    %c0_i32_0 = arith.constant 0 : i32
    return %c0_i32, %arg0 : i32, i32
  }
}

module attributes {stable_mosaic.version = 11 : i64} {
  func.func @_gemm_bias_lrelu_kernel(%arg0: i32, %arg1: memref<128x1024xbf16, #tpu.memory_space<vmem>>, %arg2: memref<1024x128xbf16, #tpu.memory_space<vmem>>, %arg3: memref<128x1xf32, #tpu.memory_space<vmem>>, %arg4: memref<128x128xbf16, #tpu.memory_space<vmem>>) attributes {dimension_semantics = [#tpu.dimension_semantics<parallel>], iteration_bounds = array<i64: 1>, scalar_prefetch = 0 : i64, scratch_operands = 0 : i64, tpu.core_type = #tpu.core_type<tc>, window_params = [{pipeline_mode = #tpu.pipeline_mode<synchronous>, transform_indices = @transform_0, window_bounds = array<i64: 128, 1024>}, {transform_indices = @transform_1, window_bounds = array<i64: 1024, 128>}, {pipeline_mode = #tpu.pipeline_mode<synchronous>, transform_indices = @transform_2, window_bounds = array<i64: 128, 1>}, {transform_indices = @transform_3, window_bounds = array<i64: 128, 128>}]} {
    %c0 = arith.constant 0 : index
    %c0_0 = arith.constant 0 : index
    %0 = vector.load %arg1[%c0, %c0_0] : memref<128x1024xbf16, #tpu.memory_space<vmem>>, vector<128x1024xbf16>
    %c0_1 = arith.constant 0 : index
    %c0_2 = arith.constant 0 : index
    %1 = vector.load %arg2[%c0_1, %c0_2] : memref<1024x128xbf16, #tpu.memory_space<vmem>>, vector<1024x128xbf16>
    %cst = arith.constant dense<0.000000e+00> : vector<128x128xf32>
    %2 = tpu.matmul %0, %1, %cst {dimension_numbers = #tpu.dot_dimension_numbers<[1], [0], [0], [1], [0, 0, 1, 1], [], []>} : vector<128x1024xbf16>, vector<1024x128xbf16>, vector<128x128xf32> -> vector<128x128xf32>
    %c0_3 = arith.constant 0 : index
    %c0_4 = arith.constant 0 : index
    %3 = vector.load %arg3[%c0_3, %c0_4] : memref<128x1xf32, #tpu.memory_space<vmem>>, vector<128x1xf32>
    %4 = vector.broadcast %3 : vector<128x1xf32> to vector<128x128xf32>
    %5 = arith.addf %2, %4 : vector<128x128xf32>
    %cst_5 = arith.constant 0.000000e+00 : f32
    %6 = vector.broadcast %cst_5 : f32 to vector<128x128xf32>
    %7 = arith.cmpf ogt, %5, %6 : vector<128x128xf32>
    %cst_6 = arith.constant 2.000000e-01 : f32
    %8 = vector.broadcast %cst_6 : f32 to vector<128x128xf32>
    %9 = arith.mulf %8, %5 : vector<128x128xf32>
    %10 = arith.select %7, %5, %9 : vector<128x128xi1>, vector<128x128xf32>
    %11 = arith.truncf %10 : vector<128x128xf32> to vector<128x128xbf16>
    %c0_7 = arith.constant 0 : index
    %c0_8 = arith.constant 0 : index
    %12 = vector.load %arg4[%c0_7, %c0_8] : memref<128x128xbf16, #tpu.memory_space<vmem>>, vector<128x128xbf16>
    tpu.vector_store %arg4[%c0_7, %c0_8], %11 {strides = array<i32>} : memref<128x128xbf16, #tpu.memory_space<vmem>>, vector<128x128xbf16>,
    return
  }
  func.func @transform_0(%arg0: i32) -> (i32, i32) {
    %c0_i32 = arith.constant 0 : i32
    %c0_i32_0 = arith.constant 0 : i32
    %c0_i32_1 = arith.constant 0 : i32
    return %c0_i32, %c0_i32_0 : i32, i32
  }
  func.func @transform_1(%arg0: i32) -> (i32, i32) {
    %c0_i32 = arith.constant 0 : i32
    %c0_i32_0 = arith.constant 0 : i32
    return %c0_i32, %arg0 : i32, i32
  }
  func.func @transform_2(%arg0: i32) -> (i32, i32) {
    %c0_i32 = arith.constant 0 : i32
    %c0_i32_0 = arith.constant 0 : i32
    %c0_i32_1 = arith.constant 0 : i32
    return %c0_i32, %c0_i32_0 : i32, i32
  }
  func.func @transform_3(%arg0: i32) -> (i32, i32) {
    %c0_i32 = arith.constant 0 : i32
    %c0_i32_0 = arith.constant 0 : i32
    return %c0_i32, %arg0 : i32, i32
  }
}

</mosaic_0001>

<llo_original>
// kernel: discriminator_forward.5
$region0: #{discriminator_forward.5}
  #allocation0 [shape = 'u32[]', space=smem, size = 0x4, offset = 0x4, fixed_abs, tag = 'smem constant byte address 0x4 - core index']
  #allocation1 [shape = 'u32[72,128]{1,0:T(1,128)}', space=vmem, size = 0x9000, scoped, tag = 'internal scratch']
  %s0 = inlined_call_operand.vmem [shape: bf16[8,48], index: 0, kind: input, shape index: {}]
  %s1 = inlined_call_operand.vmem [shape: bf16[48,8192], index: 1, kind: input, shape index: {}]
  %s2 = inlined_call_operand.vmem [shape: f32[8,1], index: 2, kind: input, shape index: {}]
  %s3 = inlined_call_operand.vmem [shape: bf16[8,8192], index: 3, kind: output, shape index: {}]
  %s4 = sld [smem:[#allocation0]]
  $region68: #{discriminator_forward.5} parent=0
    _
  %s6 = ssub.s32 1, %s4
  %s7 = scalar_select 0, %s6, %s4
  $region1: #{discriminator_forward.5} parent=0
    #allocation2 [shape = 'u8[786432]{0}', space=vmem, size = 0xc0000, scoped, tag = 'input window, operand 1']
    loop: start=0, step=1, limit=4
    $region2: #{discriminator_forward.5} parent=1 // loop_pre_header
      _
    $region3: #{discriminator_forward.5} parent=1 // loop_header
      %s9 = sphi 0, %s13
      %p10 = scmp.ge.s32.totalorder %s9, 4
      %s17 = sphi 0, %s17
      %s19 = sphi 0, %s17
      %s20 = sphi 0, %s19
      %s34 = sphi 0, %s20
      %s40 = sphi 0, %s42
      %s43 = sphi 0, %s40
      %s44 = sphi 0, %s43
      %s60 = sphi 0, %s44
      %s64 = sphi 0, %s64
      %s66 = sphi 0, %s64
      %s67 = sphi 0, %s66
      %s81 = sphi 0, %s67
      %s87 = sphi 0, %s89
      %s90 = sphi 0, %s87
      %s91 = sphi 0, %s90
      %s107 = sphi 0, %s91
    $region4: #{discriminator_forward.5} parent=1 // loop_header_branch
      %12 = sbr.rel (%p10) target = $region8
    $region5: #{discriminator_forward.5} parent=1 // loop_body
      %s14 = ssub.s32 %s9, 1
      %s15 = ssub.s32 %s9, 2
      %s16 = sadd.s32 %s9, 1
      %s18 = sadd.s32 %s17, 1
      %p21 = scmp.eq.s32.totalorder %s9, 1
      %p22 = scmp.ne.s32.totalorder %s17, %s19
      %p23 = scmp.eq.s32.totalorder %s9, 0
      %p24 = por %p22, %p23
      %p25 = scmp.ne.s32.totalorder %s17, %s19
      %p26 = scmp.eq.s32.totalorder %s14, 1
      %p27 = por %p25, %p26
      %p28 = scmp.ne.s32.totalorder %s19, %s20
      %p29 = scmp.eq.s32.totalorder %s14, 0
      %p30 = por %p28, %p29
      %p31 = scmp.ne.s32.totalorder %s19, %s20
      %p32 = scmp.eq.s32.totalorder %s15, 1
      %p33 = por %p31, %p32
      %p35 = scmp.ne.s32.totalorder %s20, %s34
      %p36 = scmp.eq.s32.totalorder %s15, 0
      %p37 = por %p35, %p36
      %s38 = ssub.s32 %s9, %s16
      %p39 = scmp.eq.s32.totalorder %s38, 0
      %s41 = sadd.s32 %s40, 1
      %s42 = scalar_select %p39, %s40, %s41
      %p45 = pneg %p39
      %p46 = scmp.eq.s32.totalorder %s9, 1
      %p47 = por %p45, %p46
      %p48 = scmp.ne.s32.totalorder %s40, %s43
      %p49 = scmp.eq.s32.totalorder %s9, 0
      %p50 = por %p48, %p49
      %p51 = scmp.ne.s32.totalorder %s40, %s43
      %p52 = scmp.eq.s32.totalorder %s14, 1
      %p53 = por %p51, %p52
      %p54 = scmp.ne.s32.totalorder %s43, %s44
      %p55 = scmp.eq.s32.totalorder %s14, 0
      %p56 = por %p54, %p55
      %p57 = scmp.ne.s32.totalorder %s43, %s44
      %p58 = scmp.eq.s32.totalorder %s15, 1
      %p59 = por %p57, %p58
      %p61 = scmp.ne.s32.totalorder %s44, %s60
      %p62 = scmp.eq.s32.totalorder %s15, 0
      %p63 = por %p61, %p62
      %s65 = sadd.s32 %s64, 1
      %p68 = scmp.eq.s32.totalorder %s9, 1
      %p69 = scmp.ne.s32.totalorder %s64, %s66
      %p70 = scmp.eq.s32.totalorder %s9, 0
      %p71 = por %p69, %p70
      %p72 = scmp.ne.s32.totalorder %s64, %s66
      %p73 = scmp.eq.s32.totalorder %s14, 1
      %p74 = por %p72, %p73
      %p75 = scmp.ne.s32.totalorder %s66, %s67
      %p76 = scmp.eq.s32.totalorder %s14, 0
      %p77 = por %p75, %p76
      %p78 = scmp.ne.s32.totalorder %s66, %s67
      %p79 = scmp.eq.s32.totalorder %s15, 1
      %p80 = por %p78, %p79
      %p82 = scmp.ne.s32.totalorder %s67, %s81
      %p83 = scmp.eq.s32.totalorder %s15, 0
      %p84 = por %p82, %p83
      %s85 = ssub.s32 %s9, %s16
      %p86 = scmp.eq.s32.totalorder %s85, 0
      %s88 = sadd.s32 %s87, 1
      %s89 = scalar_select %p86, %s87, %s88
      %p92 = pneg %p86
      %p93 = scmp.eq.s32.totalorder %s9, 1
      %p94 = por %p92, %p93
      %p95 = scmp.ne.s32.totalorder %s87, %s90
      %p96 = scmp.eq.s32.totalorder %s9, 0
      %p97 = por %p95, %p96
      %p98 = scmp.ne.s32.totalorder %s87, %s90
      %p99 = scmp.eq.s32.totalorder %s14, 1
      %p100 = por %p98, %p99
      %p101 = scmp.ne.s32.totalorder %s90, %s91
      %p102 = scmp.eq.s32.totalorder %s14, 0
      %p103 = por %p101, %p102
      %p104 = scmp.ne.s32.totalorder %s90, %s91
      %p105 = scmp.eq.s32.totalorder %s15, 1
      %p106 = por %p104, %p105
      %p108 = scmp.ne.s32.totalorder %s91, %s107
      %p109 = scmp.eq.s32.totalorder %s15, 0
      %p110 = por %p108, %p109
      %p111 = scmp.le.s32.totalorder 1, %s9
      %p112 = scmp.lt.s32.totalorder %s9, 3
      %p113 = pnand %p111, %p112
      %p114 = pneg %p113
      // Predicated region
      $region9: #{discriminator_forward.5} parent=5 // pred_check
        _
      $region10: #{discriminator_forward.5} parent=5 // pred_check_branch
        %116 = sbr.rel (%p113) target = $region12
      $region11: #{discriminator_forward.5} parent=5 // pred_region
        %s117 = ssub.s32 %s9, 1
        // Predicated region
        $region13: #{discriminator_forward.5} parent=11 // pred_check
          %p118 = pneg %p30
        $region14: #{discriminator_forward.5} parent=11 // pred_check_branch
          %120 = sbr.rel (%p118) target = $region16
        $region15: #{discriminator_forward.5} parent=11 // pred_region
          _
        $region16: #{discriminator_forward.5} parent=11 // pred_fallthru
          _
        // Predicated region
        $region17: #{discriminator_forward.5} parent=11 // pred_check
          %p121 = pneg %p77
        $region18: #{discriminator_forward.5} parent=11 // pred_check_branch
          %123 = sbr.rel (%p121) target = $region20
        $region19: #{discriminator_forward.5} parent=11 // pred_region
          _
        $region20: #{discriminator_forward.5} parent=11 // pred_fallthru
          _
      $region12: #{discriminator_forward.5} parent=5 // pred_fallthru
        _
      %p124 = scmp.lt.s32.totalorder %s9, 2
      // Predicated region
      $region21: #{discriminator_forward.5} parent=5 // pred_check
        %p125 = pneg %p124
      $region22: #{discriminator_forward.5} parent=5 // pred_check_branch
        %127 = sbr.rel (%p125) target = $region24
      $region23: #{discriminator_forward.5} parent=5 // pred_region
        // Predicated region
        $region25: #{discriminator_forward.5} parent=23 // pred_check
          %p128 = pneg %p50
        $region26: #{discriminator_forward.5} parent=23 // pred_check_branch
          %130 = sbr.rel (%p128) target = $region28
        $region27: #{discriminator_forward.5} parent=23 // pred_region
          %s131 = sand.u32 %s40, 1
          %s132 = sand.u32 %s40, 1
          %s133 = smul.addr %s132, 768
          %s134 = scalar_lea.vmem [#allocation2], %s133
          %s135 = smul.u32 32, %s9
          %s136 = smul.addr %s135, 4
          %s137 = scalar_lea.vmem %s1, %s136
          // Predicated region
          $region29: #{discriminator_forward.5} parent=27 // pred_check
            _
          $region30: #{discriminator_forward.5} parent=27 // pred_check_branch
            %139 = sbr.rel (0) target = $region32
          $region31: #{discriminator_forward.5} parent=27 // pred_region
            // Predicated region
            $region33: #{discriminator_forward.5} parent=31 // pred_check
              _
            $region34: #{discriminator_forward.5} parent=31 // pred_check_branch
              %141 = sbr.rel (0) target = $region36
            $region35: #{discriminator_forward.5} parent=31 // pred_region
              loop: start=0, step=1, limit=1
              $region37: #{discriminator_forward.5} parent=35 // loop_pre_header
                _
              $region38: #{discriminator_forward.5} parent=35 // loop_header
                %s143 = sphi 0, %s147
                %p144 = scmp.ge.s32.totalorder %s143, 1
                %s148 = sphi %s137, %s137
                %s149 = sphi %s134, %s134
              $region39: #{discriminator_forward.5} parent=35 // loop_header_branch
                %146 = sbr.rel (%p144) target = $region43
              $region40: #{discriminator_forward.5} parent=35 // loop_body
                %v150 = vld [vmem:[%s148] sm:$0xff]
                %151 = vst [vmem:[%s149] sm:$0xff] %v150
                %v152 = vld [vmem:[%s148 + $0x8] sm:$0xff]
                %153 = vst [vmem:[%s149 + $0x8] sm:$0xff] %v152
                %v154 = vld [vmem:[%s148 + $0x10] sm:$0xff]
                %155 = vst [vmem:[%s149 + $0x10] sm:$0xff] %v154
                %v156 = vld [vmem:[%s148 + $0x18] sm:$0xff]
                %157 = vst [vmem:[%s149 + $0x18] sm:$0xff] %v156
                %v158 = vld [vmem:[%s148 + $0x20] sm:$0xff]
                %159 = vst [vmem:[%s149 + $0x20] sm:$0xff] %v158
                %v160 = vld [vmem:[%s148 + $0x28] sm:$0xff]
                %161 = vst [vmem:[%s149 + $0x28] sm:$0xff] %v160
                %v162 = vld [vmem:[%s148 + $0x30] sm:$0xff]
                %163 = vst [vmem:[%s149 + $0x30] sm:$0xff] %v162
                %v164 = vld [vmem:[%s148 + $0x38] sm:$0xff]
                %165 = vst [vmem:[%s149 + $0x38] sm:$0xff] %v164
                %v166 = vld [vmem:[%s148 + $0x40] sm:$0xff]
                %167 = vst [vmem:[%s149 + $0x40] sm:$0xff] %v166
                %v168 = vld [vmem:[%s148 + $0x48] sm:$0xff]
                %169 = vst [vmem:[%s149 + $0x48] sm:$0xff] %v168
                %v170 = vld [vmem:[%s148 + $0x50] sm:$0xff]
                %171 = vst [vmem:[%s149 + $0x50] sm:$0xff] %v170
                %v172 = vld [vmem:[%s148 + $0x58] sm:$0xff]
                %173 = vst [vmem:[%s149 + $0x58] sm:$0xff] %v172
                %v174 = vld [vmem:[%s148 + $0x60] sm:$0xff]
                %175 = vst [vmem:[%s149 + $0x60] sm:$0xff] %v174
                %v176 = vld [vmem:[%s148 + $0x68] sm:$0xff]
                %177 = vst [vmem:[%s149 + $0x68] sm:$0xff] %v176
                %v178 = vld [vmem:[%s148 + $0x70] sm:$0xff]
                %179 = vst [vmem:[%s149 + $0x70] sm:$0xff] %v178
                %v180 = vld [vmem:[%s148 + $0x78] sm:$0xff]
                %181 = vst [vmem:[%s149 + $0x78] sm:$0xff] %v180
                %v182 = vld [vmem:[%s148 + $0x100] sm:$0xff]
                %183 = vst [vmem:[%s149 + $0x80] sm:$0xff] %v182
                %v184 = vld [vmem:[%s148 + $0x108] sm:$0xff]
                %185 = vst [vmem:[%s149 + $0x88] sm:$0xff] %v184
                %v186 = vld [vmem:[%s148 + $0x110] sm:$0xff]
                %187 = vst [vmem:[%s149 + $0x90] sm:$0xff] %v186
                %v188 = vld [vmem:[%s148 + $0x118] sm:$0xff]
                %189 = vst [vmem:[%s149 + $0x98] sm:$0xff] %v188
                %v190 = vld [vmem:[%s148 + $0x120] sm:$0xff]
                %191 = vst [vmem:[%s149 + $0xa0] sm:$0xff] %v190
                %v192 = vld [vmem:[%s148 + $0x128] sm:$0xff]
                %193 = vst [vmem:[%s149 + $0xa8] sm:$0xff] %v192
                %v194 = vld [vmem:[%s148 + $0x130] sm:$0xff]
                %195 = vst [vmem:[%s149 + $0xb0] sm:$0xff] %v194
                %v196 = vld [vmem:[%s148 + $0x138] sm:$0xff]
                %197 = vst [vmem:[%s149 + $0xb8] sm:$0xff] %v196
                %v198 = vld [vmem:[%s148 + $0x140] sm:$0xff]
                %199 = vst [vmem:[%s149 + $0xc0] sm:$0xff] %v198
                %v200 = vld [vmem:[%s148 + $0x148] sm:$0xff]
                %201 = vst [vmem:[%s149 + $0xc8] sm:$0xff] %v200
                %v202 = vld [vmem:[%s148 + $0x150] sm:$0xff]
                %203 = vst [vmem:[%s149 + $0xd0] sm:$0xff] %v202
                %v204 = vld [vmem:[%s148 + $0x158] sm:$0xff]
                %205 = vst [vmem:[%s149 + $0xd8] sm:$0xff] %v204
                %v206 = vld [vmem:[%s148 + $0x160] sm:$0xff]
                %207 = vst [vmem:[%s149 + $0xe0] sm:$0xff] %v206
                %v208 = vld [vmem:[%s148 + $0x168] sm:$0xff]
                %209 = vst [vmem:[%s149 + $0xe8] sm:$0xff] %v208
                %v210 = vld [vmem:[%s148 + $0x170] sm:$0xff]
                %211 = vst [vmem:[%s149 + $0xf0] sm:$0xff] %v210
                %v212 = vld [vmem:[%s148 + $0x178] sm:$0xff]
                %213 = vst [vmem:[%s149 + $0xf8] sm:$0xff] %v212
                %v214 = vld [vmem:[%s148 + $0x200] sm:$0xff]
                %215 = vst [vmem:[%s149 + $0x100] sm:$0xff] %v214
                %v216 = vld [vmem:[%s148 + $0x208] sm:$0xff]
                %217 = vst [vmem:[%s149 + $0x108] sm:$0xff] %v216
                %v218 = vld [vmem:[%s148 + $0x210] sm:$0xff]
                %219 = vst [vmem:[%s149 + $0x110] sm:$0xff] %v218
                %v220 = vld [vmem:[%s148 + $0x218] sm:$0xff]
                %221 = vst [vmem:[%s149 + $0x118] sm:$0xff] %v220
                %v222 = vld [vmem:[%s148 + $0x220] sm:$0xff]
                %223 = vst [vmem:[%s149 + $0x120] sm:$0xff] %v222
                %v224 = vld [vmem:[%s148 + $0x228] sm:$0xff]
                %225 = vst [vmem:[%s149 + $0x128] sm:$0xff] %v224
                %v226 = vld [vmem:[%s148 + $0x230] sm:$0xff]
                %227 = vst [vmem:[%s149 + $0x130] sm:$0xff] %v226
                %v228 = vld [vmem:[%s148 + $0x238] sm:$0xff]
                %229 = vst [vmem:[%s149 + $0x138] sm:$0xff] %v228
                %v230 = vld [vmem:[%s148 + $0x240] sm:$0xff]
                %231 = vst [vmem:[%s149 + $0x140] sm:$0xff] %v230
                %v232 = vld [vmem:[%s148 + $0x248] sm:$0xff]
                %233 = vst [vmem:[%s149 + $0x148] sm:$0xff] %v232
                %v234 = vld [vmem:[%s148 + $0x250] sm:$0xff]
                %235 = vst [vmem:[%s149 + $0x150] sm:$0xff] %v234
                %v236 = vld [vmem:[%s148 + $0x258] sm:$0xff]
                %237 = vst [vmem:[%s149 + $0x158] sm:$0xff] %v236
                %v238 = vld [vmem:[%s148 + $0x260] sm:$0xff]
                %239 = vst [vmem:[%s149 + $0x160] sm:$0xff] %v238
                %v240 = vld [vmem:[%s148 + $0x268] sm:$0xff]
                %241 = vst [vmem:[%s149 + $0x168] sm:$0xff] %v240
                %v242 = vld [vmem:[%s148 + $0x270] sm:$0xff]
                %243 = vst [vmem:[%s149 + $0x170] sm:$0xff] %v242
                %v244 = vld [vmem:[%s148 + $0x278] sm:$0xff]
                %245 = vst [vmem:[%s149 + $0x178] sm:$0xff] %v244
                %v246 = vld [vmem:[%s148 + $0x300] sm:$0xff]
                %247 = vst [vmem:[%s149 + $0x180] sm:$0xff] %v246
                %v248 = vld [vmem:[%s148 + $0x308] sm:$0xff]
                %249 = vst [vmem:[%s149 + $0x188] sm:$0xff] %v248
                %v250 = vld [vmem:[%s148 + $0x310] sm:$0xff]
                %251 = vst [vmem:[%s149 + $0x190] sm:$0xff] %v250
                %v252 = vld [vmem:[%s148 + $0x318] sm:$0xff]
                %253 = vst [vmem:[%s149 + $0x198] sm:$0xff] %v252
                %v254 = vld [vmem:[%s148 + $0x320] sm:$0xff]
                %255 = vst [vmem:[%s149 + $0x1a0] sm:$0xff] %v254
                %v256 = vld [vmem:[%s148 + $0x328] sm:$0xff]
                %257 = vst [vmem:[%s149 + $0x1a8] sm:$0xff] %v256
                %v258 = vld [vmem:[%s148 + $0x330] sm:$0xff]
                %259 = vst [vmem:[%s149 + $0x1b0] sm:$0xff] %v258
                %v260 = vld [vmem:[%s148 + $0x338] sm:$0xff]
                %261 = vst [vmem:[%s149 + $0x1b8] sm:$0xff] %v260
                %v262 = vld [vmem:[%s148 + $0x340] sm:$0xff]
                %263 = vst [vmem:[%s149 + $0x1c0] sm:$0xff] %v262
                %v264 = vld [vmem:[%s148 + $0x348] sm:$0xff]
                %265 = vst [vmem:[%s149 + $0x1c8] sm:$0xff] %v264
                %v266 = vld [vmem:[%s148 + $0x350] sm:$0xff]
                %267 = vst [vmem:[%s149 + $0x1d0] sm:$0xff] %v266
                %v268 = vld [vmem:[%s148 + $0x358] sm:$0xff]
                %269 = vst [vmem:[%s149 + $0x1d8] sm:$0xff] %v268
                %v270 = vld [vmem:[%s148 + $0x360] sm:$0xff]
                %271 = vst [vmem:[%s149 + $0x1e0] sm:$0xff] %v270
                %v272 = vld [vmem:[%s148 + $0x368] sm:$0xff]
                %273 = vst [vmem:[%s149 + $0x1e8] sm:$0xff] %v272
                %v274 = vld [vmem:[%s148 + $0x370] sm:$0xff]
                %275 = vst [vmem:[%s149 + $0x1f0] sm:$0xff] %v274
                %v276 = vld [vmem:[%s148 + $0x378] sm:$0xff]
                %277 = vst [vmem:[%s149 + $0x1f8] sm:$0xff] %v276
                %v278 = vld [vmem:[%s148 + $0x400] sm:$0xff]
                %279 = vst [vmem:[%s149 + $0x200] sm:$0xff] %v278
                %v280 = vld [vmem:[%s148 + $0x408] sm:$0xff]
                %281 = vst [vmem:[%s149 + $0x208] sm:$0xff] %v280
                %v282 = vld [vmem:[%s148 + $0x410] sm:$0xff]
                %283 = vst [vmem:[%s149 + $0x210] sm:$0xff] %v282
                %v284 = vld [vmem:[%s148 + $0x418] sm:$0xff]
                %285 = vst [vmem:[%s149 + $0x218] sm:$0xff] %v284
                %v286 = vld [vmem:[%s148 + $0x420] sm:$0xff]
                %287 = vst [vmem:[%s149 + $0x220] sm:$0xff] %v286
                %v288 = vld [vmem:[%s148 + $0x428] sm:$0xff]
                %289 = vst [vmem:[%s149 + $0x228] sm:$0xff] %v288
                %v290 = vld [vmem:[%s148 + $0x430] sm:$0xff]
                %291 = vst [vmem:[%s149 + $0x230] sm:$0xff] %v290
                %v292 = vld [vmem:[%s148 + $0x438] sm:$0xff]
                %293 = vst [vmem:[%s149 + $0x238] sm:$0xff] %v292
                %v294 = vld [vmem:[%s148 + $0x440] sm:$0xff]
                %295 = vst [vmem:[%s149 + $0x240] sm:$0xff] %v294
                %v296 = vld [vmem:[%s148 + $0x448] sm:$0xff]
                %297 = vst [vmem:[%s149 + $0x248] sm:$0xff] %v296
                %v298 = vld [vmem:[%s148 + $0x450] sm:$0xff]
                %299 = vst [vmem:[%s149 + $0x250] sm:$0xff] %v298
                %v300 = vld [vmem:[%s148 + $0x458] sm:$0xff]
                %301 = vst [vmem:[%s149 + $0x258] sm:$0xff] %v300
                %v302 = vld [vmem:[%s148 + $0x460] sm:$0xff]
                %303 = vst [vmem:[%s149 + $0x260] sm:$0xff] %v302
                %v304 = vld [vmem:[%s148 + $0x468] sm:$0xff]
                %305 = vst [vmem:[%s149 + $0x268] sm:$0xff] %v304
                %v306 = vld [vmem:[%s148 + $0x470] sm:$0xff]
                %307 = vst [vmem:[%s149 + $0x270] sm:$0xff] %v306
                %v308 = vld [vmem:[%s148 + $0x478] sm:$0xff]
                %309 = vst [vmem:[%s149 + $0x278] sm:$0xff] %v308
                %v310 = vld [vmem:[%s148 + $0x500] sm:$0xff]
                %311 = vst [vmem:[%s149 + $0x280] sm:$0xff] %v310
                %v312 = vld [vmem:[%s148 + $0x508] sm:$0xff]
                %313 = vst [vmem:[%s149 + $0x288] sm:$0xff] %v312
                %v314 = vld [vmem:[%s148 + $0x510] sm:$0xff]
                %315 = vst [vmem:[%s149 + $0x290] sm:$0xff] %v314
                %v316 = vld [vmem:[%s148 + $0x518] sm:$0xff]
                %317 = vst [vmem:[%s149 + $0x298] sm:$0xff] %v316
                %v318 = vld [vmem:[%s148 + $0x520] sm:$0xff]
                %319 = vst [vmem:[%s149 + $0x2a0] sm:$0xff] %v318
                %v320 = vld [vmem:[%s148 + $0x528] sm:$0xff]
                %321 = vst [vmem:[%s149 + $0x2a8] sm:$0xff] %v320
                %v322 = vld [vmem:[%s148 + $0x530] sm:$0xff]
                %323 = vst [vmem:[%s149 + $0x2b0] sm:$0xff] %v322
                %v324 = vld [vmem:[%s148 + $0x538] sm:$0xff]
                %325 = vst [vmem:[%s149 + $0x2b8] sm:$0xff] %v324
                %v326 = vld [vmem:[%s148 + $0x540] sm:$0xff]
                %327 = vst [vmem:[%s149 + $0x2c0] sm:$0xff] %v326
                %v328 = vld [vmem:[%s148 + $0x548] sm:$0xff]
                %329 = vst [vmem:[%s149 + $0x2c8] sm:$0xff] %v328
                %v330 = vld [vmem:[%s148 + $0x550] sm:$0xff]
                %331 = vst [vmem:[%s149 + $0x2d0] sm:$0xff] %v330
                %v332 = vld [vmem:[%s148 + $0x558] sm:$0xff]
                %333 = vst [vmem:[%s149 + $0x2d8] sm:$0xff] %v332
                %v334 = vld [vmem:[%s148 + $0x560] sm:$0xff]
                %335 = vst [vmem:[%s149 + $0x2e0] sm:$0xff] %v334
                %v336 = vld [vmem:[%s148 + $0x568] sm:$0xff]
                %337 = vst [vmem:[%s149 + $0x2e8] sm:$0xff] %v336
                %v338 = vld [vmem:[%s148 + $0x570] sm:$0xff]
                %339 = vst [vmem:[%s149 + $0x2f0] sm:$0xff] %v338
                %v340 = vld [vmem:[%s148 + $0x578] sm:$0xff]
                %341 = vst [vmem:[%s149 + $0x2f8] sm:$0xff] %v340
              $region41: #{discriminator_forward.5} parent=35 // loop_footer
                %s147 = sadd.s32 1, %s143
              $region42: #{discriminator_forward.5} parent=35 // loop_footer_branch
                %142 = sbr.rel target = $region38
              $region43: #{discriminator_forward.5} parent=35 // loop_exit
                _
            $region36: #{discriminator_forward.5} parent=31 // pred_fallthru
              _
            // Predicated region
            $region44: #{discriminator_forward.5} parent=31 // pred_check
              _
            $region45: #{discriminator_forward.5} parent=31 // pred_check_branch
              %343 = sbr.rel target = $region47
            $region46: #{discriminator_forward.5} parent=31 // pred_region
              _
            $region47: #{discriminator_forward.5} parent=31 // pred_fallthru
              _
          $region32: #{discriminator_forward.5} parent=27 // pred_fallthru
            _
          %344 = vnop
        $region28: #{discriminator_forward.5} parent=23 // pred_fallthru
          _
      $region24: #{discriminator_forward.5} parent=5 // pred_fallthru
        _
      %p345 = scmp.le.s32.totalorder 1, %s9
      %p346 = scmp.lt.s32.totalorder %s9, 3
      %p347 = pnand %p345, %p346
      %p348 = pneg %p347
      // Predicated region
      $region48: #{discriminator_forward.5} parent=5 // pred_check
        _
      $region49: #{discriminator_forward.5} parent=5 // pred_check_branch
        %350 = sbr.rel (%p347) target = $region51
      $region50: #{discriminator_forward.5} parent=5 // pred_region
        %s351 = ssub.s32 %s9, 1
        %s352 = sand.u32 %s43, 1
        %s353 = sand.u32 %s43, 1
        %s354 = smul.addr %s353, 768
        %s355 = scalar_lea.vmem [#allocation2], %s354
        // Predicated region
        $region52: #{discriminator_forward.5} parent=50 // pred_check
          %p356 = pneg %p56
        $region53: #{discriminator_forward.5} parent=50 // pred_check_branch
          %358 = sbr.rel (%p356) target = $region55
        $region54: #{discriminator_forward.5} parent=50 // pred_region
          _
        $region55: #{discriminator_forward.5} parent=50 // pred_fallthru
          _
        %p359 = pneg %p30
        %p360 = pneg %p27
        %s361 = sand.u32 %s43, 1
        %s362 = sand.u32 %s43, 1
        %s363 = smul.addr %s362, 768
        %s364 = scalar_lea.vmem [#allocation2], %s363
        %p365 = pneg %p56
        %p366 = pneg %p53
        %p367 = pneg %p77
        %p368 = pneg %p74
        %p369 = pneg %p103
        %p370 = pneg %p100
        %s371 = smul.u32 32, %s14
        %p372 = scmp.lt.s32.totalorder %s371, 63
        %s373 = scalar_select %p372, %s371, 63
        %s374 = smul.addr %s373, 4
        %s375 = scalar_lea.vmem %s3, %s374
        %s376 = smul.u32 32, %s14
        %s377 = smul.u32 32, %s14
        %p378 = scmp.lt.s32.totalorder %s377, 63
        %s379 = scalar_select %p378, %s377, 63
        %s380 = smul.addr %s379, 4
        %s381 = scalar_lea.vmem %s3, %s380
        %s382 = smul.u32 32, %s14
        %v384 = vld [vmem:[%s0] sm:$0xf]
        %v385 = vld [vmem:[%s355] sm:$0xff]
        %v386 = vld [vmem:[%s355 + $0x8] sm:$0xff]
        %v387 = vld [vmem:[%s355 + $0x10] sm:$0xff]
        %v388 = vld [vmem:[%s355 + $0x18] sm:$0xff]
        %v389 = vld [vmem:[%s355 + $0x20] sm:$0xff]
        %v390 = vld [vmem:[%s355 + $0x28] sm:$0xff]
        %v391 = vld [vmem:[%s355 + $0x30] sm:$0xff]
        %v392 = vld [vmem:[%s355 + $0x38] sm:$0xff]
        %v393 = vld [vmem:[%s355 + $0x40] sm:$0xff]
        %v394 = vld [vmem:[%s355 + $0x48] sm:$0xff]
        %v395 = vld [vmem:[%s355 + $0x50] sm:$0xff]
        %v396 = vld [vmem:[%s355 + $0x58] sm:$0xff]
        %v397 = vld [vmem:[%s355 + $0x60] sm:$0xff]
        %v398 = vld [vmem:[%s355 + $0x68] sm:$0xff]
        %v399 = vld [vmem:[%s355 + $0x70] sm:$0xff]
        %v400 = vld [vmem:[%s355 + $0x78] sm:$0xff]
        %v401 = vld [vmem:[%s355 + $0x80] sm:$0xff]
        %v402 = vld [vmem:[%s355 + $0x88] sm:$0xff]
        %v403 = vld [vmem:[%s355 + $0x90] sm:$0xff]
        %v404 = vld [vmem:[%s355 + $0x98] sm:$0xff]
        %v405 = vld [vmem:[%s355 + $0xa0] sm:$0xff]
        %v406 = vld [vmem:[%s355 + $0xa8] sm:$0xff]
        %v407 = vld [vmem:[%s355 + $0xb0] sm:$0xff]
        %v408 = vld [vmem:[%s355 + $0xb8] sm:$0xff]
        %v409 = vld [vmem:[%s355 + $0xc0] sm:$0xff]
        %v410 = vld [vmem:[%s355 + $0xc8] sm:$0xff]
        %v411 = vld [vmem:[%s355 + $0xd0] sm:$0xff]
        %v412 = vld [vmem:[%s355 + $0xd8] sm:$0xff]
        %v413 = vld [vmem:[%s355 + $0xe0] sm:$0xff]
        %v414 = vld [vmem:[%s355 + $0xe8] sm:$0xff]
        %v415 = vld [vmem:[%s355 + $0xf0] sm:$0xff]
        %v416 = vld [vmem:[%s355 + $0xf8] sm:$0xff]
        %v417 = vld [vmem:[%s355 + $0x100] sm:$0xff]
        %v418 = vld [vmem:[%s355 + $0x108] sm:$0xff]
        %v419 = vld [vmem:[%s355 + $0x110] sm:$0xff]
        %v420 = vld [vmem:[%s355 + $0x118] sm:$0xff]
        %v421 = vld [vmem:[%s355 + $0x120] sm:$0xff]
        %v422 = vld [vmem:[%s355 + $0x128] sm:$0xff]
        %v423 = vld [vmem:[%s355 + $0x130] sm:$0xff]
        %v424 = vld [vmem:[%s355 + $0x138] sm:$0xff]
        %v425 = vld [vmem:[%s355 + $0x140] sm:$0xff]
        %v426 = vld [vmem:[%s355 + $0x148] sm:$0xff]
        %v427 = vld [vmem:[%s355 + $0x150] sm:$0xff]
        %v428 = vld [vmem:[%s355 + $0x158] sm:$0xff]
        %v429 = vld [vmem:[%s355 + $0x160] sm:$0xff]
        %v430 = vld [vmem:[%s355 + $0x168] sm:$0xff]
        %v431 = vld [vmem:[%s355 + $0x170] sm:$0xff]
        %v432 = vld [vmem:[%s355 + $0x178] sm:$0xff]
        %v433 = vld [vmem:[%s355 + $0x180] sm:$0xff]
        %v434 = vld [vmem:[%s355 + $0x188] sm:$0xff]
        %v435 = vld [vmem:[%s355 + $0x190] sm:$0xff]
        %v436 = vld [vmem:[%s355 + $0x198] sm:$0xff]
        %v437 = vld [vmem:[%s355 + $0x1a0] sm:$0xff]
        %v438 = vld [vmem:[%s355 + $0x1a8] sm:$0xff]
        %v439 = vld [vmem:[%s355 + $0x1b0] sm:$0xff]
        %v440 = vld [vmem:[%s355 + $0x1b8] sm:$0xff]
        %v441 = vld [vmem:[%s355 + $0x1c0] sm:$0xff]
        %v442 = vld [vmem:[%s355 + $0x1c8] sm:$0xff]
        %v443 = vld [vmem:[%s355 + $0x1d0] sm:$0xff]
        %v444 = vld [vmem:[%s355 + $0x1d8] sm:$0xff]
        %v445 = vld [vmem:[%s355 + $0x1e0] sm:$0xff]
        %v446 = vld [vmem:[%s355 + $0x1e8] sm:$0xff]
        %v447 = vld [vmem:[%s355 + $0x1f0] sm:$0xff]
        %v448 = vld [vmem:[%s355 + $0x1f8] sm:$0xff]
        %v449 = vld [vmem:[%s355 + $0x200] sm:$0xff]
        %v450 = vld [vmem:[%s355 + $0x208] sm:$0xff]
        %v451 = vld [vmem:[%s355 + $0x210] sm:$0xff]
        %v452 = vld [vmem:[%s355 + $0x218] sm:$0xff]
        %v453 = vld [vmem:[%s355 + $0x220] sm:$0xff]
        %v454 = vld [vmem:[%s355 + $0x228] sm:$0xff]
        %v455 = vld [vmem:[%s355 + $0x230] sm:$0xff]
        %v456 = vld [vmem:[%s355 + $0x238] sm:$0xff]
        %v457 = vld [vmem:[%s355 + $0x240] sm:$0xff]
        %v458 = vld [vmem:[%s355 + $0x248] sm:$0xff]
        %v459 = vld [vmem:[%s355 + $0x250] sm:$0xff]
        %v460 = vld [vmem:[%s355 + $0x258] sm:$0xff]
        %v461 = vld [vmem:[%s355 + $0x260] sm:$0xff]
        %v462 = vld [vmem:[%s355 + $0x268] sm:$0xff]
        %v463 = vld [vmem:[%s355 + $0x270] sm:$0xff]
        %v464 = vld [vmem:[%s355 + $0x278] sm:$0xff]
        %v465 = vld [vmem:[%s355 + $0x280] sm:$0xff]
        %v466 = vld [vmem:[%s355 + $0x288] sm:$0xff]
        %v467 = vld [vmem:[%s355 + $0x290] sm:$0xff]
        %v468 = vld [vmem:[%s355 + $0x298] sm:$0xff]
        %v469 = vld [vmem:[%s355 + $0x2a0] sm:$0xff]
        %v470 = vld [vmem:[%s355 + $0x2a8] sm:$0xff]
        %v471 = vld [vmem:[%s355 + $0x2b0] sm:$0xff]
        %v472 = vld [vmem:[%s355 + $0x2b8] sm:$0xff]
        %v473 = vld [vmem:[%s355 + $0x2c0] sm:$0xff]
        %v474 = vld [vmem:[%s355 + $0x2c8] sm:$0xff]
        %v475 = vld [vmem:[%s355 + $0x2d0] sm:$0xff]
        %v476 = vld [vmem:[%s355 + $0x2d8] sm:$0xff]
        %v477 = vld [vmem:[%s355 + $0x2e0] sm:$0xff]
        %v478 = vld [vmem:[%s355 + $0x2e8] sm:$0xff]
        %v479 = vld [vmem:[%s355 + $0x2f0] sm:$0xff]
        %v480 = vld [vmem:[%s355 + $0x2f8] sm:$0xff]
        %v481 = vld [vmem:[%s2] sm:$0xff]
        %483 = vset.pattern.permute.xlu0 0
        %484 = vperm.xlu0 %483, %v481
        %v485 = vpop.permute.xlu0 %484
        %v583 = vunpack.c.l.b16 %v385
        %v584 = vunpack.c.h.b16 %v385
        %v585 = vunpack.c.l.b16 %v386
        %v586 = vunpack.c.h.b16 %v386
        %v587 = vunpack.c.l.b16 %v387
        %v588 = vunpack.c.h.b16 %v387
        %v589 = vunpack.c.l.b16 %v388
        %v590 = vunpack.c.h.b16 %v388
        %v591 = vunpack.c.l.b16 %v389
        %v592 = vunpack.c.h.b16 %v389
        %v593 = vunpack.c.l.b16 %v390
        %v594 = vunpack.c.h.b16 %v390
        %v595 = vunpack.c.l.b16 %v391
        %v596 = vunpack.c.h.b16 %v391
        %v597 = vunpack.c.l.b16 %v392
        %v598 = vunpack.c.h.b16 %v392
        %v599 = vunpack.c.l.b16 %v393
        %v600 = vunpack.c.h.b16 %v393
        %v601 = vunpack.c.l.b16 %v394
        %v602 = vunpack.c.h.b16 %v394
        %v603 = vunpack.c.l.b16 %v395
        %v604 = vunpack.c.h.b16 %v395
        %v605 = vunpack.c.l.b16 %v396
        %v606 = vunpack.c.h.b16 %v396
        %v607 = vunpack.c.l.b16 %v397
        %v608 = vunpack.c.h.b16 %v397
        %v609 = vunpack.c.l.b16 %v398
        %v610 = vunpack.c.h.b16 %v398
        %v611 = vunpack.c.l.b16 %v399
        %v612 = vunpack.c.h.b16 %v399
        %v613 = vunpack.c.l.b16 %v400
        %v614 = vunpack.c.h.b16 %v400
        %v615 = vunpack.c.l.b16 %v401
        %v616 = vunpack.c.h.b16 %v401
        %v617 = vunpack.c.l.b16 %v402
        %v618 = vunpack.c.h.b16 %v402
        %v619 = vunpack.c.l.b16 %v403
        %v620 = vunpack.c.h.b16 %v403
        %v621 = vunpack.c.l.b16 %v404
        %v622 = vunpack.c.h.b16 %v404
        %v623 = vunpack.c.l.b16 %v405
        %v624 = vunpack.c.h.b16 %v405
        %v625 = vunpack.c.l.b16 %v406
        %v626 = vunpack.c.h.b16 %v406
        %v627 = vunpack.c.l.b16 %v407
        %v628 = vunpack.c.h.b16 %v407
        %v629 = vunpack.c.l.b16 %v408
        %v630 = vunpack.c.h.b16 %v408
        %v631 = vunpack.c.l.b16 %v409
        %v632 = vunpack.c.h.b16 %v409
        %v633 = vunpack.c.l.b16 %v410
        %v634 = vunpack.c.h.b16 %v410
        %v635 = vunpack.c.l.b16 %v411
        %v636 = vunpack.c.h.b16 %v411
        %v637 = vunpack.c.l.b16 %v412
        %v638 = vunpack.c.h.b16 %v412
        %v639 = vunpack.c.l.b16 %v413
        %v640 = vunpack.c.h.b16 %v413
        %v641 = vunpack.c.l.b16 %v414
        %v642 = vunpack.c.h.b16 %v414
        %v643 = vunpack.c.l.b16 %v415
        %v644 = vunpack.c.h.b16 %v415
        %v645 = vunpack.c.l.b16 %v416
        %v646 = vunpack.c.h.b16 %v416
        %v647 = vunpack.c.l.b16 %v417
        %v648 = vunpack.c.h.b16 %v417
        %v649 = vunpack.c.l.b16 %v418
        %v650 = vunpack.c.h.b16 %v418
        %v651 = vunpack.c.l.b16 %v419
        %v652 = vunpack.c.h.b16 %v419
        %v653 = vunpack.c.l.b16 %v420
        %v654 = vunpack.c.h.b16 %v420
        %v655 = vunpack.c.l.b16 %v421
        %v656 = vunpack.c.h.b16 %v421
        %v657 = vunpack.c.l.b16 %v422
        %v658 = vunpack.c.h.b16 %v422
        %v659 = vunpack.c.l.b16 %v423
        %v660 = vunpack.c.h.b16 %v423
        %v661 = vunpack.c.l.b16 %v424
        %v662 = vunpack.c.h.b16 %v424
        %v663 = vunpack.c.l.b16 %v425
        %v664 = vunpack.c.h.b16 %v425
        %v665 = vunpack.c.l.b16 %v426
        %v666 = vunpack.c.h.b16 %v426
        %v667 = vunpack.c.l.b16 %v427
        %v668 = vunpack.c.h.b16 %v427
        %v669 = vunpack.c.l.b16 %v428
        %v670 = vunpack.c.h.b16 %v428
        %v671 = vunpack.c.l.b16 %v429
        %v672 = vunpack.c.h.b16 %v429
        %v673 = vunpack.c.l.b16 %v430
        %v674 = vunpack.c.h.b16 %v430
        %v675 = vunpack.c.l.b16 %v431
        %v676 = vunpack.c.h.b16 %v431
        %v677 = vunpack.c.l.b16 %v432
        %v678 = vunpack.c.h.b16 %v432
        %v679 = vunpack.c.l.b16 %v433
        %v680 = vunpack.c.h.b16 %v433
        %v681 = vunpack.c.l.b16 %v434
        %v682 = vunpack.c.h.b16 %v434
        %v683 = vunpack.c.l.b16 %v435
        %v684 = vunpack.c.h.b16 %v435
        %v685 = vunpack.c.l.b16 %v436
        %v686 = vunpack.c.h.b16 %v436
        %v687 = vunpack.c.l.b16 %v437
        %v688 = vunpack.c.h.b16 %v437
        %v689 = vunpack.c.l.b16 %v438
        %v690 = vunpack.c.h.b16 %v438
        %v691 = vunpack.c.l.b16 %v439
        %v692 = vunpack.c.h.b16 %v439
        %v693 = vunpack.c.l.b16 %v440
        %v694 = vunpack.c.h.b16 %v440
        %v695 = vunpack.c.l.b16 %v441
        %v696 = vunpack.c.h.b16 %v441
        %v697 = vunpack.c.l.b16 %v442
        %v698 = vunpack.c.h.b16 %v442
        %v699 = vunpack.c.l.b16 %v443
        %v700 = vunpack.c.h.b16 %v443
        %v701 = vunpack.c.l.b16 %v444
        %v702 = vunpack.c.h.b16 %v444
        %v703 = vunpack.c.l.b16 %v445
        %v704 = vunpack.c.h.b16 %v445
        %v705 = vunpack.c.l.b16 %v446
        %v706 = vunpack.c.h.b16 %v446
        %v707 = vunpack.c.l.b16 %v447
        %v708 = vunpack.c.h.b16 %v447
        %v709 = vunpack.c.l.b16 %v448
        %v710 = vunpack.c.h.b16 %v448
        %v711 = vunpack.c.l.b16 %v449
        %v712 = vunpack.c.h.b16 %v449
        %v713 = vunpack.c.l.b16 %v450
        %v714 = vunpack.c.h.b16 %v450
        %v715 = vunpack.c.l.b16 %v451
        %v716 = vunpack.c.h.b16 %v451
        %v717 = vunpack.c.l.b16 %v452
        %v718 = vunpack.c.h.b16 %v452
        %v719 = vunpack.c.l.b16 %v453
        %v720 = vunpack.c.h.b16 %v453
        %v721 = vunpack.c.l.b16 %v454
        %v722 = vunpack.c.h.b16 %v454
        %v723 = vunpack.c.l.b16 %v455
        %v724 = vunpack.c.h.b16 %v455
        %v725 = vunpack.c.l.b16 %v456
        %v726 = vunpack.c.h.b16 %v456
        %v727 = vunpack.c.l.b16 %v457
        %v728 = vunpack.c.h.b16 %v457
        %v729 = vunpack.c.l.b16 %v458
        %v730 = vunpack.c.h.b16 %v458
        %v731 = vunpack.c.l.b16 %v459
        %v732 = vunpack.c.h.b16 %v459
        %v733 = vunpack.c.l.b16 %v460
        %v734 = vunpack.c.h.b16 %v460
        %v735 = vunpack.c.l.b16 %v461
        %v736 = vunpack.c.h.b16 %v461
        %v737 = vunpack.c.l.b16 %v462
        %v738 = vunpack.c.h.b16 %v462
        %v739 = vunpack.c.l.b16 %v463
        %v740 = vunpack.c.h.b16 %v463
        %v741 = vunpack.c.l.b16 %v464
        %v742 = vunpack.c.h.b16 %v464
        %v743 = vunpack.c.l.b16 %v465
        %v744 = vunpack.c.h.b16 %v465
        %v745 = vunpack.c.l.b16 %v466
        %v746 = vunpack.c.h.b16 %v466
        %v747 = vunpack.c.l.b16 %v467
        %v748 = vunpack.c.h.b16 %v467
        %v749 = vunpack.c.l.b16 %v468
        %v750 = vunpack.c.h.b16 %v468
        %v751 = vunpack.c.l.b16 %v469
        %v752 = vunpack.c.h.b16 %v469
        %v753 = vunpack.c.l.b16 %v470
        %v754 = vunpack.c.h.b16 %v470
        %v755 = vunpack.c.l.b16 %v471
        %v756 = vunpack.c.h.b16 %v471
        %v757 = vunpack.c.l.b16 %v472
        %v758 = vunpack.c.h.b16 %v472
        %v759 = vunpack.c.l.b16 %v473
        %v760 = vunpack.c.h.b16 %v473
        %v761 = vunpack.c.l.b16 %v474
        %v762 = vunpack.c.h.b16 %v474
        %v763 = vunpack.c.l.b16 %v475
        %v764 = vunpack.c.h.b16 %v475
        %v765 = vunpack.c.l.b16 %v476
        %v766 = vunpack.c.h.b16 %v476
        %v767 = vunpack.c.l.b16 %v477
        %v768 = vunpack.c.h.b16 %v477
        %v769 = vunpack.c.l.b16 %v478
        %v770 = vunpack.c.h.b16 %v478
        %v771 = vunpack.c.l.b16 %v479
        %v772 = vunpack.c.h.b16 %v479
        %v773 = vunpack.c.l.b16 %v480
        %v774 = vunpack.c.h.b16 %v480
        %v775 = vpack.c.b16 %v615, %v583
        %v776 = vpack.c.b16 %v616, %v584
        %v777 = vpack.c.b16 %v617, %v585
        %v778 = vpack.c.b16 %v618, %v586
        %v779 = vpack.c.b16 %v619, %v587
        %v780 = vpack.c.b16 %v620, %v588
        %v781 = vpack.c.b16 %v621, %v589
        %v782 = vpack.c.b16 %v622, %v590
        %v783 = vpack.c.b16 %v623, %v591
        %v784 = vpack.c.b16 %v624, %v592
        %v785 = vpack.c.b16 %v625, %v593
        %v786 = vpack.c.b16 %v626, %v594
        %v787 = vpack.c.b16 %v627, %v595
        %v788 = vpack.c.b16 %v628, %v596
        %v789 = vpack.c.b16 %v629, %v597
        %v790 = vpack.c.b16 %v630, %v598
        %v791 = vpack.c.b16 %v631, %v599
        %v792 = vpack.c.b16 %v632, %v600
        %v793 = vpack.c.b16 %v633, %v601
        %v794 = vpack.c.b16 %v634, %v602
        %v795 = vpack.c.b16 %v635, %v603
        %v796 = vpack.c.b16 %v636, %v604
        %v797 = vpack.c.b16 %v637, %v605
        %v798 = vpack.c.b16 %v638, %v606
        %v799 = vpack.c.b16 %v639, %v607
        %v800 = vpack.c.b16 %v640, %v608
        %v801 = vpack.c.b16 %v641, %v609
        %v802 = vpack.c.b16 %v642, %v610
        %v803 = vpack.c.b16 %v643, %v611
        %v804 = vpack.c.b16 %v644, %v612
        %v805 = vpack.c.b16 %v645, %v613
        %v806 = vpack.c.b16 %v646, %v614
        %v807 = vpack.c.b16 %v679, %v647
        %v808 = vpack.c.b16 %v680, %v648
        %v809 = vpack.c.b16 %v681, %v649
        %v810 = vpack.c.b16 %v682, %v650
        %v811 = vpack.c.b16 %v683, %v651
        %v812 = vpack.c.b16 %v684, %v652
        %v813 = vpack.c.b16 %v685, %v653
        %v814 = vpack.c.b16 %v686, %v654
        %v815 = vpack.c.b16 %v687, %v655
        %v816 = vpack.c.b16 %v688, %v656
        %v817 = vpack.c.b16 %v689, %v657
        %v818 = vpack.c.b16 %v690, %v658
        %v819 = vpack.c.b16 %v691, %v659
        %v820 = vpack.c.b16 %v692, %v660
        %v821 = vpack.c.b16 %v693, %v661
        %v822 = vpack.c.b16 %v694, %v662
        %v823 = vpack.c.b16 %v695, %v663
        %v824 = vpack.c.b16 %v696, %v664
        %v825 = vpack.c.b16 %v697, %v665
        %v826 = vpack.c.b16 %v698, %v666
        %v827 = vpack.c.b16 %v699, %v667
        %v828 = vpack.c.b16 %v700, %v668
        %v829 = vpack.c.b16 %v701, %v669
        %v830 = vpack.c.b16 %v702, %v670
        %v831 = vpack.c.b16 %v703, %v671
        %v832 = vpack.c.b16 %v704, %v672
        %v833 = vpack.c.b16 %v705, %v673
        %v834 = vpack.c.b16 %v706, %v674
        %v835 = vpack.c.b16 %v707, %v675
        %v836 = vpack.c.b16 %v708, %v676
        %v837 = vpack.c.b16 %v709, %v677
        %v838 = vpack.c.b16 %v710, %v678
        %v839 = vpack.c.b16 %v743, %v711
        %v840 = vpack.c.b16 %v744, %v712
        %v841 = vpack.c.b16 %v745, %v713
        %v842 = vpack.c.b16 %v746, %v714
        %v843 = vpack.c.b16 %v747, %v715
        %v844 = vpack.c.b16 %v748, %v716
        %v845 = vpack.c.b16 %v749, %v717
        %v846 = vpack.c.b16 %v750, %v718
        %v847 = vpack.c.b16 %v751, %v719
        %v848 = vpack.c.b16 %v752, %v720
        %v849 = vpack.c.b16 %v753, %v721
        %v850 = vpack.c.b16 %v754, %v722
        %v851 = vpack.c.b16 %v755, %v723
        %v852 = vpack.c.b16 %v756, %v724
        %v853 = vpack.c.b16 %v757, %v725
        %v854 = vpack.c.b16 %v758, %v726
        %v855 = vpack.c.b16 %v759, %v727
        %v856 = vpack.c.b16 %v760, %v728
        %v857 = vpack.c.b16 %v761, %v729
        %v858 = vpack.c.b16 %v762, %v730
        %v859 = vpack.c.b16 %v763, %v731
        %v860 = vpack.c.b16 %v764, %v732
        %v861 = vpack.c.b16 %v765, %v733
        %v862 = vpack.c.b16 %v766, %v734
        %v863 = vpack.c.b16 %v767, %v735
        %v864 = vpack.c.b16 %v768, %v736
        %v865 = vpack.c.b16 %v769, %v737
        %v866 = vpack.c.b16 %v770, %v738
        %v867 = vpack.c.b16 %v771, %v739
        %v868 = vpack.c.b16 %v772, %v740
        %v869 = vpack.c.b16 %v773, %v741
        %v870 = vpack.c.b16 %v774, %v742
        %vm967 = vcmask 392192
        %v969 = vsel %vm967, %v384, 0
        %971 = vmatpush.bf16.msra.mxu0 0
        %972 = vmatpush.bf16.msra.mxu0 0
        %973 = vmatpush.bf16.msra.mxu0 0
        %974 = vmatpush.bf16.msra.mxu0 0
        %975 = vmatpush.bf16.msra.mxu0 0
        %976 = vmatpush.bf16.msra.mxu0 %v839
        %977 = vmatpush.bf16.msra.mxu0 %v807
        %978 = vmatpush.bf16.msra.mxu0 %v775
        %979 = vmatmul.bf16.gmra.mxu0 %v969
        %v980 = vpop.f32.mrf.mxu0
        %v981 = vadd.f32 %v485, %v980
        %v982 = vpop.f32.mrf.mxu0
        %983 = vdwg.mxu0
        %984 = vmatpush.bf16.msra.mxu0 0
        %985 = vmatpush.bf16.msra.mxu0 0
        %986 = vmatpush.bf16.msra.mxu0 0
        %987 = vmatpush.bf16.msra.mxu0 0
        %988 = vmatpush.bf16.msra.mxu0 0
        %989 = vmatpush.bf16.msra.mxu0 %v840
        %990 = vmatpush.bf16.msra.mxu0 %v808
        %991 = vmatpush.bf16.msra.mxu0 %v776
        %992 = vmatmul.bf16.gmra.mxu0 %v969
        %v993 = vpop.f32.mrf.mxu0
        %v994 = vadd.f32 %v485, %v993
        %v995 = vpop.f32.mrf.mxu0
        %996 = vdwg.mxu0
        %997 = vmatpush.bf16.msra.mxu0 0
        %998 = vmatpush.bf16.msra.mxu0 0
        %999 = vmatpush.bf16.msra.mxu0 0
        %1000 = vmatpush.bf16.msra.mxu0 0
        %1001 = vmatpush.bf16.msra.mxu0 0
        %1002 = vmatpush.bf16.msra.mxu0 %v841
        %1003 = vmatpush.bf16.msra.mxu0 %v809
        %1004 = vmatpush.bf16.msra.mxu0 %v777
        %1005 = vmatmul.bf16.gmra.mxu0 %v969
        %v1006 = vpop.f32.mrf.mxu0
        %v1007 = vadd.f32 %v485, %v1006
        %v1008 = vpop.f32.mrf.mxu0
        %1009 = vdwg.mxu0
        %1010 = vmatpush.bf16.msra.mxu0 0
        %1011 = vmatpush.bf16.msra.mxu0 0
        %1012 = vmatpush.bf16.msra.mxu0 0
        %1013 = vmatpush.bf16.msra.mxu0 0
        %1014 = vmatpush.bf16.msra.mxu0 0
        %1015 = vmatpush.bf16.msra.mxu0 %v842
        %1016 = vmatpush.bf16.msra.mxu0 %v810
        %1017 = vmatpush.bf16.msra.mxu0 %v778
        %1018 = vmatmul.bf16.gmra.mxu0 %v969
        %v1019 = vpop.f32.mrf.mxu0
        %v1020 = vadd.f32 %v485, %v1019
        %v1021 = vpop.f32.mrf.mxu0
        %1022 = vdwg.mxu0
        %1023 = vmatpush.bf16.msra.mxu0 0
        %1024 = vmatpush.bf16.msra.mxu0 0
        %1025 = vmatpush.bf16.msra.mxu0 0
        %1026 = vmatpush.bf16.msra.mxu0 0
        %1027 = vmatpush.bf16.msra.mxu0 0
        %1028 = vmatpush.bf16.msra.mxu0 %v843
        %1029 = vmatpush.bf16.msra.mxu0 %v811
        %1030 = vmatpush.bf16.msra.mxu0 %v779
        %1031 = vmatmul.bf16.gmra.mxu0 %v969
        %v1032 = vpop.f32.mrf.mxu0
        %v1033 = vadd.f32 %v485, %v1032
        %v1034 = vpop.f32.mrf.mxu0
        %1035 = vdwg.mxu0
        %1036 = vmatpush.bf16.msra.mxu0 0
        %1037 = vmatpush.bf16.msra.mxu0 0
        %1038 = vmatpush.bf16.msra.mxu0 0
        %1039 = vmatpush.bf16.msra.mxu0 0
        %1040 = vmatpush.bf16.msra.mxu0 0
        %1041 = vmatpush.bf16.msra.mxu0 %v844
        %1042 = vmatpush.bf16.msra.mxu0 %v812
        %1043 = vmatpush.bf16.msra.mxu0 %v780
        %1044 = vmatmul.bf16.gmra.mxu0 %v969
        %v1045 = vpop.f32.mrf.mxu0
        %v1046 = vadd.f32 %v485, %v1045
        %v1047 = vpop.f32.mrf.mxu0
        %1048 = vdwg.mxu0
        %1049 = vmatpush.bf16.msra.mxu0 0
        %1050 = vmatpush.bf16.msra.mxu0 0
        %1051 = vmatpush.bf16.msra.mxu0 0
        %1052 = vmatpush.bf16.msra.mxu0 0
        %1053 = vmatpush.bf16.msra.mxu0 0
        %1054 = vmatpush.bf16.msra.mxu0 %v845
        %1055 = vmatpush.bf16.msra.mxu0 %v813
        %1056 = vmatpush.bf16.msra.mxu0 %v781
        %1057 = vmatmul.bf16.gmra.mxu0 %v969
        %v1058 = vpop.f32.mrf.mxu0
        %v1059 = vadd.f32 %v485, %v1058
        %v1060 = vpop.f32.mrf.mxu0
        %1061 = vdwg.mxu0
        %1062 = vmatpush.bf16.msra.mxu0 0
        %1063 = vmatpush.bf16.msra.mxu0 0
        %1064 = vmatpush.bf16.msra.mxu0 0
        %1065 = vmatpush.bf16.msra.mxu0 0
        %1066 = vmatpush.bf16.msra.mxu0 0
        %1067 = vmatpush.bf16.msra.mxu0 %v846
        %1068 = vmatpush.bf16.msra.mxu0 %v814
        %1069 = vmatpush.bf16.msra.mxu0 %v782
        %1070 = vmatmul.bf16.gmra.mxu0 %v969
        %v1071 = vpop.f32.mrf.mxu0
        %v1072 = vadd.f32 %v485, %v1071
        %v1073 = vpop.f32.mrf.mxu0
        %1074 = vdwg.mxu0
        %1075 = vmatpush.bf16.msra.mxu0 0
        %1076 = vmatpush.bf16.msra.mxu0 0
        %1077 = vmatpush.bf16.msra.mxu0 0
        %1078 = vmatpush.bf16.msra.mxu0 0
        %1079 = vmatpush.bf16.msra.mxu0 0
        %1080 = vmatpush.bf16.msra.mxu0 %v847
        %1081 = vmatpush.bf16.msra.mxu0 %v815
        %1082 = vmatpush.bf16.msra.mxu0 %v783
        %1083 = vmatmul.bf16.gmra.mxu0 %v969
        %v1084 = vpop.f32.mrf.mxu0
        %v1085 = vadd.f32 %v485, %v1084
        %v1086 = vpop.f32.mrf.mxu0
        %1087 = vdwg.mxu0
        %1088 = vmatpush.bf16.msra.mxu0 0
        %1089 = vmatpush.bf16.msra.mxu0 0
        %1090 = vmatpush.bf16.msra.mxu0 0
        %1091 = vmatpush.bf16.msra.mxu0 0
        %1092 = vmatpush.bf16.msra.mxu0 0
        %1093 = vmatpush.bf16.msra.mxu0 %v848
        %1094 = vmatpush.bf16.msra.mxu0 %v816
        %1095 = vmatpush.bf16.msra.mxu0 %v784
        %1096 = vmatmul.bf16.gmra.mxu0 %v969
        %v1097 = vpop.f32.mrf.mxu0
        %v1098 = vadd.f32 %v485, %v1097
        %v1099 = vpop.f32.mrf.mxu0
        %1100 = vdwg.mxu0
        %1101 = vmatpush.bf16.msra.mxu0 0
        %1102 = vmatpush.bf16.msra.mxu0 0
        %1103 = vmatpush.bf16.msra.mxu0 0
        %1104 = vmatpush.bf16.msra.mxu0 0
        %1105 = vmatpush.bf16.msra.mxu0 0
        %1106 = vmatpush.bf16.msra.mxu0 %v849
        %1107 = vmatpush.bf16.msra.mxu0 %v817
        %1108 = vmatpush.bf16.msra.mxu0 %v785
        %1109 = vmatmul.bf16.gmra.mxu0 %v969
        %v1110 = vpop.f32.mrf.mxu0
        %v1111 = vadd.f32 %v485, %v1110
        %v1112 = vpop.f32.mrf.mxu0
        %1113 = vdwg.mxu0
        %1114 = vmatpush.bf16.msra.mxu0 0
        %1115 = vmatpush.bf16.msra.mxu0 0
        %1116 = vmatpush.bf16.msra.mxu0 0
        %1117 = vmatpush.bf16.msra.mxu0 0
        %1118 = vmatpush.bf16.msra.mxu0 0
        %1119 = vmatpush.bf16.msra.mxu0 %v850
        %1120 = vmatpush.bf16.msra.mxu0 %v818
        %1121 = vmatpush.bf16.msra.mxu0 %v786
        %1122 = vmatmul.bf16.gmra.mxu0 %v969
        %v1123 = vpop.f32.mrf.mxu0
        %v1124 = vadd.f32 %v485, %v1123
        %v1125 = vpop.f32.mrf.mxu0
        %1126 = vdwg.mxu0
        %1127 = vmatpush.bf16.msra.mxu0 0
        %1128 = vmatpush.bf16.msra.mxu0 0
        %1129 = vmatpush.bf16.msra.mxu0 0
        %1130 = vmatpush.bf16.msra.mxu0 0
        %1131 = vmatpush.bf16.msra.mxu0 0
        %1132 = vmatpush.bf16.msra.mxu0 %v851
        %1133 = vmatpush.bf16.msra.mxu0 %v819
        %1134 = vmatpush.bf16.msra.mxu0 %v787
        %1135 = vmatmul.bf16.gmra.mxu0 %v969
        %v1136 = vpop.f32.mrf.mxu0
        %v1137 = vadd.f32 %v485, %v1136
        %v1138 = vpop.f32.mrf.mxu0
        %1139 = vdwg.mxu0
        %1140 = vmatpush.bf16.msra.mxu0 0
        %1141 = vmatpush.bf16.msra.mxu0 0
        %1142 = vmatpush.bf16.msra.mxu0 0
        %1143 = vmatpush.bf16.msra.mxu0 0
        %1144 = vmatpush.bf16.msra.mxu0 0
        %1145 = vmatpush.bf16.msra.mxu0 %v852
        %1146 = vmatpush.bf16.msra.mxu0 %v820
        %1147 = vmatpush.bf16.msra.mxu0 %v788
        %1148 = vmatmul.bf16.gmra.mxu0 %v969
        %v1149 = vpop.f32.mrf.mxu0
        %v1150 = vadd.f32 %v485, %v1149
        %v1151 = vpop.f32.mrf.mxu0
        %1152 = vdwg.mxu0
        %1153 = vmatpush.bf16.msra.mxu0 0
        %1154 = vmatpush.bf16.msra.mxu0 0
        %1155 = vmatpush.bf16.msra.mxu0 0
        %1156 = vmatpush.bf16.msra.mxu0 0
        %1157 = vmatpush.bf16.msra.mxu0 0
        %1158 = vmatpush.bf16.msra.mxu0 %v853
        %1159 = vmatpush.bf16.msra.mxu0 %v821
        %1160 = vmatpush.bf16.msra.mxu0 %v789
        %1161 = vmatmul.bf16.gmra.mxu0 %v969
        %v1162 = vpop.f32.mrf.mxu0
        %v1163 = vadd.f32 %v485, %v1162
        %v1164 = vpop.f32.mrf.mxu0
        %1165 = vdwg.mxu0
        %1166 = vmatpush.bf16.msra.mxu0 0
        %1167 = vmatpush.bf16.msra.mxu0 0
        %1168 = vmatpush.bf16.msra.mxu0 0
        %1169 = vmatpush.bf16.msra.mxu0 0
        %1170 = vmatpush.bf16.msra.mxu0 0
        %1171 = vmatpush.bf16.msra.mxu0 %v854
        %1172 = vmatpush.bf16.msra.mxu0 %v822
        %1173 = vmatpush.bf16.msra.mxu0 %v790
        %1174 = vmatmul.bf16.gmra.mxu0 %v969
        %v1175 = vpop.f32.mrf.mxu0
        %v1176 = vadd.f32 %v485, %v1175
        %v1177 = vpop.f32.mrf.mxu0
        %1178 = vdwg.mxu0
        %1179 = vmatpush.bf16.msra.mxu0 0
        %1180 = vmatpush.bf16.msra.mxu0 0
        %1181 = vmatpush.bf16.msra.mxu0 0
        %1182 = vmatpush.bf16.msra.mxu0 0
        %1183 = vmatpush.bf16.msra.mxu0 0
        %1184 = vmatpush.bf16.msra.mxu0 %v855
        %1185 = vmatpush.bf16.msra.mxu0 %v823
        %1186 = vmatpush.bf16.msra.mxu0 %v791
        %1187 = vmatmul.bf16.gmra.mxu0 %v969
        %v1188 = vpop.f32.mrf.mxu0
        %v1189 = vadd.f32 %v485, %v1188
        %v1190 = vpop.f32.mrf.mxu0
        %1191 = vdwg.mxu0
        %1192 = vmatpush.bf16.msra.mxu0 0
        %1193 = vmatpush.bf16.msra.mxu0 0
        %1194 = vmatpush.bf16.msra.mxu0 0
        %1195 = vmatpush.bf16.msra.mxu0 0
        %1196 = vmatpush.bf16.msra.mxu0 0
        %1197 = vmatpush.bf16.msra.mxu0 %v856
        %1198 = vmatpush.bf16.msra.mxu0 %v824
        %1199 = vmatpush.bf16.msra.mxu0 %v792
        %1200 = vmatmul.bf16.gmra.mxu0 %v969
        %v1201 = vpop.f32.mrf.mxu0
        %v1202 = vadd.f32 %v485, %v1201
        %v1203 = vpop.f32.mrf.mxu0
        %1204 = vdwg.mxu0
        %1205 = vmatpush.bf16.msra.mxu0 0
        %1206 = vmatpush.bf16.msra.mxu0 0
        %1207 = vmatpush.bf16.msra.mxu0 0
        %1208 = vmatpush.bf16.msra.mxu0 0
        %1209 = vmatpush.bf16.msra.mxu0 0
        %1210 = vmatpush.bf16.msra.mxu0 %v857
        %1211 = vmatpush.bf16.msra.mxu0 %v825
        %1212 = vmatpush.bf16.msra.mxu0 %v793
        %1213 = vmatmul.bf16.gmra.mxu0 %v969
        %v1214 = vpop.f32.mrf.mxu0
        %v1215 = vadd.f32 %v485, %v1214
        %v1216 = vpop.f32.mrf.mxu0
        %1217 = vdwg.mxu0
        %1218 = vmatpush.bf16.msra.mxu0 0
        %1219 = vmatpush.bf16.msra.mxu0 0
        %1220 = vmatpush.bf16.msra.mxu0 0
        %1221 = vmatpush.bf16.msra.mxu0 0
        %1222 = vmatpush.bf16.msra.mxu0 0
        %1223 = vmatpush.bf16.msra.mxu0 %v858
        %1224 = vmatpush.bf16.msra.mxu0 %v826
        %1225 = vmatpush.bf16.msra.mxu0 %v794
        %1226 = vmatmul.bf16.gmra.mxu0 %v969
        %v1227 = vpop.f32.mrf.mxu0
        %v1228 = vadd.f32 %v485, %v1227
        %v1229 = vpop.f32.mrf.mxu0
        %1230 = vdwg.mxu0
        %1231 = vmatpush.bf16.msra.mxu0 0
        %1232 = vmatpush.bf16.msra.mxu0 0
        %1233 = vmatpush.bf16.msra.mxu0 0
        %1234 = vmatpush.bf16.msra.mxu0 0
        %1235 = vmatpush.bf16.msra.mxu0 0
        %1236 = vmatpush.bf16.msra.mxu0 %v859
        %1237 = vmatpush.bf16.msra.mxu0 %v827
        %1238 = vmatpush.bf16.msra.mxu0 %v795
        %1239 = vmatmul.bf16.gmra.mxu0 %v969
        %v1240 = vpop.f32.mrf.mxu0
        %v1241 = vadd.f32 %v485, %v1240
        %v1242 = vpop.f32.mrf.mxu0
        %1243 = vdwg.mxu0
        %1244 = vmatpush.bf16.msra.mxu0 0
        %1245 = vmatpush.bf16.msra.mxu0 0
        %1246 = vmatpush.bf16.msra.mxu0 0
        %1247 = vmatpush.bf16.msra.mxu0 0
        %1248 = vmatpush.bf16.msra.mxu0 0
        %1249 = vmatpush.bf16.msra.mxu0 %v860
        %1250 = vmatpush.bf16.msra.mxu0 %v828
        %1251 = vmatpush.bf16.msra.mxu0 %v796
        %1252 = vmatmul.bf16.gmra.mxu0 %v969
        %v1253 = vpop.f32.mrf.mxu0
        %v1254 = vadd.f32 %v485, %v1253
        %v1255 = vpop.f32.mrf.mxu0
        %1256 = vdwg.mxu0
        %1257 = vmatpush.bf16.msra.mxu0 0
        %1258 = vmatpush.bf16.msra.mxu0 0
        %1259 = vmatpush.bf16.msra.mxu0 0
        %1260 = vmatpush.bf16.msra.mxu0 0
        %1261 = vmatpush.bf16.msra.mxu0 0
        %1262 = vmatpush.bf16.msra.mxu0 %v861
        %1263 = vmatpush.bf16.msra.mxu0 %v829
        %1264 = vmatpush.bf16.msra.mxu0 %v797
        %1265 = vmatmul.bf16.gmra.mxu0 %v969
        %v1266 = vpop.f32.mrf.mxu0
        %v1267 = vadd.f32 %v485, %v1266
        %v1268 = vpop.f32.mrf.mxu0
        %1269 = vdwg.mxu0
        %1270 = vmatpush.bf16.msra.mxu0 0
        %1271 = vmatpush.bf16.msra.mxu0 0
        %1272 = vmatpush.bf16.msra.mxu0 0
        %1273 = vmatpush.bf16.msra.mxu0 0
        %1274 = vmatpush.bf16.msra.mxu0 0
        %1275 = vmatpush.bf16.msra.mxu0 %v862
        %1276 = vmatpush.bf16.msra.mxu0 %v830
        %1277 = vmatpush.bf16.msra.mxu0 %v798
        %1278 = vmatmul.bf16.gmra.mxu0 %v969
        %v1279 = vpop.f32.mrf.mxu0
        %v1280 = vadd.f32 %v485, %v1279
        %v1281 = vpop.f32.mrf.mxu0
        %1282 = vdwg.mxu0
        %1283 = vmatpush.bf16.msra.mxu0 0
        %1284 = vmatpush.bf16.msra.mxu0 0
        %1285 = vmatpush.bf16.msra.mxu0 0
        %1286 = vmatpush.bf16.msra.mxu0 0
        %1287 = vmatpush.bf16.msra.mxu0 0
        %1288 = vmatpush.bf16.msra.mxu0 %v863
        %1289 = vmatpush.bf16.msra.mxu0 %v831
        %1290 = vmatpush.bf16.msra.mxu0 %v799
        %1291 = vmatmul.bf16.gmra.mxu0 %v969
        %v1292 = vpop.f32.mrf.mxu0
        %v1293 = vadd.f32 %v485, %v1292
        %v1294 = vpop.f32.mrf.mxu0
        %1295 = vdwg.mxu0
        %1296 = vmatpush.bf16.msra.mxu0 0
        %1297 = vmatpush.bf16.msra.mxu0 0
        %1298 = vmatpush.bf16.msra.mxu0 0
        %1299 = vmatpush.bf16.msra.mxu0 0
        %1300 = vmatpush.bf16.msra.mxu0 0
        %1301 = vmatpush.bf16.msra.mxu0 %v864
        %1302 = vmatpush.bf16.msra.mxu0 %v832
        %1303 = vmatpush.bf16.msra.mxu0 %v800
        %1304 = vmatmul.bf16.gmra.mxu0 %v969
        %v1305 = vpop.f32.mrf.mxu0
        %v1306 = vadd.f32 %v485, %v1305
        %v1307 = vpop.f32.mrf.mxu0
        %1308 = vdwg.mxu0
        %1309 = vmatpush.bf16.msra.mxu0 0
        %1310 = vmatpush.bf16.msra.mxu0 0
        %1311 = vmatpush.bf16.msra.mxu0 0
        %1312 = vmatpush.bf16.msra.mxu0 0
        %1313 = vmatpush.bf16.msra.mxu0 0
        %1314 = vmatpush.bf16.msra.mxu0 %v865
        %1315 = vmatpush.bf16.msra.mxu0 %v833
        %1316 = vmatpush.bf16.msra.mxu0 %v801
        %1317 = vmatmul.bf16.gmra.mxu0 %v969
        %v1318 = vpop.f32.mrf.mxu0
        %v1319 = vadd.f32 %v485, %v1318
        %v1320 = vpop.f32.mrf.mxu0
        %1321 = vdwg.mxu0
        %1322 = vmatpush.bf16.msra.mxu0 0
        %1323 = vmatpush.bf16.msra.mxu0 0
        %1324 = vmatpush.bf16.msra.mxu0 0
        %1325 = vmatpush.bf16.msra.mxu0 0
        %1326 = vmatpush.bf16.msra.mxu0 0
        %1327 = vmatpush.bf16.msra.mxu0 %v866
        %1328 = vmatpush.bf16.msra.mxu0 %v834
        %1329 = vmatpush.bf16.msra.mxu0 %v802
        %1330 = vmatmul.bf16.gmra.mxu0 %v969
        %v1331 = vpop.f32.mrf.mxu0
        %v1332 = vadd.f32 %v485, %v1331
        %v1333 = vpop.f32.mrf.mxu0
        %1334 = vdwg.mxu0
        %1335 = vmatpush.bf16.msra.mxu0 0
        %1336 = vmatpush.bf16.msra.mxu0 0
        %1337 = vmatpush.bf16.msra.mxu0 0
        %1338 = vmatpush.bf16.msra.mxu0 0
        %1339 = vmatpush.bf16.msra.mxu0 0
        %1340 = vmatpush.bf16.msra.mxu0 %v867
        %1341 = vmatpush.bf16.msra.mxu0 %v835
        %1342 = vmatpush.bf16.msra.mxu0 %v803
        %1343 = vmatmul.bf16.gmra.mxu0 %v969
        %v1344 = vpop.f32.mrf.mxu0
        %v1345 = vadd.f32 %v485, %v1344
        %v1346 = vpop.f32.mrf.mxu0
        %1347 = vdwg.mxu0
        %1348 = vmatpush.bf16.msra.mxu0 0
        %1349 = vmatpush.bf16.msra.mxu0 0
        %1350 = vmatpush.bf16.msra.mxu0 0
        %1351 = vmatpush.bf16.msra.mxu0 0
        %1352 = vmatpush.bf16.msra.mxu0 0
        %1353 = vmatpush.bf16.msra.mxu0 %v868
        %1354 = vmatpush.bf16.msra.mxu0 %v836
        %1355 = vmatpush.bf16.msra.mxu0 %v804
        %1356 = vmatmul.bf16.gmra.mxu0 %v969
        %v1357 = vpop.f32.mrf.mxu0
        %v1358 = vadd.f32 %v485, %v1357
        %v1359 = vpop.f32.mrf.mxu0
        %1360 = vdwg.mxu0
        %1361 = vmatpush.bf16.msra.mxu0 0
        %1362 = vmatpush.bf16.msra.mxu0 0
        %1363 = vmatpush.bf16.msra.mxu0 0
        %1364 = vmatpush.bf16.msra.mxu0 0
        %1365 = vmatpush.bf16.msra.mxu0 0
        %1366 = vmatpush.bf16.msra.mxu0 %v869
        %1367 = vmatpush.bf16.msra.mxu0 %v837
        %1368 = vmatpush.bf16.msra.mxu0 %v805
        %1369 = vmatmul.bf16.gmra.mxu0 %v969
        %v1370 = vpop.f32.mrf.mxu0
        %v1371 = vadd.f32 %v485, %v1370
        %v1372 = vpop.f32.mrf.mxu0
        %1373 = vdwg.mxu0
        %1374 = vmatpush.bf16.msra.mxu0 0
        %1375 = vmatpush.bf16.msra.mxu0 0
        %1376 = vmatpush.bf16.msra.mxu0 0
        %1377 = vmatpush.bf16.msra.mxu0 0
        %1378 = vmatpush.bf16.msra.mxu0 0
        %1379 = vmatpush.bf16.msra.mxu0 %v870
        %1380 = vmatpush.bf16.msra.mxu0 %v838
        %1381 = vmatpush.bf16.msra.mxu0 %v806
        %1382 = vmatmul.bf16.gmra.mxu0 %v969
        %v1383 = vpop.f32.mrf.mxu0
        %v1384 = vadd.f32 %v485, %v1383
        %v1385 = vpop.f32.mrf.mxu0
        %1386 = vdwg.mxu0
        %vm1387 = vcmp.gt.f32.partialorder %v981, 0.0
        %vm1388 = vcmp.gt.f32.partialorder %v994, 0.0
        %vm1389 = vcmp.gt.f32.partialorder %v1007, 0.0
        %vm1390 = vcmp.gt.f32.partialorder %v1020, 0.0
        %vm1391 = vcmp.gt.f32.partialorder %v1033, 0.0
        %vm1392 = vcmp.gt.f32.partialorder %v1046, 0.0
        %vm1393 = vcmp.gt.f32.partialorder %v1059, 0.0
        %vm1394 = vcmp.gt.f32.partialorder %v1072, 0.0
        %vm1395 = vcmp.gt.f32.partialorder %v1085, 0.0
        %vm1396 = vcmp.gt.f32.partialorder %v1098, 0.0
        %vm1397 = vcmp.gt.f32.partialorder %v1111, 0.0
        %vm1398 = vcmp.gt.f32.partialorder %v1124, 0.0
        %vm1399 = vcmp.gt.f32.partialorder %v1137, 0.0
        %vm1400 = vcmp.gt.f32.partialorder %v1150, 0.0
        %vm1401 = vcmp.gt.f32.partialorder %v1163, 0.0
        %vm1402 = vcmp.gt.f32.partialorder %v1176, 0.0
        %vm1403 = vcmp.gt.f32.partialorder %v1189, 0.0
        %vm1404 = vcmp.gt.f32.partialorder %v1202, 0.0
        %vm1405 = vcmp.gt.f32.partialorder %v1215, 0.0
        %vm1406 = vcmp.gt.f32.partialorder %v1228, 0.0
        %vm1407 = vcmp.gt.f32.partialorder %v1241, 0.0
        %vm1408 = vcmp.gt.f32.partialorder %v1254, 0.0
        %vm1409 = vcmp.gt.f32.partialorder %v1267, 0.0
        %vm1410 = vcmp.gt.f32.partialorder %v1280, 0.0
        %vm1411 = vcmp.gt.f32.partialorder %v1293, 0.0
        %vm1412 = vcmp.gt.f32.partialorder %v1306, 0.0
        %vm1413 = vcmp.gt.f32.partialorder %v1319, 0.0
        %vm1414 = vcmp.gt.f32.partialorder %v1332, 0.0
        %vm1415 = vcmp.gt.f32.partialorder %v1345, 0.0
        %vm1416 = vcmp.gt.f32.partialorder %v1358, 0.0
        %vm1417 = vcmp.gt.f32.partialorder %v1371, 0.0
        %vm1418 = vcmp.gt.f32.partialorder %v1384, 0.0
        %v1419 = vmul.f32 %v981, 0.2
        %v1420 = vmul.f32 %v994, 0.2
        %v1421 = vmul.f32 %v1007, 0.2
        %v1422 = vmul.f32 %v1020, 0.2
        %v1423 = vmul.f32 %v1033, 0.2
        %v1424 = vmul.f32 %v1046, 0.2
        %v1425 = vmul.f32 %v1059, 0.2
        %v1426 = vmul.f32 %v1072, 0.2
        %v1427 = vmul.f32 %v1085, 0.2
        %v1428 = vmul.f32 %v1098, 0.2
        %v1429 = vmul.f32 %v1111, 0.2
        %v1430 = vmul.f32 %v1124, 0.2
        %v1431 = vmul.f32 %v1137, 0.2
        %v1432 = vmul.f32 %v1150, 0.2
        %v1433 = vmul.f32 %v1163, 0.2
        %v1434 = vmul.f32 %v1176, 0.2
        %v1435 = vmul.f32 %v1189, 0.2
        %v1436 = vmul.f32 %v1202, 0.2
        %v1437 = vmul.f32 %v1215, 0.2
        %v1438 = vmul.f32 %v1228, 0.2
        %v1439 = vmul.f32 %v1241, 0.2
        %v1440 = vmul.f32 %v1254, 0.2
        %v1441 = vmul.f32 %v1267, 0.2
        %v1442 = vmul.f32 %v1280, 0.2
        %v1443 = vmul.f32 %v1293, 0.2
        %v1444 = vmul.f32 %v1306, 0.2
        %v1445 = vmul.f32 %v1319, 0.2
        %v1446 = vmul.f32 %v1332, 0.2
        %v1447 = vmul.f32 %v1345, 0.2
        %v1448 = vmul.f32 %v1358, 0.2
        %v1449 = vmul.f32 %v1371, 0.2
        %v1450 = vmul.f32 %v1384, 0.2
        %v1451 = vsel %vm1387, %v981, %v1419
        %v1452 = vsel %vm1388, %v994, %v1420
        %v1453 = vsel %vm1389, %v1007, %v1421
        %v1454 = vsel %vm1390, %v1020, %v1422
        %v1455 = vsel %vm1391, %v1033, %v1423
        %v1456 = vsel %vm1392, %v1046, %v1424
        %v1457 = vsel %vm1393, %v1059, %v1425
        %v1458 = vsel %vm1394, %v1072, %v1426
        %v1459 = vsel %vm1395, %v1085, %v1427
        %v1460 = vsel %vm1396, %v1098, %v1428
        %v1461 = vsel %vm1397, %v1111, %v1429
        %v1462 = vsel %vm1398, %v1124, %v1430
        %v1463 = vsel %vm1399, %v1137, %v1431
        %v1464 = vsel %vm1400, %v1150, %v1432
        %v1465 = vsel %vm1401, %v1163, %v1433
        %v1466 = vsel %vm1402, %v1176, %v1434
        %v1467 = vsel %vm1403, %v1189, %v1435
        %v1468 = vsel %vm1404, %v1202, %v1436
        %v1469 = vsel %vm1405, %v1215, %v1437
        %v1470 = vsel %vm1406, %v1228, %v1438
        %v1471 = vsel %vm1407, %v1241, %v1439
        %v1472 = vsel %vm1408, %v1254, %v1440
        %v1473 = vsel %vm1409, %v1267, %v1441
        %v1474 = vsel %vm1410, %v1280, %v1442
        %v1475 = vsel %vm1411, %v1293, %v1443
        %v1476 = vsel %vm1412, %v1306, %v1444
        %v1477 = vsel %vm1413, %v1319, %v1445
        %v1478 = vsel %vm1414, %v1332, %v1446
        %v1479 = vsel %vm1415, %v1345, %v1447
        %v1480 = vsel %vm1416, %v1358, %v1448
        %v1481 = vsel %vm1417, %v1371, %v1449
        %v1482 = vsel %vm1418, %v1384, %v1450
        %v1483 = vpack.c.bf16 %v1452, %v1451
        %v1484 = vpack.c.bf16 %v1454, %v1453
        %v1485 = vpack.c.bf16 %v1456, %v1455
        %v1486 = vpack.c.bf16 %v1458, %v1457
        %v1487 = vpack.c.bf16 %v1460, %v1459
        %v1488 = vpack.c.bf16 %v1462, %v1461
        %v1489 = vpack.c.bf16 %v1464, %v1463
        %v1490 = vpack.c.bf16 %v1466, %v1465
        %v1491 = vpack.c.bf16 %v1468, %v1467
        %v1492 = vpack.c.bf16 %v1470, %v1469
        %v1493 = vpack.c.bf16 %v1472, %v1471
        %v1494 = vpack.c.bf16 %v1474, %v1473
        %v1495 = vpack.c.bf16 %v1476, %v1475
        %v1496 = vpack.c.bf16 %v1478, %v1477
        %v1497 = vpack.c.bf16 %v1480, %v1479
        %v1498 = vpack.c.bf16 %v1482, %v1481
        %1499 = vst [vmem:[%s381] sm:$0xff] %v1483
        %1500 = vst [vmem:[%s381 + $0x8] sm:$0xff] %v1484
        %1501 = vst [vmem:[%s381 + $0x10] sm:$0xff] %v1485
        %1502 = vst [vmem:[%s381 + $0x18] sm:$0xff] %v1486
        %1503 = vst [vmem:[%s381 + $0x20] sm:$0xff] %v1487
        %1504 = vst [vmem:[%s381 + $0x28] sm:$0xff] %v1488
        %1505 = vst [vmem:[%s381 + $0x30] sm:$0xff] %v1489
        %1506 = vst [vmem:[%s381 + $0x38] sm:$0xff] %v1490
        %1507 = vst [vmem:[%s381 + $0x40] sm:$0xff] %v1491
        %1508 = vst [vmem:[%s381 + $0x48] sm:$0xff] %v1492
        %1509 = vst [vmem:[%s381 + $0x50] sm:$0xff] %v1493
        %1510 = vst [vmem:[%s381 + $0x58] sm:$0xff] %v1494
        %1511 = vst [vmem:[%s381 + $0x60] sm:$0xff] %v1495
        %1512 = vst [vmem:[%s381 + $0x68] sm:$0xff] %v1496
        %1513 = vst [vmem:[%s381 + $0x70] sm:$0xff] %v1497
        %1514 = vst [vmem:[%s381 + $0x78] sm:$0xff] %v1498
        %s1515 = smul.u32 32, %s14
        %p1516 = scmp.lt.s32.totalorder %s1515, 63
        %s1517 = scalar_select %p1516, %s1515, 63
        %s1518 = smul.addr %s1517, 4
        %s1519 = scalar_lea.vmem %s3, %s1518
        // Predicated region
        $region56: #{discriminator_forward.5} parent=50 // pred_check
          %p1520 = pneg %p100
        $region57: #{discriminator_forward.5} parent=50 // pred_check_branch
          %1522 = sbr.rel (%p1520) target = $region59
        $region58: #{discriminator_forward.5} parent=50 // pred_region
          %s1523 = smul.u32 32, %s14
        $region59: #{discriminator_forward.5} parent=50 // pred_fallthru
          _
      $region51: #{discriminator_forward.5} parent=5 // pred_fallthru
        _
      %p1524 = scmp.le.s32.totalorder 2, %s9
      // Predicated region
      $region60: #{discriminator_forward.5} parent=5 // pred_check
        %p1525 = pneg %p1524
      $region61: #{discriminator_forward.5} parent=5 // pred_check_branch
        %1527 = sbr.rel (%p1525) target = $region63
      $region62: #{discriminator_forward.5} parent=5 // pred_region
        %s1528 = ssub.s32 %s9, 2
        // Predicated region
        $region64: #{discriminator_forward.5} parent=62 // pred_check
          %p1529 = pneg %p106
        $region65: #{discriminator_forward.5} parent=62 // pred_check_branch
          %1531 = sbr.rel (%p1529) target = $region67
        $region66: #{discriminator_forward.5} parent=62 // pred_region
          %s1532 = smul.u32 32, %s15
          %p1533 = scmp.lt.s32.totalorder %s1532, 63
          %s1534 = scalar_select %p1533, %s1532, 63
          %s1535 = smul.addr %s1534, 4
          %s1536 = scalar_lea.vmem %s3, %s1535
        $region67: #{discriminator_forward.5} parent=62 // pred_fallthru
          _
      $region63: #{discriminator_forward.5} parent=5 // pred_fallthru
        _
    $region6: #{discriminator_forward.5} parent=1 // loop_footer
      %s13 = sadd.s32 1, %s9
    $region7: #{discriminator_forward.5} parent=1 // loop_footer_branch
      %8 = sbr.rel target = $region3
    $region8: #{discriminator_forward.5} parent=1 // loop_exit
      _

// kernel: discriminator_forward.6
$region0: #{discriminator_forward.6}
  #allocation0 [shape = 'u32[]', space=smem, size = 0x4, offset = 0x4, fixed_abs, tag = 'smem constant byte address 0x4 - core index']
  #allocation1 [shape = 'u32[72,128]{1,0:T(1,128)}', space=vmem, size = 0x9000, scoped, tag = 'internal scratch']
  %s0 = inlined_call_operand.vmem [shape: bf16[16,128], index: 0, kind: input, shape index: {}]
  %s1 = inlined_call_operand.vmem [shape: bf16[128,2048], index: 1, kind: input, shape index: {}]
  %s2 = inlined_call_operand.vmem [shape: f32[16,1], index: 2, kind: input, shape index: {}]
  %s3 = inlined_call_operand.vmem [shape: bf16[16,2048], index: 3, kind: output, shape index: {}]
  %s4 = sld [smem:[#allocation0]]
  $region22: #{discriminator_forward.6} parent=0
    _
  %s6 = ssub.s32 1, %s4
  %s7 = scalar_select 0, %s6, %s4
  // Predicated region
  $region2: #{discriminator_forward.6} parent=0 // pred_check
    _
  $region3: #{discriminator_forward.6} parent=0 // pred_check_branch
    %9 = sbr.rel (0) target = $region5
  $region4: #{discriminator_forward.6} parent=0 // pred_region
    _
  $region5: #{discriminator_forward.6} parent=0 // pred_fallthru
    _
  // Predicated region
  $region6: #{discriminator_forward.6} parent=0 // pred_check
    _
  $region7: #{discriminator_forward.6} parent=0 // pred_check_branch
    %11 = sbr.rel (0) target = $region9
  $region8: #{discriminator_forward.6} parent=0 // pred_region
    _
  $region9: #{discriminator_forward.6} parent=0 // pred_fallthru
    _
  // Predicated region
  $region10: #{discriminator_forward.6} parent=0 // pred_check
    _
  $region11: #{discriminator_forward.6} parent=0 // pred_check_branch
    %13 = sbr.rel (0) target = $region13
  $region12: #{discriminator_forward.6} parent=0 // pred_region
    _
  $region13: #{discriminator_forward.6} parent=0 // pred_fallthru
    _
  %v14 = vld [vmem:[%s0] sm:$0xf]
  %v15 = vld [vmem:[%s0 + $0x4] sm:$0xf]
  %v16 = vld [vmem:[%s1] sm:$0xff]
  %v17 = vld [vmem:[%s1 + $0x8] sm:$0xff]
  %v18 = vld [vmem:[%s1 + $0x10] sm:$0xff]
  %v19 = vld [vmem:[%s1 + $0x18] sm:$0xff]
  %v20 = vld [vmem:[%s1 + $0x20] sm:$0xff]
  %v21 = vld [vmem:[%s1 + $0x28] sm:$0xff]
  %v22 = vld [vmem:[%s1 + $0x30] sm:$0xff]
  %v23 = vld [vmem:[%s1 + $0x38] sm:$0xff]
  %v24 = vld [vmem:[%s1 + $0x40] sm:$0xff]
  %v25 = vld [vmem:[%s1 + $0x48] sm:$0xff]
  %v26 = vld [vmem:[%s1 + $0x50] sm:$0xff]
  %v27 = vld [vmem:[%s1 + $0x58] sm:$0xff]
  %v28 = vld [vmem:[%s1 + $0x60] sm:$0xff]
  %v29 = vld [vmem:[%s1 + $0x68] sm:$0xff]
  %v30 = vld [vmem:[%s1 + $0x70] sm:$0xff]
  %v31 = vld [vmem:[%s1 + $0x78] sm:$0xff]
  %v32 = vld [vmem:[%s1 + $0x80] sm:$0xff]
  %v33 = vld [vmem:[%s1 + $0x88] sm:$0xff]
  %v34 = vld [vmem:[%s1 + $0x90] sm:$0xff]
  %v35 = vld [vmem:[%s1 + $0x98] sm:$0xff]
  %v36 = vld [vmem:[%s1 + $0xa0] sm:$0xff]
  %v37 = vld [vmem:[%s1 + $0xa8] sm:$0xff]
  %v38 = vld [vmem:[%s1 + $0xb0] sm:$0xff]
  %v39 = vld [vmem:[%s1 + $0xb8] sm:$0xff]
  %v40 = vld [vmem:[%s1 + $0xc0] sm:$0xff]
  %v41 = vld [vmem:[%s1 + $0xc8] sm:$0xff]
  %v42 = vld [vmem:[%s1 + $0xd0] sm:$0xff]
  %v43 = vld [vmem:[%s1 + $0xd8] sm:$0xff]
  %v44 = vld [vmem:[%s1 + $0xe0] sm:$0xff]
  %v45 = vld [vmem:[%s1 + $0xe8] sm:$0xff]
  %v46 = vld [vmem:[%s1 + $0xf0] sm:$0xff]
  %v47 = vld [vmem:[%s1 + $0xf8] sm:$0xff]
  %v48 = vld [vmem:[%s1 + $0x100] sm:$0xff]
  %v49 = vld [vmem:[%s1 + $0x108] sm:$0xff]
  %v50 = vld [vmem:[%s1 + $0x110] sm:$0xff]
  %v51 = vld [vmem:[%s1 + $0x118] sm:$0xff]
  %v52 = vld [vmem:[%s1 + $0x120] sm:$0xff]
  %v53 = vld [vmem:[%s1 + $0x128] sm:$0xff]
  %v54 = vld [vmem:[%s1 + $0x130] sm:$0xff]
  %v55 = vld [vmem:[%s1 + $0x138] sm:$0xff]
  %v56 = vld [vmem:[%s1 + $0x140] sm:$0xff]
  %v57 = vld [vmem:[%s1 + $0x148] sm:$0xff]
  %v58 = vld [vmem:[%s1 + $0x150] sm:$0xff]
  %v59 = vld [vmem:[%s1 + $0x158] sm:$0xff]
  %v60 = vld [vmem:[%s1 + $0x160] sm:$0xff]
  %v61 = vld [vmem:[%s1 + $0x168] sm:$0xff]
  %v62 = vld [vmem:[%s1 + $0x170] sm:$0xff]
  %v63 = vld [vmem:[%s1 + $0x178] sm:$0xff]
  %v64 = vld [vmem:[%s1 + $0x180] sm:$0xff]
  %v65 = vld [vmem:[%s1 + $0x188] sm:$0xff]
  %v66 = vld [vmem:[%s1 + $0x190] sm:$0xff]
  %v67 = vld [vmem:[%s1 + $0x198] sm:$0xff]
  %v68 = vld [vmem:[%s1 + $0x1a0] sm:$0xff]
  %v69 = vld [vmem:[%s1 + $0x1a8] sm:$0xff]
  %v70 = vld [vmem:[%s1 + $0x1b0] sm:$0xff]
  %v71 = vld [vmem:[%s1 + $0x1b8] sm:$0xff]
  %v72 = vld [vmem:[%s1 + $0x1c0] sm:$0xff]
  %v73 = vld [vmem:[%s1 + $0x1c8] sm:$0xff]
  %v74 = vld [vmem:[%s1 + $0x1d0] sm:$0xff]
  %v75 = vld [vmem:[%s1 + $0x1d8] sm:$0xff]
  %v76 = vld [vmem:[%s1 + $0x1e0] sm:$0xff]
  %v77 = vld [vmem:[%s1 + $0x1e8] sm:$0xff]
  %v78 = vld [vmem:[%s1 + $0x1f0] sm:$0xff]
  %v79 = vld [vmem:[%s1 + $0x1f8] sm:$0xff]
  %v80 = vld [vmem:[%s1 + $0x200] sm:$0xff]
  %v81 = vld [vmem:[%s1 + $0x208] sm:$0xff]
  %v82 = vld [vmem:[%s1 + $0x210] sm:$0xff]
  %v83 = vld [vmem:[%s1 + $0x218] sm:$0xff]
  %v84 = vld [vmem:[%s1 + $0x220] sm:$0xff]
  %v85 = vld [vmem:[%s1 + $0x228] sm:$0xff]
  %v86 = vld [vmem:[%s1 + $0x230] sm:$0xff]
  %v87 = vld [vmem:[%s1 + $0x238] sm:$0xff]
  %v88 = vld [vmem:[%s1 + $0x240] sm:$0xff]
  %v89 = vld [vmem:[%s1 + $0x248] sm:$0xff]
  %v90 = vld [vmem:[%s1 + $0x250] sm:$0xff]
  %v91 = vld [vmem:[%s1 + $0x258] sm:$0xff]
  %v92 = vld [vmem:[%s1 + $0x260] sm:$0xff]
  %v93 = vld [vmem:[%s1 + $0x268] sm:$0xff]
  %v94 = vld [vmem:[%s1 + $0x270] sm:$0xff]
  %v95 = vld [vmem:[%s1 + $0x278] sm:$0xff]
  %v96 = vld [vmem:[%s1 + $0x280] sm:$0xff]
  %v97 = vld [vmem:[%s1 + $0x288] sm:$0xff]
  %v98 = vld [vmem:[%s1 + $0x290] sm:$0xff]
  %v99 = vld [vmem:[%s1 + $0x298] sm:$0xff]
  %v100 = vld [vmem:[%s1 + $0x2a0] sm:$0xff]
  %v101 = vld [vmem:[%s1 + $0x2a8] sm:$0xff]
  %v102 = vld [vmem:[%s1 + $0x2b0] sm:$0xff]
  %v103 = vld [vmem:[%s1 + $0x2b8] sm:$0xff]
  %v104 = vld [vmem:[%s1 + $0x2c0] sm:$0xff]
  %v105 = vld [vmem:[%s1 + $0x2c8] sm:$0xff]
  %v106 = vld [vmem:[%s1 + $0x2d0] sm:$0xff]
  %v107 = vld [vmem:[%s1 + $0x2d8] sm:$0xff]
  %v108 = vld [vmem:[%s1 + $0x2e0] sm:$0xff]
  %v109 = vld [vmem:[%s1 + $0x2e8] sm:$0xff]
  %v110 = vld [vmem:[%s1 + $0x2f0] sm:$0xff]
  %v111 = vld [vmem:[%s1 + $0x2f8] sm:$0xff]
  %v112 = vld [vmem:[%s1 + $0x300] sm:$0xff]
  %v113 = vld [vmem:[%s1 + $0x308] sm:$0xff]
  %v114 = vld [vmem:[%s1 + $0x310] sm:$0xff]
  %v115 = vld [vmem:[%s1 + $0x318] sm:$0xff]
  %v116 = vld [vmem:[%s1 + $0x320] sm:$0xff]
  %v117 = vld [vmem:[%s1 + $0x328] sm:$0xff]
  %v118 = vld [vmem:[%s1 + $0x330] sm:$0xff]
  %v119 = vld [vmem:[%s1 + $0x338] sm:$0xff]
  %v120 = vld [vmem:[%s1 + $0x340] sm:$0xff]
  %v121 = vld [vmem:[%s1 + $0x348] sm:$0xff]
  %v122 = vld [vmem:[%s1 + $0x350] sm:$0xff]
  %v123 = vld [vmem:[%s1 + $0x358] sm:$0xff]
  %v124 = vld [vmem:[%s1 + $0x360] sm:$0xff]
  %v125 = vld [vmem:[%s1 + $0x368] sm:$0xff]
  %v126 = vld [vmem:[%s1 + $0x370] sm:$0xff]
  %v127 = vld [vmem:[%s1 + $0x378] sm:$0xff]
  %v128 = vld [vmem:[%s1 + $0x380] sm:$0xff]
  %v129 = vld [vmem:[%s1 + $0x388] sm:$0xff]
  %v130 = vld [vmem:[%s1 + $0x390] sm:$0xff]
  %v131 = vld [vmem:[%s1 + $0x398] sm:$0xff]
  %v132 = vld [vmem:[%s1 + $0x3a0] sm:$0xff]
  %v133 = vld [vmem:[%s1 + $0x3a8] sm:$0xff]
  %v134 = vld [vmem:[%s1 + $0x3b0] sm:$0xff]
  %v135 = vld [vmem:[%s1 + $0x3b8] sm:$0xff]
  %v136 = vld [vmem:[%s1 + $0x3c0] sm:$0xff]
  %v137 = vld [vmem:[%s1 + $0x3c8] sm:$0xff]
  %v138 = vld [vmem:[%s1 + $0x3d0] sm:$0xff]
  %v139 = vld [vmem:[%s1 + $0x3d8] sm:$0xff]
  %v140 = vld [vmem:[%s1 + $0x3e0] sm:$0xff]
  %v141 = vld [vmem:[%s1 + $0x3e8] sm:$0xff]
  %v142 = vld [vmem:[%s1 + $0x3f0] sm:$0xff]
  %v143 = vld [vmem:[%s1 + $0x3f8] sm:$0xff]
  %v144 = vld [vmem:[%s2] sm:$0xff]
  %v145 = vld [vmem:[%s2 + $0x8] sm:$0xff]
  %147 = vset.pattern.permute.xlu0 0
  %148 = vperm.xlu0 %147, %v144
  %v149 = vpop.permute.xlu0 %148
  %152 = vset.pattern.permute.xlu0 0
  %153 = vperm.xlu0 %152, %v145
  %v154 = vpop.permute.xlu0 %153
  %v158 = vunpack.c.l.b16 %v14
  %v159 = vunpack.c.l.b16 %v15
  %v160 = vpack.c.b16 %v159, %v158
  %v290 = vunpack.c.l.b16 %v16
  %v291 = vunpack.c.h.b16 %v16
  %v292 = vunpack.c.l.b16 %v17
  %v293 = vunpack.c.h.b16 %v17
  %v294 = vunpack.c.l.b16 %v18
  %v295 = vunpack.c.h.b16 %v18
  %v296 = vunpack.c.l.b16 %v19
  %v297 = vunpack.c.h.b16 %v19
  %v298 = vunpack.c.l.b16 %v20
  %v299 = vunpack.c.h.b16 %v20
  %v300 = vunpack.c.l.b16 %v21
  %v301 = vunpack.c.h.b16 %v21
  %v302 = vunpack.c.l.b16 %v22
  %v303 = vunpack.c.h.b16 %v22
  %v304 = vunpack.c.l.b16 %v23
  %v305 = vunpack.c.h.b16 %v23
  %v306 = vunpack.c.l.b16 %v24
  %v307 = vunpack.c.h.b16 %v24
  %v308 = vunpack.c.l.b16 %v25
  %v309 = vunpack.c.h.b16 %v25
  %v310 = vunpack.c.l.b16 %v26
  %v311 = vunpack.c.h.b16 %v26
  %v312 = vunpack.c.l.b16 %v27
  %v313 = vunpack.c.h.b16 %v27
  %v314 = vunpack.c.l.b16 %v28
  %v315 = vunpack.c.h.b16 %v28
  %v316 = vunpack.c.l.b16 %v29
  %v317 = vunpack.c.h.b16 %v29
  %v318 = vunpack.c.l.b16 %v30
  %v319 = vunpack.c.h.b16 %v30
  %v320 = vunpack.c.l.b16 %v31
  %v321 = vunpack.c.h.b16 %v31
  %v322 = vunpack.c.l.b16 %v32
  %v323 = vunpack.c.h.b16 %v32
  %v324 = vunpack.c.l.b16 %v33
  %v325 = vunpack.c.h.b16 %v33
  %v326 = vunpack.c.l.b16 %v34
  %v327 = vunpack.c.h.b16 %v34
  %v328 = vunpack.c.l.b16 %v35
  %v329 = vunpack.c.h.b16 %v35
  %v330 = vunpack.c.l.b16 %v36
  %v331 = vunpack.c.h.b16 %v36
  %v332 = vunpack.c.l.b16 %v37
  %v333 = vunpack.c.h.b16 %v37
  %v334 = vunpack.c.l.b16 %v38
  %v335 = vunpack.c.h.b16 %v38
  %v336 = vunpack.c.l.b16 %v39
  %v337 = vunpack.c.h.b16 %v39
  %v338 = vunpack.c.l.b16 %v40
  %v339 = vunpack.c.h.b16 %v40
  %v340 = vunpack.c.l.b16 %v41
  %v341 = vunpack.c.h.b16 %v41
  %v342 = vunpack.c.l.b16 %v42
  %v343 = vunpack.c.h.b16 %v42
  %v344 = vunpack.c.l.b16 %v43
  %v345 = vunpack.c.h.b16 %v43
  %v346 = vunpack.c.l.b16 %v44
  %v347 = vunpack.c.h.b16 %v44
  %v348 = vunpack.c.l.b16 %v45
  %v349 = vunpack.c.h.b16 %v45
  %v350 = vunpack.c.l.b16 %v46
  %v351 = vunpack.c.h.b16 %v46
  %v352 = vunpack.c.l.b16 %v47
  %v353 = vunpack.c.h.b16 %v47
  %v354 = vunpack.c.l.b16 %v48
  %v355 = vunpack.c.h.b16 %v48
  %v356 = vunpack.c.l.b16 %v49
  %v357 = vunpack.c.h.b16 %v49
  %v358 = vunpack.c.l.b16 %v50
  %v359 = vunpack.c.h.b16 %v50
  %v360 = vunpack.c.l.b16 %v51
  %v361 = vunpack.c.h.b16 %v51
  %v362 = vunpack.c.l.b16 %v52
  %v363 = vunpack.c.h.b16 %v52
  %v364 = vunpack.c.l.b16 %v53
  %v365 = vunpack.c.h.b16 %v53
  %v366 = vunpack.c.l.b16 %v54
  %v367 = vunpack.c.h.b16 %v54
  %v368 = vunpack.c.l.b16 %v55
  %v369 = vunpack.c.h.b16 %v55
  %v370 = vunpack.c.l.b16 %v56
  %v371 = vunpack.c.h.b16 %v56
  %v372 = vunpack.c.l.b16 %v57
  %v373 = vunpack.c.h.b16 %v57
  %v374 = vunpack.c.l.b16 %v58
  %v375 = vunpack.c.h.b16 %v58
  %v376 = vunpack.c.l.b16 %v59
  %v377 = vunpack.c.h.b16 %v59
  %v378 = vunpack.c.l.b16 %v60
  %v379 = vunpack.c.h.b16 %v60
  %v380 = vunpack.c.l.b16 %v61
  %v381 = vunpack.c.h.b16 %v61
  %v382 = vunpack.c.l.b16 %v62
  %v383 = vunpack.c.h.b16 %v62
  %v384 = vunpack.c.l.b16 %v63
  %v385 = vunpack.c.h.b16 %v63
  %v386 = vunpack.c.l.b16 %v64
  %v387 = vunpack.c.h.b16 %v64
  %v388 = vunpack.c.l.b16 %v65
  %v389 = vunpack.c.h.b16 %v65
  %v390 = vunpack.c.l.b16 %v66
  %v391 = vunpack.c.h.b16 %v66
  %v392 = vunpack.c.l.b16 %v67
  %v393 = vunpack.c.h.b16 %v67
  %v394 = vunpack.c.l.b16 %v68
  %v395 = vunpack.c.h.b16 %v68
  %v396 = vunpack.c.l.b16 %v69
  %v397 = vunpack.c.h.b16 %v69
  %v398 = vunpack.c.l.b16 %v70
  %v399 = vunpack.c.h.b16 %v70
  %v400 = vunpack.c.l.b16 %v71
  %v401 = vunpack.c.h.b16 %v71
  %v402 = vunpack.c.l.b16 %v72
  %v403 = vunpack.c.h.b16 %v72
  %v404 = vunpack.c.l.b16 %v73
  %v405 = vunpack.c.h.b16 %v73
  %v406 = vunpack.c.l.b16 %v74
  %v407 = vunpack.c.h.b16 %v74
  %v408 = vunpack.c.l.b16 %v75
  %v409 = vunpack.c.h.b16 %v75
  %v410 = vunpack.c.l.b16 %v76
  %v411 = vunpack.c.h.b16 %v76
  %v412 = vunpack.c.l.b16 %v77
  %v413 = vunpack.c.h.b16 %v77
  %v414 = vunpack.c.l.b16 %v78
  %v415 = vunpack.c.h.b16 %v78
  %v416 = vunpack.c.l.b16 %v79
  %v417 = vunpack.c.h.b16 %v79
  %v418 = vunpack.c.l.b16 %v80
  %v419 = vunpack.c.h.b16 %v80
  %v420 = vunpack.c.l.b16 %v81
  %v421 = vunpack.c.h.b16 %v81
  %v422 = vunpack.c.l.b16 %v82
  %v423 = vunpack.c.h.b16 %v82
  %v424 = vunpack.c.l.b16 %v83
  %v425 = vunpack.c.h.b16 %v83
  %v426 = vunpack.c.l.b16 %v84
  %v427 = vunpack.c.h.b16 %v84
  %v428 = vunpack.c.l.b16 %v85
  %v429 = vunpack.c.h.b16 %v85
  %v430 = vunpack.c.l.b16 %v86
  %v431 = vunpack.c.h.b16 %v86
  %v432 = vunpack.c.l.b16 %v87
  %v433 = vunpack.c.h.b16 %v87
  %v434 = vunpack.c.l.b16 %v88
  %v435 = vunpack.c.h.b16 %v88
  %v436 = vunpack.c.l.b16 %v89
  %v437 = vunpack.c.h.b16 %v89
  %v438 = vunpack.c.l.b16 %v90
  %v439 = vunpack.c.h.b16 %v90
  %v440 = vunpack.c.l.b16 %v91
  %v441 = vunpack.c.h.b16 %v91
  %v442 = vunpack.c.l.b16 %v92
  %v443 = vunpack.c.h.b16 %v92
  %v444 = vunpack.c.l.b16 %v93
  %v445 = vunpack.c.h.b16 %v93
  %v446 = vunpack.c.l.b16 %v94
  %v447 = vunpack.c.h.b16 %v94
  %v448 = vunpack.c.l.b16 %v95
  %v449 = vunpack.c.h.b16 %v95
  %v450 = vunpack.c.l.b16 %v96
  %v451 = vunpack.c.h.b16 %v96
  %v452 = vunpack.c.l.b16 %v97
  %v453 = vunpack.c.h.b16 %v97
  %v454 = vunpack.c.l.b16 %v98
  %v455 = vunpack.c.h.b16 %v98
  %v456 = vunpack.c.l.b16 %v99
  %v457 = vunpack.c.h.b16 %v99
  %v458 = vunpack.c.l.b16 %v100
  %v459 = vunpack.c.h.b16 %v100
  %v460 = vunpack.c.l.b16 %v101
  %v461 = vunpack.c.h.b16 %v101
  %v462 = vunpack.c.l.b16 %v102
  %v463 = vunpack.c.h.b16 %v102
  %v464 = vunpack.c.l.b16 %v103
  %v465 = vunpack.c.h.b16 %v103
  %v466 = vunpack.c.l.b16 %v104
  %v467 = vunpack.c.h.b16 %v104
  %v468 = vunpack.c.l.b16 %v105
  %v469 = vunpack.c.h.b16 %v105
  %v470 = vunpack.c.l.b16 %v106
  %v471 = vunpack.c.h.b16 %v106
  %v472 = vunpack.c.l.b16 %v107
  %v473 = vunpack.c.h.b16 %v107
  %v474 = vunpack.c.l.b16 %v108
  %v475 = vunpack.c.h.b16 %v108
  %v476 = vunpack.c.l.b16 %v109
  %v477 = vunpack.c.h.b16 %v109
  %v478 = vunpack.c.l.b16 %v110
  %v479 = vunpack.c.h.b16 %v110
  %v480 = vunpack.c.l.b16 %v111
  %v481 = vunpack.c.h.b16 %v111
  %v482 = vunpack.c.l.b16 %v112
  %v483 = vunpack.c.h.b16 %v112
  %v484 = vunpack.c.l.b16 %v113
  %v485 = vunpack.c.h.b16 %v113
  %v486 = vunpack.c.l.b16 %v114
  %v487 = vunpack.c.h.b16 %v114
  %v488 = vunpack.c.l.b16 %v115
  %v489 = vunpack.c.h.b16 %v115
  %v490 = vunpack.c.l.b16 %v116
  %v491 = vunpack.c.h.b16 %v116
  %v492 = vunpack.c.l.b16 %v117
  %v493 = vunpack.c.h.b16 %v117
  %v494 = vunpack.c.l.b16 %v118
  %v495 = vunpack.c.h.b16 %v118
  %v496 = vunpack.c.l.b16 %v119
  %v497 = vunpack.c.h.b16 %v119
  %v498 = vunpack.c.l.b16 %v120
  %v499 = vunpack.c.h.b16 %v120
  %v500 = vunpack.c.l.b16 %v121
  %v501 = vunpack.c.h.b16 %v121
  %v502 = vunpack.c.l.b16 %v122
  %v503 = vunpack.c.h.b16 %v122
  %v504 = vunpack.c.l.b16 %v123
  %v505 = vunpack.c.h.b16 %v123
  %v506 = vunpack.c.l.b16 %v124
  %v507 = vunpack.c.h.b16 %v124
  %v508 = vunpack.c.l.b16 %v125
  %v509 = vunpack.c.h.b16 %v125
  %v510 = vunpack.c.l.b16 %v126
  %v511 = vunpack.c.h.b16 %v126
  %v512 = vunpack.c.l.b16 %v127
  %v513 = vunpack.c.h.b16 %v127
  %v514 = vunpack.c.l.b16 %v128
  %v515 = vunpack.c.h.b16 %v128
  %v516 = vunpack.c.l.b16 %v129
  %v517 = vunpack.c.h.b16 %v129
  %v518 = vunpack.c.l.b16 %v130
  %v519 = vunpack.c.h.b16 %v130
  %v520 = vunpack.c.l.b16 %v131
  %v521 = vunpack.c.h.b16 %v131
  %v522 = vunpack.c.l.b16 %v132
  %v523 = vunpack.c.h.b16 %v132
  %v524 = vunpack.c.l.b16 %v133
  %v525 = vunpack.c.h.b16 %v133
  %v526 = vunpack.c.l.b16 %v134
  %v527 = vunpack.c.h.b16 %v134
  %v528 = vunpack.c.l.b16 %v135
  %v529 = vunpack.c.h.b16 %v135
  %v530 = vunpack.c.l.b16 %v136
  %v531 = vunpack.c.h.b16 %v136
  %v532 = vunpack.c.l.b16 %v137
  %v533 = vunpack.c.h.b16 %v137
  %v534 = vunpack.c.l.b16 %v138
  %v535 = vunpack.c.h.b16 %v138
  %v536 = vunpack.c.l.b16 %v139
  %v537 = vunpack.c.h.b16 %v139
  %v538 = vunpack.c.l.b16 %v140
  %v539 = vunpack.c.h.b16 %v140
  %v540 = vunpack.c.l.b16 %v141
  %v541 = vunpack.c.h.b16 %v141
  %v542 = vunpack.c.l.b16 %v142
  %v543 = vunpack.c.h.b16 %v142
  %v544 = vunpack.c.l.b16 %v143
  %v545 = vunpack.c.h.b16 %v143
  %v546 = vpack.c.b16 %v306, %v290
  %v547 = vpack.c.b16 %v307, %v291
  %v548 = vpack.c.b16 %v308, %v292
  %v549 = vpack.c.b16 %v309, %v293
  %v550 = vpack.c.b16 %v310, %v294
  %v551 = vpack.c.b16 %v311, %v295
  %v552 = vpack.c.b16 %v312, %v296
  %v553 = vpack.c.b16 %v313, %v297
  %v554 = vpack.c.b16 %v314, %v298
  %v555 = vpack.c.b16 %v315, %v299
  %v556 = vpack.c.b16 %v316, %v300
  %v557 = vpack.c.b16 %v317, %v301
  %v558 = vpack.c.b16 %v318, %v302
  %v559 = vpack.c.b16 %v319, %v303
  %v560 = vpack.c.b16 %v320, %v304
  %v561 = vpack.c.b16 %v321, %v305
  %v562 = vpack.c.b16 %v338, %v322
  %v563 = vpack.c.b16 %v339, %v323
  %v564 = vpack.c.b16 %v340, %v324
  %v565 = vpack.c.b16 %v341, %v325
  %v566 = vpack.c.b16 %v342, %v326
  %v567 = vpack.c.b16 %v343, %v327
  %v568 = vpack.c.b16 %v344, %v328
  %v569 = vpack.c.b16 %v345, %v329
  %v570 = vpack.c.b16 %v346, %v330
  %v571 = vpack.c.b16 %v347, %v331
  %v572 = vpack.c.b16 %v348, %v332
  %v573 = vpack.c.b16 %v349, %v333
  %v574 = vpack.c.b16 %v350, %v334
  %v575 = vpack.c.b16 %v351, %v335
  %v576 = vpack.c.b16 %v352, %v336
  %v577 = vpack.c.b16 %v353, %v337
  %v578 = vpack.c.b16 %v370, %v354
  %v579 = vpack.c.b16 %v371, %v355
  %v580 = vpack.c.b16 %v372, %v356
  %v581 = vpack.c.b16 %v373, %v357
  %v582 = vpack.c.b16 %v374, %v358
  %v583 = vpack.c.b16 %v375, %v359
  %v584 = vpack.c.b16 %v376, %v360
  %v585 = vpack.c.b16 %v377, %v361
  %v586 = vpack.c.b16 %v378, %v362
  %v587 = vpack.c.b16 %v379, %v363
  %v588 = vpack.c.b16 %v380, %v364
  %v589 = vpack.c.b16 %v381, %v365
  %v590 = vpack.c.b16 %v382, %v366
  %v591 = vpack.c.b16 %v383, %v367
  %v592 = vpack.c.b16 %v384, %v368
  %v593 = vpack.c.b16 %v385, %v369
  %v594 = vpack.c.b16 %v402, %v386
  %v595 = vpack.c.b16 %v403, %v387
  %v596 = vpack.c.b16 %v404, %v388
  %v597 = vpack.c.b16 %v405, %v389
  %v598 = vpack.c.b16 %v406, %v390
  %v599 = vpack.c.b16 %v407, %v391
  %v600 = vpack.c.b16 %v408, %v392
  %v601 = vpack.c.b16 %v409, %v393
  %v602 = vpack.c.b16 %v410, %v394
  %v603 = vpack.c.b16 %v411, %v395
  %v604 = vpack.c.b16 %v412, %v396
  %v605 = vpack.c.b16 %v413, %v397
  %v606 = vpack.c.b16 %v414, %v398
  %v607 = vpack.c.b16 %v415, %v399
  %v608 = vpack.c.b16 %v416, %v400
  %v609 = vpack.c.b16 %v417, %v401
  %v610 = vpack.c.b16 %v434, %v418
  %v611 = vpack.c.b16 %v435, %v419
  %v612 = vpack.c.b16 %v436, %v420
  %v613 = vpack.c.b16 %v437, %v421
  %v614 = vpack.c.b16 %v438, %v422
  %v615 = vpack.c.b16 %v439, %v423
  %v616 = vpack.c.b16 %v440, %v424
  %v617 = vpack.c.b16 %v441, %v425
  %v618 = vpack.c.b16 %v442, %v426
  %v619 = vpack.c.b16 %v443, %v427
  %v620 = vpack.c.b16 %v444, %v428
  %v621 = vpack.c.b16 %v445, %v429
  %v622 = vpack.c.b16 %v446, %v430
  %v623 = vpack.c.b16 %v447, %v431
  %v624 = vpack.c.b16 %v448, %v432
  %v625 = vpack.c.b16 %v449, %v433
  %v626 = vpack.c.b16 %v466, %v450
  %v627 = vpack.c.b16 %v467, %v451
  %v628 = vpack.c.b16 %v468, %v452
  %v629 = vpack.c.b16 %v469, %v453
  %v630 = vpack.c.b16 %v470, %v454
  %v631 = vpack.c.b16 %v471, %v455
  %v632 = vpack.c.b16 %v472, %v456
  %v633 = vpack.c.b16 %v473, %v457
  %v634 = vpack.c.b16 %v474, %v458
  %v635 = vpack.c.b16 %v475, %v459
  %v636 = vpack.c.b16 %v476, %v460
  %v637 = vpack.c.b16 %v477, %v461
  %v638 = vpack.c.b16 %v478, %v462
  %v639 = vpack.c.b16 %v479, %v463
  %v640 = vpack.c.b16 %v480, %v464
  %v641 = vpack.c.b16 %v481, %v465
  %v642 = vpack.c.b16 %v498, %v482
  %v643 = vpack.c.b16 %v499, %v483
  %v644 = vpack.c.b16 %v500, %v484
  %v645 = vpack.c.b16 %v501, %v485
  %v646 = vpack.c.b16 %v502, %v486
  %v647 = vpack.c.b16 %v503, %v487
  %v648 = vpack.c.b16 %v504, %v488
  %v649 = vpack.c.b16 %v505, %v489
  %v650 = vpack.c.b16 %v506, %v490
  %v651 = vpack.c.b16 %v507, %v491
  %v652 = vpack.c.b16 %v508, %v492
  %v653 = vpack.c.b16 %v509, %v493
  %v654 = vpack.c.b16 %v510, %v494
  %v655 = vpack.c.b16 %v511, %v495
  %v656 = vpack.c.b16 %v512, %v496
  %v657 = vpack.c.b16 %v513, %v497
  %v658 = vpack.c.b16 %v530, %v514
  %v659 = vpack.c.b16 %v531, %v515
  %v660 = vpack.c.b16 %v532, %v516
  %v661 = vpack.c.b16 %v533, %v517
  %v662 = vpack.c.b16 %v534, %v518
  %v663 = vpack.c.b16 %v535, %v519
  %v664 = vpack.c.b16 %v536, %v520
  %v665 = vpack.c.b16 %v537, %v521
  %v666 = vpack.c.b16 %v538, %v522
  %v667 = vpack.c.b16 %v539, %v523
  %v668 = vpack.c.b16 %v540, %v524
  %v669 = vpack.c.b16 %v541, %v525
  %v670 = vpack.c.b16 %v542, %v526
  %v671 = vpack.c.b16 %v543, %v527
  %v672 = vpack.c.b16 %v544, %v528
  %v673 = vpack.c.b16 %v545, %v529
  %802 = vmatpush.bf16.msra.mxu0 %v658
  %803 = vmatpush.bf16.msra.mxu0 %v642
  %804 = vmatpush.bf16.msra.mxu0 %v626
  %805 = vmatpush.bf16.msra.mxu0 %v610
  %806 = vmatpush.bf16.msra.mxu0 %v594
  %807 = vmatpush.bf16.msra.mxu0 %v578
  %808 = vmatpush.bf16.msra.mxu0 %v562
  %809 = vmatpush.bf16.msra.mxu0 %v546
  %810 = vmatmul.bf16.gmra.mxu0 %v160
  %v811 = vpop.f32.mrf.mxu0
  %v812 = vadd.f32 %v149, %v811
  %v813 = vpop.f32.mrf.mxu0
  %v814 = vadd.f32 %v154, %v813
  %815 = vdwg.mxu0
  %816 = vmatpush.bf16.msra.mxu0 %v659
  %817 = vmatpush.bf16.msra.mxu0 %v643
  %818 = vmatpush.bf16.msra.mxu0 %v627
  %819 = vmatpush.bf16.msra.mxu0 %v611
  %820 = vmatpush.bf16.msra.mxu0 %v595
  %821 = vmatpush.bf16.msra.mxu0 %v579
  %822 = vmatpush.bf16.msra.mxu0 %v563
  %823 = vmatpush.bf16.msra.mxu0 %v547
  %824 = vmatmul.bf16.gmra.mxu0 %v160
  %v825 = vpop.f32.mrf.mxu0
  %v826 = vadd.f32 %v149, %v825
  %v827 = vpop.f32.mrf.mxu0
  %v828 = vadd.f32 %v154, %v827
  %829 = vdwg.mxu0
  %830 = vmatpush.bf16.msra.mxu0 %v660
  %831 = vmatpush.bf16.msra.mxu0 %v644
  %832 = vmatpush.bf16.msra.mxu0 %v628
  %833 = vmatpush.bf16.msra.mxu0 %v612
  %834 = vmatpush.bf16.msra.mxu0 %v596
  %835 = vmatpush.bf16.msra.mxu0 %v580
  %836 = vmatpush.bf16.msra.mxu0 %v564
  %837 = vmatpush.bf16.msra.mxu0 %v548
  %838 = vmatmul.bf16.gmra.mxu0 %v160
  %v839 = vpop.f32.mrf.mxu0
  %v840 = vadd.f32 %v149, %v839
  %v841 = vpop.f32.mrf.mxu0
  %v842 = vadd.f32 %v154, %v841
  %843 = vdwg.mxu0
  %844 = vmatpush.bf16.msra.mxu0 %v661
  %845 = vmatpush.bf16.msra.mxu0 %v645
  %846 = vmatpush.bf16.msra.mxu0 %v629
  %847 = vmatpush.bf16.msra.mxu0 %v613
  %848 = vmatpush.bf16.msra.mxu0 %v597
  %849 = vmatpush.bf16.msra.mxu0 %v581
  %850 = vmatpush.bf16.msra.mxu0 %v565
  %851 = vmatpush.bf16.msra.mxu0 %v549
  %852 = vmatmul.bf16.gmra.mxu0 %v160
  %v853 = vpop.f32.mrf.mxu0
  %v854 = vadd.f32 %v149, %v853
  %v855 = vpop.f32.mrf.mxu0
  %v856 = vadd.f32 %v154, %v855
  %857 = vdwg.mxu0
  %858 = vmatpush.bf16.msra.mxu0 %v662
  %859 = vmatpush.bf16.msra.mxu0 %v646
  %860 = vmatpush.bf16.msra.mxu0 %v630
  %861 = vmatpush.bf16.msra.mxu0 %v614
  %862 = vmatpush.bf16.msra.mxu0 %v598
  %863 = vmatpush.bf16.msra.mxu0 %v582
  %864 = vmatpush.bf16.msra.mxu0 %v566
  %865 = vmatpush.bf16.msra.mxu0 %v550
  %866 = vmatmul.bf16.gmra.mxu0 %v160
  %v867 = vpop.f32.mrf.mxu0
  %v868 = vadd.f32 %v149, %v867
  %v869 = vpop.f32.mrf.mxu0
  %v870 = vadd.f32 %v154, %v869
  %871 = vdwg.mxu0
  %872 = vmatpush.bf16.msra.mxu0 %v663
  %873 = vmatpush.bf16.msra.mxu0 %v647
  %874 = vmatpush.bf16.msra.mxu0 %v631
  %875 = vmatpush.bf16.msra.mxu0 %v615
  %876 = vmatpush.bf16.msra.mxu0 %v599
  %877 = vmatpush.bf16.msra.mxu0 %v583
  %878 = vmatpush.bf16.msra.mxu0 %v567
  %879 = vmatpush.bf16.msra.mxu0 %v551
  %880 = vmatmul.bf16.gmra.mxu0 %v160
  %v881 = vpop.f32.mrf.mxu0
  %v882 = vadd.f32 %v149, %v881
  %v883 = vpop.f32.mrf.mxu0
  %v884 = vadd.f32 %v154, %v883
  %885 = vdwg.mxu0
  %886 = vmatpush.bf16.msra.mxu0 %v664
  %887 = vmatpush.bf16.msra.mxu0 %v648
  %888 = vmatpush.bf16.msra.mxu0 %v632
  %889 = vmatpush.bf16.msra.mxu0 %v616
  %890 = vmatpush.bf16.msra.mxu0 %v600
  %891 = vmatpush.bf16.msra.mxu0 %v584
  %892 = vmatpush.bf16.msra.mxu0 %v568
  %893 = vmatpush.bf16.msra.mxu0 %v552
  %894 = vmatmul.bf16.gmra.mxu0 %v160
  %v895 = vpop.f32.mrf.mxu0
  %v896 = vadd.f32 %v149, %v895
  %v897 = vpop.f32.mrf.mxu0
  %v898 = vadd.f32 %v154, %v897
  %899 = vdwg.mxu0
  %900 = vmatpush.bf16.msra.mxu0 %v665
  %901 = vmatpush.bf16.msra.mxu0 %v649
  %902 = vmatpush.bf16.msra.mxu0 %v633
  %903 = vmatpush.bf16.msra.mxu0 %v617
  %904 = vmatpush.bf16.msra.mxu0 %v601
  %905 = vmatpush.bf16.msra.mxu0 %v585
  %906 = vmatpush.bf16.msra.mxu0 %v569
  %907 = vmatpush.bf16.msra.mxu0 %v553
  %908 = vmatmul.bf16.gmra.mxu0 %v160
  %v909 = vpop.f32.mrf.mxu0
  %v910 = vadd.f32 %v149, %v909
  %v911 = vpop.f32.mrf.mxu0
  %v912 = vadd.f32 %v154, %v911
  %913 = vdwg.mxu0
  %914 = vmatpush.bf16.msra.mxu0 %v666
  %915 = vmatpush.bf16.msra.mxu0 %v650
  %916 = vmatpush.bf16.msra.mxu0 %v634
  %917 = vmatpush.bf16.msra.mxu0 %v618
  %918 = vmatpush.bf16.msra.mxu0 %v602
  %919 = vmatpush.bf16.msra.mxu0 %v586
  %920 = vmatpush.bf16.msra.mxu0 %v570
  %921 = vmatpush.bf16.msra.mxu0 %v554
  %922 = vmatmul.bf16.gmra.mxu0 %v160
  %v923 = vpop.f32.mrf.mxu0
  %v924 = vadd.f32 %v149, %v923
  %v925 = vpop.f32.mrf.mxu0
  %v926 = vadd.f32 %v154, %v925
  %927 = vdwg.mxu0
  %928 = vmatpush.bf16.msra.mxu0 %v667
  %929 = vmatpush.bf16.msra.mxu0 %v651
  %930 = vmatpush.bf16.msra.mxu0 %v635
  %931 = vmatpush.bf16.msra.mxu0 %v619
  %932 = vmatpush.bf16.msra.mxu0 %v603
  %933 = vmatpush.bf16.msra.mxu0 %v587
  %934 = vmatpush.bf16.msra.mxu0 %v571
  %935 = vmatpush.bf16.msra.mxu0 %v555
  %936 = vmatmul.bf16.gmra.mxu0 %v160
  %v937 = vpop.f32.mrf.mxu0
  %v938 = vadd.f32 %v149, %v937
  %v939 = vpop.f32.mrf.mxu0
  %v940 = vadd.f32 %v154, %v939
  %941 = vdwg.mxu0
  %942 = vmatpush.bf16.msra.mxu0 %v668
  %943 = vmatpush.bf16.msra.mxu0 %v652
  %944 = vmatpush.bf16.msra.mxu0 %v636
  %945 = vmatpush.bf16.msra.mxu0 %v620
  %946 = vmatpush.bf16.msra.mxu0 %v604
  %947 = vmatpush.bf16.msra.mxu0 %v588
  %948 = vmatpush.bf16.msra.mxu0 %v572
  %949 = vmatpush.bf16.msra.mxu0 %v556
  %950 = vmatmul.bf16.gmra.mxu0 %v160
  %v951 = vpop.f32.mrf.mxu0
  %v952 = vadd.f32 %v149, %v951
  %v953 = vpop.f32.mrf.mxu0
  %v954 = vadd.f32 %v154, %v953
  %955 = vdwg.mxu0
  %956 = vmatpush.bf16.msra.mxu0 %v669
  %957 = vmatpush.bf16.msra.mxu0 %v653
  %958 = vmatpush.bf16.msra.mxu0 %v637
  %959 = vmatpush.bf16.msra.mxu0 %v621
  %960 = vmatpush.bf16.msra.mxu0 %v605
  %961 = vmatpush.bf16.msra.mxu0 %v589
  %962 = vmatpush.bf16.msra.mxu0 %v573
  %963 = vmatpush.bf16.msra.mxu0 %v557
  %964 = vmatmul.bf16.gmra.mxu0 %v160
  %v965 = vpop.f32.mrf.mxu0
  %v966 = vadd.f32 %v149, %v965
  %v967 = vpop.f32.mrf.mxu0
  %v968 = vadd.f32 %v154, %v967
  %969 = vdwg.mxu0
  %970 = vmatpush.bf16.msra.mxu0 %v670
  %971 = vmatpush.bf16.msra.mxu0 %v654
  %972 = vmatpush.bf16.msra.mxu0 %v638
  %973 = vmatpush.bf16.msra.mxu0 %v622
  %974 = vmatpush.bf16.msra.mxu0 %v606
  %975 = vmatpush.bf16.msra.mxu0 %v590
  %976 = vmatpush.bf16.msra.mxu0 %v574
  %977 = vmatpush.bf16.msra.mxu0 %v558
  %978 = vmatmul.bf16.gmra.mxu0 %v160
  %v979 = vpop.f32.mrf.mxu0
  %v980 = vadd.f32 %v149, %v979
  %v981 = vpop.f32.mrf.mxu0
  %v982 = vadd.f32 %v154, %v981
  %983 = vdwg.mxu0
  %984 = vmatpush.bf16.msra.mxu0 %v671
  %985 = vmatpush.bf16.msra.mxu0 %v655
  %986 = vmatpush.bf16.msra.mxu0 %v639
  %987 = vmatpush.bf16.msra.mxu0 %v623
  %988 = vmatpush.bf16.msra.mxu0 %v607
  %989 = vmatpush.bf16.msra.mxu0 %v591
  %990 = vmatpush.bf16.msra.mxu0 %v575
  %991 = vmatpush.bf16.msra.mxu0 %v559
  %992 = vmatmul.bf16.gmra.mxu0 %v160
  %v993 = vpop.f32.mrf.mxu0
  %v994 = vadd.f32 %v149, %v993
  %v995 = vpop.f32.mrf.mxu0
  %v996 = vadd.f32 %v154, %v995
  %997 = vdwg.mxu0
  %998 = vmatpush.bf16.msra.mxu0 %v672
  %999 = vmatpush.bf16.msra.mxu0 %v656
  %1000 = vmatpush.bf16.msra.mxu0 %v640
  %1001 = vmatpush.bf16.msra.mxu0 %v624
  %1002 = vmatpush.bf16.msra.mxu0 %v608
  %1003 = vmatpush.bf16.msra.mxu0 %v592
  %1004 = vmatpush.bf16.msra.mxu0 %v576
  %1005 = vmatpush.bf16.msra.mxu0 %v560
  %1006 = vmatmul.bf16.gmra.mxu0 %v160
  %v1007 = vpop.f32.mrf.mxu0
  %v1008 = vadd.f32 %v149, %v1007
  %v1009 = vpop.f32.mrf.mxu0
  %v1010 = vadd.f32 %v154, %v1009
  %1011 = vdwg.mxu0
  %1012 = vmatpush.bf16.msra.mxu0 %v673
  %1013 = vmatpush.bf16.msra.mxu0 %v657
  %1014 = vmatpush.bf16.msra.mxu0 %v641
  %1015 = vmatpush.bf16.msra.mxu0 %v625
  %1016 = vmatpush.bf16.msra.mxu0 %v609
  %1017 = vmatpush.bf16.msra.mxu0 %v593
  %1018 = vmatpush.bf16.msra.mxu0 %v577
  %1019 = vmatpush.bf16.msra.mxu0 %v561
  %1020 = vmatmul.bf16.gmra.mxu0 %v160
  %v1021 = vpop.f32.mrf.mxu0
  %v1022 = vadd.f32 %v149, %v1021
  %v1023 = vpop.f32.mrf.mxu0
  %v1024 = vadd.f32 %v154, %v1023
  %1025 = vdwg.mxu0
  %vm1026 = vcmp.gt.f32.partialorder %v812, 0.0
  %vm1027 = vcmp.gt.f32.partialorder %v826, 0.0
  %vm1028 = vcmp.gt.f32.partialorder %v840, 0.0
  %vm1029 = vcmp.gt.f32.partialorder %v854, 0.0
  %vm1030 = vcmp.gt.f32.partialorder %v868, 0.0
  %vm1031 = vcmp.gt.f32.partialorder %v882, 0.0
  %vm1032 = vcmp.gt.f32.partialorder %v896, 0.0
  %vm1033 = vcmp.gt.f32.partialorder %v910, 0.0
  %vm1034 = vcmp.gt.f32.partialorder %v924, 0.0
  %vm1035 = vcmp.gt.f32.partialorder %v938, 0.0
  %vm1036 = vcmp.gt.f32.partialorder %v952, 0.0
  %vm1037 = vcmp.gt.f32.partialorder %v966, 0.0
  %vm1038 = vcmp.gt.f32.partialorder %v980, 0.0
  %vm1039 = vcmp.gt.f32.partialorder %v994, 0.0
  %vm1040 = vcmp.gt.f32.partialorder %v1008, 0.0
  %vm1041 = vcmp.gt.f32.partialorder %v1022, 0.0
  %vm1042 = vcmp.gt.f32.partialorder %v814, 0.0
  %vm1043 = vcmp.gt.f32.partialorder %v828, 0.0
  %vm1044 = vcmp.gt.f32.partialorder %v842, 0.0
  %vm1045 = vcmp.gt.f32.partialorder %v856, 0.0
  %vm1046 = vcmp.gt.f32.partialorder %v870, 0.0
  %vm1047 = vcmp.gt.f32.partialorder %v884, 0.0
  %vm1048 = vcmp.gt.f32.partialorder %v898, 0.0
  %vm1049 = vcmp.gt.f32.partialorder %v912, 0.0
  %vm1050 = vcmp.gt.f32.partialorder %v926, 0.0
  %vm1051 = vcmp.gt.f32.partialorder %v940, 0.0
  %vm1052 = vcmp.gt.f32.partialorder %v954, 0.0
  %vm1053 = vcmp.gt.f32.partialorder %v968, 0.0
  %vm1054 = vcmp.gt.f32.partialorder %v982, 0.0
  %vm1055 = vcmp.gt.f32.partialorder %v996, 0.0
  %vm1056 = vcmp.gt.f32.partialorder %v1010, 0.0
  %vm1057 = vcmp.gt.f32.partialorder %v1024, 0.0
  %v1058 = vmul.f32 %v812, 0.2
  %v1059 = vmul.f32 %v826, 0.2
  %v1060 = vmul.f32 %v840, 0.2
  %v1061 = vmul.f32 %v854, 0.2
  %v1062 = vmul.f32 %v868, 0.2
  %v1063 = vmul.f32 %v882, 0.2
  %v1064 = vmul.f32 %v896, 0.2
  %v1065 = vmul.f32 %v910, 0.2
  %v1066 = vmul.f32 %v924, 0.2
  %v1067 = vmul.f32 %v938, 0.2
  %v1068 = vmul.f32 %v952, 0.2
  %v1069 = vmul.f32 %v966, 0.2
  %v1070 = vmul.f32 %v980, 0.2
  %v1071 = vmul.f32 %v994, 0.2
  %v1072 = vmul.f32 %v1008, 0.2
  %v1073 = vmul.f32 %v1022, 0.2
  %v1074 = vmul.f32 %v814, 0.2
  %v1075 = vmul.f32 %v828, 0.2
  %v1076 = vmul.f32 %v842, 0.2
  %v1077 = vmul.f32 %v856, 0.2
  %v1078 = vmul.f32 %v870, 0.2
  %v1079 = vmul.f32 %v884, 0.2
  %v1080 = vmul.f32 %v898, 0.2
  %v1081 = vmul.f32 %v912, 0.2
  %v1082 = vmul.f32 %v926, 0.2
  %v1083 = vmul.f32 %v940, 0.2
  %v1084 = vmul.f32 %v954, 0.2
  %v1085 = vmul.f32 %v968, 0.2
  %v1086 = vmul.f32 %v982, 0.2
  %v1087 = vmul.f32 %v996, 0.2
  %v1088 = vmul.f32 %v1010, 0.2
  %v1089 = vmul.f32 %v1024, 0.2
  %v1090 = vsel %vm1026, %v812, %v1058
  %v1091 = vsel %vm1027, %v826, %v1059
  %v1092 = vsel %vm1028, %v840, %v1060
  %v1093 = vsel %vm1029, %v854, %v1061
  %v1094 = vsel %vm1030, %v868, %v1062
  %v1095 = vsel %vm1031, %v882, %v1063
  %v1096 = vsel %vm1032, %v896, %v1064
  %v1097 = vsel %vm1033, %v910, %v1065
  %v1098 = vsel %vm1034, %v924, %v1066
  %v1099 = vsel %vm1035, %v938, %v1067
  %v1100 = vsel %vm1036, %v952, %v1068
  %v1101 = vsel %vm1037, %v966, %v1069
  %v1102 = vsel %vm1038, %v980, %v1070
  %v1103 = vsel %vm1039, %v994, %v1071
  %v1104 = vsel %vm1040, %v1008, %v1072
  %v1105 = vsel %vm1041, %v1022, %v1073
  %v1106 = vsel %vm1042, %v814, %v1074
  %v1107 = vsel %vm1043, %v828, %v1075
  %v1108 = vsel %vm1044, %v842, %v1076
  %v1109 = vsel %vm1045, %v856, %v1077
  %v1110 = vsel %vm1046, %v870, %v1078
  %v1111 = vsel %vm1047, %v884, %v1079
  %v1112 = vsel %vm1048, %v898, %v1080
  %v1113 = vsel %vm1049, %v912, %v1081
  %v1114 = vsel %vm1050, %v926, %v1082
  %v1115 = vsel %vm1051, %v940, %v1083
  %v1116 = vsel %vm1052, %v954, %v1084
  %v1117 = vsel %vm1053, %v968, %v1085
  %v1118 = vsel %vm1054, %v982, %v1086
  %v1119 = vsel %vm1055, %v996, %v1087
  %v1120 = vsel %vm1056, %v1010, %v1088
  %v1121 = vsel %vm1057, %v1024, %v1089
  %v1122 = vpack.c.bf16 %v1091, %v1090
  %v1123 = vpack.c.bf16 %v1093, %v1092
  %v1124 = vpack.c.bf16 %v1095, %v1094
  %v1125 = vpack.c.bf16 %v1097, %v1096
  %v1126 = vpack.c.bf16 %v1099, %v1098
  %v1127 = vpack.c.bf16 %v1101, %v1100
  %v1128 = vpack.c.bf16 %v1103, %v1102
  %v1129 = vpack.c.bf16 %v1105, %v1104
  %v1130 = vpack.c.bf16 %v1107, %v1106
  %v1131 = vpack.c.bf16 %v1109, %v1108
  %v1132 = vpack.c.bf16 %v1111, %v1110
  %v1133 = vpack.c.bf16 %v1113, %v1112
  %v1134 = vpack.c.bf16 %v1115, %v1114
  %v1135 = vpack.c.bf16 %v1117, %v1116
  %v1136 = vpack.c.bf16 %v1119, %v1118
  %v1137 = vpack.c.bf16 %v1121, %v1120
  %1138 = vst [vmem:[%s3] sm:$0xff] %v1122
  %1139 = vst [vmem:[%s3 + $0x8] sm:$0xff] %v1123
  %1140 = vst [vmem:[%s3 + $0x10] sm:$0xff] %v1124
  %1141 = vst [vmem:[%s3 + $0x18] sm:$0xff] %v1125
  %1142 = vst [vmem:[%s3 + $0x20] sm:$0xff] %v1126
  %1143 = vst [vmem:[%s3 + $0x28] sm:$0xff] %v1127
  %1144 = vst [vmem:[%s3 + $0x30] sm:$0xff] %v1128
  %1145 = vst [vmem:[%s3 + $0x38] sm:$0xff] %v1129
  %1146 = vst [vmem:[%s3 + $0x40] sm:$0xff] %v1130
  %1147 = vst [vmem:[%s3 + $0x48] sm:$0xff] %v1131
  %1148 = vst [vmem:[%s3 + $0x50] sm:$0xff] %v1132
  %1149 = vst [vmem:[%s3 + $0x58] sm:$0xff] %v1133
  %1150 = vst [vmem:[%s3 + $0x60] sm:$0xff] %v1134
  %1151 = vst [vmem:[%s3 + $0x68] sm:$0xff] %v1135
  %1152 = vst [vmem:[%s3 + $0x70] sm:$0xff] %v1136
  %1153 = vst [vmem:[%s3 + $0x78] sm:$0xff] %v1137
  // Predicated region
  $region14: #{discriminator_forward.6} parent=0 // pred_check
    _
  $region15: #{discriminator_forward.6} parent=0 // pred_check_branch
    %1155 = sbr.rel (0) target = $region17
  $region16: #{discriminator_forward.6} parent=0 // pred_region
    _
  $region17: #{discriminator_forward.6} parent=0 // pred_fallthru
    _
  // Predicated region
  $region18: #{discriminator_forward.6} parent=0 // pred_check
    _
  $region19: #{discriminator_forward.6} parent=0 // pred_check_branch
    %1157 = sbr.rel (0) target = $region21
  $region20: #{discriminator_forward.6} parent=0 // pred_region
    _
  $region21: #{discriminator_forward.6} parent=0 // pred_fallthru
    _

// kernel: discriminator_forward.7
$region0: #{discriminator_forward.7}
  #allocation0 [shape = 'u32[]', space=smem, size = 0x4, offset = 0x4, fixed_abs, tag = 'smem constant byte address 0x4 - core index']
  #allocation1 [shape = 'u32[72,128]{1,0:T(1,128)}', space=vmem, size = 0x9000, scoped, tag = 'internal scratch']
  %s0 = inlined_call_operand.vmem [shape: bf16[32,256], index: 0, kind: input, shape index: {}]
  %s1 = inlined_call_operand.vmem [shape: bf16[256,512], index: 1, kind: input, shape index: {}]
  %s2 = inlined_call_operand.vmem [shape: f32[32,1], index: 2, kind: input, shape index: {}]
  %s3 = inlined_call_operand.vmem [shape: bf16[32,512], index: 3, kind: output, shape index: {}]
  %s4 = sld [smem:[#allocation0]]
  $region22: #{discriminator_forward.7} parent=0
    _
  %s6 = ssub.s32 1, %s4
  %s7 = scalar_select 0, %s6, %s4
  // Predicated region
  $region2: #{discriminator_forward.7} parent=0 // pred_check
    _
  $region3: #{discriminator_forward.7} parent=0 // pred_check_branch
    %9 = sbr.rel (0) target = $region5
  $region4: #{discriminator_forward.7} parent=0 // pred_region
    _
  $region5: #{discriminator_forward.7} parent=0 // pred_fallthru
    _
  // Predicated region
  $region6: #{discriminator_forward.7} parent=0 // pred_check
    _
  $region7: #{discriminator_forward.7} parent=0 // pred_check_branch
    %11 = sbr.rel (0) target = $region9
  $region8: #{discriminator_forward.7} parent=0 // pred_region
    _
  $region9: #{discriminator_forward.7} parent=0 // pred_fallthru
    _
  // Predicated region
  $region10: #{discriminator_forward.7} parent=0 // pred_check
    _
  $region11: #{discriminator_forward.7} parent=0 // pred_check_branch
    %13 = sbr.rel (0) target = $region13
  $region12: #{discriminator_forward.7} parent=0 // pred_region
    _
  $region13: #{discriminator_forward.7} parent=0 // pred_fallthru
    _
  %v14 = vld [vmem:[%s0] sm:$0xff]
  %v15 = vld [vmem:[%s0 + $0x8] sm:$0xff]
  %v16 = vld [vmem:[%s0 + $0x10] sm:$0xff]
  %v17 = vld [vmem:[%s0 + $0x18] sm:$0xff]
  %v18 = vld [vmem:[%s1] sm:$0xff]
  %v19 = vld [vmem:[%s1 + $0x8] sm:$0xff]
  %v20 = vld [vmem:[%s1 + $0x10] sm:$0xff]
  %v21 = vld [vmem:[%s1 + $0x18] sm:$0xff]
  %v22 = vld [vmem:[%s1 + $0x20] sm:$0xff]
  %v23 = vld [vmem:[%s1 + $0x28] sm:$0xff]
  %v24 = vld [vmem:[%s1 + $0x30] sm:$0xff]
  %v25 = vld [vmem:[%s1 + $0x38] sm:$0xff]
  %v26 = vld [vmem:[%s1 + $0x40] sm:$0xff]
  %v27 = vld [vmem:[%s1 + $0x48] sm:$0xff]
  %v28 = vld [vmem:[%s1 + $0x50] sm:$0xff]
  %v29 = vld [vmem:[%s1 + $0x58] sm:$0xff]
  %v30 = vld [vmem:[%s1 + $0x60] sm:$0xff]
  %v31 = vld [vmem:[%s1 + $0x68] sm:$0xff]
  %v32 = vld [vmem:[%s1 + $0x70] sm:$0xff]
  %v33 = vld [vmem:[%s1 + $0x78] sm:$0xff]
  %v34 = vld [vmem:[%s1 + $0x80] sm:$0xff]
  %v35 = vld [vmem:[%s1 + $0x88] sm:$0xff]
  %v36 = vld [vmem:[%s1 + $0x90] sm:$0xff]
  %v37 = vld [vmem:[%s1 + $0x98] sm:$0xff]
  %v38 = vld [vmem:[%s1 + $0xa0] sm:$0xff]
  %v39 = vld [vmem:[%s1 + $0xa8] sm:$0xff]
  %v40 = vld [vmem:[%s1 + $0xb0] sm:$0xff]
  %v41 = vld [vmem:[%s1 + $0xb8] sm:$0xff]
  %v42 = vld [vmem:[%s1 + $0xc0] sm:$0xff]
  %v43 = vld [vmem:[%s1 + $0xc8] sm:$0xff]
  %v44 = vld [vmem:[%s1 + $0xd0] sm:$0xff]
  %v45 = vld [vmem:[%s1 + $0xd8] sm:$0xff]
  %v46 = vld [vmem:[%s1 + $0xe0] sm:$0xff]
  %v47 = vld [vmem:[%s1 + $0xe8] sm:$0xff]
  %v48 = vld [vmem:[%s1 + $0xf0] sm:$0xff]
  %v49 = vld [vmem:[%s1 + $0xf8] sm:$0xff]
  %v50 = vld [vmem:[%s1 + $0x100] sm:$0xff]
  %v51 = vld [vmem:[%s1 + $0x108] sm:$0xff]
  %v52 = vld [vmem:[%s1 + $0x110] sm:$0xff]
  %v53 = vld [vmem:[%s1 + $0x118] sm:$0xff]
  %v54 = vld [vmem:[%s1 + $0x120] sm:$0xff]
  %v55 = vld [vmem:[%s1 + $0x128] sm:$0xff]
  %v56 = vld [vmem:[%s1 + $0x130] sm:$0xff]
  %v57 = vld [vmem:[%s1 + $0x138] sm:$0xff]
  %v58 = vld [vmem:[%s1 + $0x140] sm:$0xff]
  %v59 = vld [vmem:[%s1 + $0x148] sm:$0xff]
  %v60 = vld [vmem:[%s1 + $0x150] sm:$0xff]
  %v61 = vld [vmem:[%s1 + $0x158] sm:$0xff]
  %v62 = vld [vmem:[%s1 + $0x160] sm:$0xff]
  %v63 = vld [vmem:[%s1 + $0x168] sm:$0xff]
  %v64 = vld [vmem:[%s1 + $0x170] sm:$0xff]
  %v65 = vld [vmem:[%s1 + $0x178] sm:$0xff]
  %v66 = vld [vmem:[%s1 + $0x180] sm:$0xff]
  %v67 = vld [vmem:[%s1 + $0x188] sm:$0xff]
  %v68 = vld [vmem:[%s1 + $0x190] sm:$0xff]
  %v69 = vld [vmem:[%s1 + $0x198] sm:$0xff]
  %v70 = vld [vmem:[%s1 + $0x1a0] sm:$0xff]
  %v71 = vld [vmem:[%s1 + $0x1a8] sm:$0xff]
  %v72 = vld [vmem:[%s1 + $0x1b0] sm:$0xff]
  %v73 = vld [vmem:[%s1 + $0x1b8] sm:$0xff]
  %v74 = vld [vmem:[%s1 + $0x1c0] sm:$0xff]
  %v75 = vld [vmem:[%s1 + $0x1c8] sm:$0xff]
  %v76 = vld [vmem:[%s1 + $0x1d0] sm:$0xff]
  %v77 = vld [vmem:[%s1 + $0x1d8] sm:$0xff]
  %v78 = vld [vmem:[%s1 + $0x1e0] sm:$0xff]
  %v79 = vld [vmem:[%s1 + $0x1e8] sm:$0xff]
  %v80 = vld [vmem:[%s1 + $0x1f0] sm:$0xff]
  %v81 = vld [vmem:[%s1 + $0x1f8] sm:$0xff]
  %v82 = vld [vmem:[%s2] sm:$0xff]
  %v83 = vld [vmem:[%s2 + $0x8] sm:$0xff]
  %v84 = vld [vmem:[%s2 + $0x10] sm:$0xff]
  %v85 = vld [vmem:[%s2 + $0x18] sm:$0xff]
  %87 = vset.pattern.permute.xlu0 0
  %88 = vperm.xlu0 %87, %v82
  %v89 = vpop.permute.xlu0 %88
  %92 = vset.pattern.permute.xlu0 0
  %93 = vperm.xlu0 %92, %v83
  %v94 = vpop.permute.xlu0 %93
  %97 = vset.pattern.permute.xlu0 0
  %98 = vperm.xlu0 %97, %v84
  %v99 = vpop.permute.xlu0 %98
  %102 = vset.pattern.permute.xlu0 0
  %103 = vperm.xlu0 %102, %v85
  %v104 = vpop.permute.xlu0 %103
  %v110 = vunpack.c.l.b16 %v14
  %v111 = vunpack.c.h.b16 %v14
  %v112 = vunpack.c.l.b16 %v15
  %v113 = vunpack.c.h.b16 %v15
  %v114 = vunpack.c.l.b16 %v16
  %v115 = vunpack.c.h.b16 %v16
  %v116 = vunpack.c.l.b16 %v17
  %v117 = vunpack.c.h.b16 %v17
  %v118 = vpack.c.b16 %v112, %v110
  %v119 = vpack.c.b16 %v113, %v111
  %v120 = vpack.c.b16 %v116, %v114
  %v121 = vpack.c.b16 %v117, %v115
  %v190 = vunpack.c.l.b16 %v18
  %v191 = vunpack.c.h.b16 %v18
  %v192 = vunpack.c.l.b16 %v19
  %v193 = vunpack.c.h.b16 %v19
  %v194 = vunpack.c.l.b16 %v20
  %v195 = vunpack.c.h.b16 %v20
  %v196 = vunpack.c.l.b16 %v21
  %v197 = vunpack.c.h.b16 %v21
  %v198 = vunpack.c.l.b16 %v22
  %v199 = vunpack.c.h.b16 %v22
  %v200 = vunpack.c.l.b16 %v23
  %v201 = vunpack.c.h.b16 %v23
  %v202 = vunpack.c.l.b16 %v24
  %v203 = vunpack.c.h.b16 %v24
  %v204 = vunpack.c.l.b16 %v25
  %v205 = vunpack.c.h.b16 %v25
  %v206 = vunpack.c.l.b16 %v26
  %v207 = vunpack.c.h.b16 %v26
  %v208 = vunpack.c.l.b16 %v27
  %v209 = vunpack.c.h.b16 %v27
  %v210 = vunpack.c.l.b16 %v28
  %v211 = vunpack.c.h.b16 %v28
  %v212 = vunpack.c.l.b16 %v29
  %v213 = vunpack.c.h.b16 %v29
  %v214 = vunpack.c.l.b16 %v30
  %v215 = vunpack.c.h.b16 %v30
  %v216 = vunpack.c.l.b16 %v31
  %v217 = vunpack.c.h.b16 %v31
  %v218 = vunpack.c.l.b16 %v32
  %v219 = vunpack.c.h.b16 %v32
  %v220 = vunpack.c.l.b16 %v33
  %v221 = vunpack.c.h.b16 %v33
  %v222 = vunpack.c.l.b16 %v34
  %v223 = vunpack.c.h.b16 %v34
  %v224 = vunpack.c.l.b16 %v35
  %v225 = vunpack.c.h.b16 %v35
  %v226 = vunpack.c.l.b16 %v36
  %v227 = vunpack.c.h.b16 %v36
  %v228 = vunpack.c.l.b16 %v37
  %v229 = vunpack.c.h.b16 %v37
  %v230 = vunpack.c.l.b16 %v38
  %v231 = vunpack.c.h.b16 %v38
  %v232 = vunpack.c.l.b16 %v39
  %v233 = vunpack.c.h.b16 %v39
  %v234 = vunpack.c.l.b16 %v40
  %v235 = vunpack.c.h.b16 %v40
  %v236 = vunpack.c.l.b16 %v41
  %v237 = vunpack.c.h.b16 %v41
  %v238 = vunpack.c.l.b16 %v42
  %v239 = vunpack.c.h.b16 %v42
  %v240 = vunpack.c.l.b16 %v43
  %v241 = vunpack.c.h.b16 %v43
  %v242 = vunpack.c.l.b16 %v44
  %v243 = vunpack.c.h.b16 %v44
  %v244 = vunpack.c.l.b16 %v45
  %v245 = vunpack.c.h.b16 %v45
  %v246 = vunpack.c.l.b16 %v46
  %v247 = vunpack.c.h.b16 %v46
  %v248 = vunpack.c.l.b16 %v47
  %v249 = vunpack.c.h.b16 %v47
  %v250 = vunpack.c.l.b16 %v48
  %v251 = vunpack.c.h.b16 %v48
  %v252 = vunpack.c.l.b16 %v49
  %v253 = vunpack.c.h.b16 %v49
  %v254 = vunpack.c.l.b16 %v50
  %v255 = vunpack.c.h.b16 %v50
  %v256 = vunpack.c.l.b16 %v51
  %v257 = vunpack.c.h.b16 %v51
  %v258 = vunpack.c.l.b16 %v52
  %v259 = vunpack.c.h.b16 %v52
  %v260 = vunpack.c.l.b16 %v53
  %v261 = vunpack.c.h.b16 %v53
  %v262 = vunpack.c.l.b16 %v54
  %v263 = vunpack.c.h.b16 %v54
  %v264 = vunpack.c.l.b16 %v55
  %v265 = vunpack.c.h.b16 %v55
  %v266 = vunpack.c.l.b16 %v56
  %v267 = vunpack.c.h.b16 %v56
  %v268 = vunpack.c.l.b16 %v57
  %v269 = vunpack.c.h.b16 %v57
  %v270 = vunpack.c.l.b16 %v58
  %v271 = vunpack.c.h.b16 %v58
  %v272 = vunpack.c.l.b16 %v59
  %v273 = vunpack.c.h.b16 %v59
  %v274 = vunpack.c.l.b16 %v60
  %v275 = vunpack.c.h.b16 %v60
  %v276 = vunpack.c.l.b16 %v61
  %v277 = vunpack.c.h.b16 %v61
  %v278 = vunpack.c.l.b16 %v62
  %v279 = vunpack.c.h.b16 %v62
  %v280 = vunpack.c.l.b16 %v63
  %v281 = vunpack.c.h.b16 %v63
  %v282 = vunpack.c.l.b16 %v64
  %v283 = vunpack.c.h.b16 %v64
  %v284 = vunpack.c.l.b16 %v65
  %v285 = vunpack.c.h.b16 %v65
  %v286 = vunpack.c.l.b16 %v66
  %v287 = vunpack.c.h.b16 %v66
  %v288 = vunpack.c.l.b16 %v67
  %v289 = vunpack.c.h.b16 %v67
  %v290 = vunpack.c.l.b16 %v68
  %v291 = vunpack.c.h.b16 %v68
  %v292 = vunpack.c.l.b16 %v69
  %v293 = vunpack.c.h.b16 %v69
  %v294 = vunpack.c.l.b16 %v70
  %v295 = vunpack.c.h.b16 %v70
  %v296 = vunpack.c.l.b16 %v71
  %v297 = vunpack.c.h.b16 %v71
  %v298 = vunpack.c.l.b16 %v72
  %v299 = vunpack.c.h.b16 %v72
  %v300 = vunpack.c.l.b16 %v73
  %v301 = vunpack.c.h.b16 %v73
  %v302 = vunpack.c.l.b16 %v74
  %v303 = vunpack.c.h.b16 %v74
  %v304 = vunpack.c.l.b16 %v75
  %v305 = vunpack.c.h.b16 %v75
  %v306 = vunpack.c.l.b16 %v76
  %v307 = vunpack.c.h.b16 %v76
  %v308 = vunpack.c.l.b16 %v77
  %v309 = vunpack.c.h.b16 %v77
  %v310 = vunpack.c.l.b16 %v78
  %v311 = vunpack.c.h.b16 %v78
  %v312 = vunpack.c.l.b16 %v79
  %v313 = vunpack.c.h.b16 %v79
  %v314 = vunpack.c.l.b16 %v80
  %v315 = vunpack.c.h.b16 %v80
  %v316 = vunpack.c.l.b16 %v81
  %v317 = vunpack.c.h.b16 %v81
  %v318 = vpack.c.b16 %v194, %v190
  %v319 = vpack.c.b16 %v195, %v191
  %v320 = vpack.c.b16 %v196, %v192
  %v321 = vpack.c.b16 %v197, %v193
  %v322 = vpack.c.b16 %v202, %v198
  %v323 = vpack.c.b16 %v203, %v199
  %v324 = vpack.c.b16 %v204, %v200
  %v325 = vpack.c.b16 %v205, %v201
  %v326 = vpack.c.b16 %v210, %v206
  %v327 = vpack.c.b16 %v211, %v207
  %v328 = vpack.c.b16 %v212, %v208
  %v329 = vpack.c.b16 %v213, %v209
  %v330 = vpack.c.b16 %v218, %v214
  %v331 = vpack.c.b16 %v219, %v215
  %v332 = vpack.c.b16 %v220, %v216
  %v333 = vpack.c.b16 %v221, %v217
  %v334 = vpack.c.b16 %v226, %v222
  %v335 = vpack.c.b16 %v227, %v223
  %v336 = vpack.c.b16 %v228, %v224
  %v337 = vpack.c.b16 %v229, %v225
  %v338 = vpack.c.b16 %v234, %v230
  %v339 = vpack.c.b16 %v235, %v231
  %v340 = vpack.c.b16 %v236, %v232
  %v341 = vpack.c.b16 %v237, %v233
  %v342 = vpack.c.b16 %v242, %v238
  %v343 = vpack.c.b16 %v243, %v239
  %v344 = vpack.c.b16 %v244, %v240
  %v345 = vpack.c.b16 %v245, %v241
  %v346 = vpack.c.b16 %v250, %v246
  %v347 = vpack.c.b16 %v251, %v247
  %v348 = vpack.c.b16 %v252, %v248
  %v349 = vpack.c.b16 %v253, %v249
  %v350 = vpack.c.b16 %v258, %v254
  %v351 = vpack.c.b16 %v259, %v255
  %v352 = vpack.c.b16 %v260, %v256
  %v353 = vpack.c.b16 %v261, %v257
  %v354 = vpack.c.b16 %v266, %v262
  %v355 = vpack.c.b16 %v267, %v263
  %v356 = vpack.c.b16 %v268, %v264
  %v357 = vpack.c.b16 %v269, %v265
  %v358 = vpack.c.b16 %v274, %v270
  %v359 = vpack.c.b16 %v275, %v271
  %v360 = vpack.c.b16 %v276, %v272
  %v361 = vpack.c.b16 %v277, %v273
  %v362 = vpack.c.b16 %v282, %v278
  %v363 = vpack.c.b16 %v283, %v279
  %v364 = vpack.c.b16 %v284, %v280
  %v365 = vpack.c.b16 %v285, %v281
  %v366 = vpack.c.b16 %v290, %v286
  %v367 = vpack.c.b16 %v291, %v287
  %v368 = vpack.c.b16 %v292, %v288
  %v369 = vpack.c.b16 %v293, %v289
  %v370 = vpack.c.b16 %v298, %v294
  %v371 = vpack.c.b16 %v299, %v295
  %v372 = vpack.c.b16 %v300, %v296
  %v373 = vpack.c.b16 %v301, %v297
  %v374 = vpack.c.b16 %v306, %v302
  %v375 = vpack.c.b16 %v307, %v303
  %v376 = vpack.c.b16 %v308, %v304
  %v377 = vpack.c.b16 %v309, %v305
  %v378 = vpack.c.b16 %v314, %v310
  %v379 = vpack.c.b16 %v315, %v311
  %v380 = vpack.c.b16 %v316, %v312
  %v381 = vpack.c.b16 %v317, %v313
  %446 = vmatpush.bf16.msra.mxu0 %v346
  %447 = vmatpush.bf16.msra.mxu0 %v342
  %448 = vmatpush.bf16.msra.mxu0 %v338
  %449 = vmatpush.bf16.msra.mxu0 %v334
  %450 = vmatpush.bf16.msra.mxu0 %v330
  %451 = vmatpush.bf16.msra.mxu0 %v326
  %452 = vmatpush.bf16.msra.mxu0 %v322
  %453 = vmatpush.bf16.msra.mxu0 %v318
  %454 = vmatmul.bf16.gmra.mxu0 %v118
  %v455 = vpop.f32.mrf.mxu0
  %v456 = vadd.f32 %v89, %v455
  %v457 = vpop.f32.mrf.mxu0
  %v458 = vadd.f32 %v94, %v457
  %459 = vmatmul.bf16.gmra.mxu0 %v120
  %v460 = vpop.f32.mrf.mxu0
  %v461 = vadd.f32 %v99, %v460
  %v462 = vpop.f32.mrf.mxu0
  %v463 = vadd.f32 %v104, %v462
  %464 = vdwg.mxu0
  %465 = vmatpush.bf16.msra.mxu0 %v378
  %466 = vmatpush.bf16.msra.mxu0 %v374
  %467 = vmatpush.bf16.msra.mxu0 %v370
  %468 = vmatpush.bf16.msra.mxu0 %v366
  %469 = vmatpush.bf16.msra.mxu0 %v362
  %470 = vmatpush.bf16.msra.mxu0 %v358
  %471 = vmatpush.bf16.msra.mxu0 %v354
  %472 = vmatpush.bf16.msra.mxu0 %v350
  %473 = vmatmul.bf16.gmra.mxu0 %v119
  %v474 = vpop.f32.mrf.mxu0
  %v475 = vadd.f32 %v456, %v474
  %v476 = vpop.f32.mrf.mxu0
  %v477 = vadd.f32 %v458, %v476
  %478 = vmatmul.bf16.gmra.mxu0 %v121
  %v479 = vpop.f32.mrf.mxu0
  %v480 = vadd.f32 %v461, %v479
  %v481 = vpop.f32.mrf.mxu0
  %v482 = vadd.f32 %v463, %v481
  %483 = vdwg.mxu0
  %484 = vmatpush.bf16.msra.mxu0 %v347
  %485 = vmatpush.bf16.msra.mxu0 %v343
  %486 = vmatpush.bf16.msra.mxu0 %v339
  %487 = vmatpush.bf16.msra.mxu0 %v335
  %488 = vmatpush.bf16.msra.mxu0 %v331
  %489 = vmatpush.bf16.msra.mxu0 %v327
  %490 = vmatpush.bf16.msra.mxu0 %v323
  %491 = vmatpush.bf16.msra.mxu0 %v319
  %492 = vmatmul.bf16.gmra.mxu0 %v118
  %v493 = vpop.f32.mrf.mxu0
  %v494 = vadd.f32 %v89, %v493
  %v495 = vpop.f32.mrf.mxu0
  %v496 = vadd.f32 %v94, %v495
  %497 = vmatmul.bf16.gmra.mxu0 %v120
  %v498 = vpop.f32.mrf.mxu0
  %v499 = vadd.f32 %v99, %v498
  %v500 = vpop.f32.mrf.mxu0
  %v501 = vadd.f32 %v104, %v500
  %502 = vdwg.mxu0
  %503 = vmatpush.bf16.msra.mxu0 %v379
  %504 = vmatpush.bf16.msra.mxu0 %v375
  %505 = vmatpush.bf16.msra.mxu0 %v371
  %506 = vmatpush.bf16.msra.mxu0 %v367
  %507 = vmatpush.bf16.msra.mxu0 %v363
  %508 = vmatpush.bf16.msra.mxu0 %v359
  %509 = vmatpush.bf16.msra.mxu0 %v355
  %510 = vmatpush.bf16.msra.mxu0 %v351
  %511 = vmatmul.bf16.gmra.mxu0 %v119
  %v512 = vpop.f32.mrf.mxu0
  %v513 = vadd.f32 %v494, %v512
  %v514 = vpop.f32.mrf.mxu0
  %v515 = vadd.f32 %v496, %v514
  %516 = vmatmul.bf16.gmra.mxu0 %v121
  %v517 = vpop.f32.mrf.mxu0
  %v518 = vadd.f32 %v499, %v517
  %v519 = vpop.f32.mrf.mxu0
  %v520 = vadd.f32 %v501, %v519
  %521 = vdwg.mxu0
  %522 = vmatpush.bf16.msra.mxu0 %v348
  %523 = vmatpush.bf16.msra.mxu0 %v344
  %524 = vmatpush.bf16.msra.mxu0 %v340
  %525 = vmatpush.bf16.msra.mxu0 %v336
  %526 = vmatpush.bf16.msra.mxu0 %v332
  %527 = vmatpush.bf16.msra.mxu0 %v328
  %528 = vmatpush.bf16.msra.mxu0 %v324
  %529 = vmatpush.bf16.msra.mxu0 %v320
  %530 = vmatmul.bf16.gmra.mxu0 %v118
  %v531 = vpop.f32.mrf.mxu0
  %v532 = vadd.f32 %v89, %v531
  %v533 = vpop.f32.mrf.mxu0
  %v534 = vadd.f32 %v94, %v533
  %535 = vmatmul.bf16.gmra.mxu0 %v120
  %v536 = vpop.f32.mrf.mxu0
  %v537 = vadd.f32 %v99, %v536
  %v538 = vpop.f32.mrf.mxu0
  %v539 = vadd.f32 %v104, %v538
  %540 = vdwg.mxu0
  %541 = vmatpush.bf16.msra.mxu0 %v380
  %542 = vmatpush.bf16.msra.mxu0 %v376
  %543 = vmatpush.bf16.msra.mxu0 %v372
  %544 = vmatpush.bf16.msra.mxu0 %v368
  %545 = vmatpush.bf16.msra.mxu0 %v364
  %546 = vmatpush.bf16.msra.mxu0 %v360
  %547 = vmatpush.bf16.msra.mxu0 %v356
  %548 = vmatpush.bf16.msra.mxu0 %v352
  %549 = vmatmul.bf16.gmra.mxu0 %v119
  %v550 = vpop.f32.mrf.mxu0
  %v551 = vadd.f32 %v532, %v550
  %v552 = vpop.f32.mrf.mxu0
  %v553 = vadd.f32 %v534, %v552
  %554 = vmatmul.bf16.gmra.mxu0 %v121
  %v555 = vpop.f32.mrf.mxu0
  %v556 = vadd.f32 %v537, %v555
  %v557 = vpop.f32.mrf.mxu0
  %v558 = vadd.f32 %v539, %v557
  %559 = vdwg.mxu0
  %560 = vmatpush.bf16.msra.mxu0 %v349
  %561 = vmatpush.bf16.msra.mxu0 %v345
  %562 = vmatpush.bf16.msra.mxu0 %v341
  %563 = vmatpush.bf16.msra.mxu0 %v337
  %564 = vmatpush.bf16.msra.mxu0 %v333
  %565 = vmatpush.bf16.msra.mxu0 %v329
  %566 = vmatpush.bf16.msra.mxu0 %v325
  %567 = vmatpush.bf16.msra.mxu0 %v321
  %568 = vmatmul.bf16.gmra.mxu0 %v118
  %v569 = vpop.f32.mrf.mxu0
  %v570 = vadd.f32 %v89, %v569
  %v571 = vpop.f32.mrf.mxu0
  %v572 = vadd.f32 %v94, %v571
  %573 = vmatmul.bf16.gmra.mxu0 %v120
  %v574 = vpop.f32.mrf.mxu0
  %v575 = vadd.f32 %v99, %v574
  %v576 = vpop.f32.mrf.mxu0
  %v577 = vadd.f32 %v104, %v576
  %578 = vdwg.mxu0
  %579 = vmatpush.bf16.msra.mxu0 %v381
  %580 = vmatpush.bf16.msra.mxu0 %v377
  %581 = vmatpush.bf16.msra.mxu0 %v373
  %582 = vmatpush.bf16.msra.mxu0 %v369
  %583 = vmatpush.bf16.msra.mxu0 %v365
  %584 = vmatpush.bf16.msra.mxu0 %v361
  %585 = vmatpush.bf16.msra.mxu0 %v357
  %586 = vmatpush.bf16.msra.mxu0 %v353
  %587 = vmatmul.bf16.gmra.mxu0 %v119
  %v588 = vpop.f32.mrf.mxu0
  %v589 = vadd.f32 %v570, %v588
  %v590 = vpop.f32.mrf.mxu0
  %v591 = vadd.f32 %v572, %v590
  %592 = vmatmul.bf16.gmra.mxu0 %v121
  %v593 = vpop.f32.mrf.mxu0
  %v594 = vadd.f32 %v575, %v593
  %v595 = vpop.f32.mrf.mxu0
  %v596 = vadd.f32 %v577, %v595
  %597 = vdwg.mxu0
  %vm598 = vcmp.gt.f32.partialorder %v475, 0.0
  %vm599 = vcmp.gt.f32.partialorder %v513, 0.0
  %vm600 = vcmp.gt.f32.partialorder %v551, 0.0
  %vm601 = vcmp.gt.f32.partialorder %v589, 0.0
  %vm602 = vcmp.gt.f32.partialorder %v477, 0.0
  %vm603 = vcmp.gt.f32.partialorder %v515, 0.0
  %vm604 = vcmp.gt.f32.partialorder %v553, 0.0
  %vm605 = vcmp.gt.f32.partialorder %v591, 0.0
  %vm606 = vcmp.gt.f32.partialorder %v480, 0.0
  %vm607 = vcmp.gt.f32.partialorder %v518, 0.0
  %vm608 = vcmp.gt.f32.partialorder %v556, 0.0
  %vm609 = vcmp.gt.f32.partialorder %v594, 0.0
  %vm610 = vcmp.gt.f32.partialorder %v482, 0.0
  %vm611 = vcmp.gt.f32.partialorder %v520, 0.0
  %vm612 = vcmp.gt.f32.partialorder %v558, 0.0
  %vm613 = vcmp.gt.f32.partialorder %v596, 0.0
  %v614 = vmul.f32 %v475, 0.2
  %v615 = vmul.f32 %v513, 0.2
  %v616 = vmul.f32 %v551, 0.2
  %v617 = vmul.f32 %v589, 0.2
  %v618 = vmul.f32 %v477, 0.2
  %v619 = vmul.f32 %v515, 0.2
  %v620 = vmul.f32 %v553, 0.2
  %v621 = vmul.f32 %v591, 0.2
  %v622 = vmul.f32 %v480, 0.2
  %v623 = vmul.f32 %v518, 0.2
  %v624 = vmul.f32 %v556, 0.2
  %v625 = vmul.f32 %v594, 0.2
  %v626 = vmul.f32 %v482, 0.2
  %v627 = vmul.f32 %v520, 0.2
  %v628 = vmul.f32 %v558, 0.2
  %v629 = vmul.f32 %v596, 0.2
  %v630 = vsel %vm598, %v475, %v614
  %v631 = vsel %vm599, %v513, %v615
  %v632 = vsel %vm600, %v551, %v616
  %v633 = vsel %vm601, %v589, %v617
  %v634 = vsel %vm602, %v477, %v618
  %v635 = vsel %vm603, %v515, %v619
  %v636 = vsel %vm604, %v553, %v620
  %v637 = vsel %vm605, %v591, %v621
  %v638 = vsel %vm606, %v480, %v622
  %v639 = vsel %vm607, %v518, %v623
  %v640 = vsel %vm608, %v556, %v624
  %v641 = vsel %vm609, %v594, %v625
  %v642 = vsel %vm610, %v482, %v626
  %v643 = vsel %vm611, %v520, %v627
  %v644 = vsel %vm612, %v558, %v628
  %v645 = vsel %vm613, %v596, %v629
  %v646 = vpack.c.bf16 %v631, %v630
  %v647 = vpack.c.bf16 %v633, %v632
  %v648 = vpack.c.bf16 %v635, %v634
  %v649 = vpack.c.bf16 %v637, %v636
  %v650 = vpack.c.bf16 %v639, %v638
  %v651 = vpack.c.bf16 %v641, %v640
  %v652 = vpack.c.bf16 %v643, %v642
  %v653 = vpack.c.bf16 %v645, %v644
  %654 = vst [vmem:[%s3] sm:$0xff] %v646
  %655 = vst [vmem:[%s3 + $0x8] sm:$0xff] %v647
  %656 = vst [vmem:[%s3 + $0x10] sm:$0xff] %v648
  %657 = vst [vmem:[%s3 + $0x18] sm:$0xff] %v649
  %658 = vst [vmem:[%s3 + $0x20] sm:$0xff] %v650
  %659 = vst [vmem:[%s3 + $0x28] sm:$0xff] %v651
  %660 = vst [vmem:[%s3 + $0x30] sm:$0xff] %v652
  %661 = vst [vmem:[%s3 + $0x38] sm:$0xff] %v653
  // Predicated region
  $region14: #{discriminator_forward.7} parent=0 // pred_check
    _
  $region15: #{discriminator_forward.7} parent=0 // pred_check_branch
    %663 = sbr.rel (0) target = $region17
  $region16: #{discriminator_forward.7} parent=0 // pred_region
    _
  $region17: #{discriminator_forward.7} parent=0 // pred_fallthru
    _
  // Predicated region
  $region18: #{discriminator_forward.7} parent=0 // pred_check
    _
  $region19: #{discriminator_forward.7} parent=0 // pred_check_branch
    %665 = sbr.rel (0) target = $region21
  $region20: #{discriminator_forward.7} parent=0 // pred_region
    _
  $region21: #{discriminator_forward.7} parent=0 // pred_fallthru
    _

// kernel: discriminator_forward.8
$region0: #{discriminator_forward.8}
  #allocation0 [shape = 'u32[]', space=smem, size = 0x4, offset = 0x4, fixed_abs, tag = 'smem constant byte address 0x4 - core index']
  #allocation1 [shape = 'u32[72,128]{1,0:T(1,128)}', space=vmem, size = 0x9000, scoped, tag = 'internal scratch']
  %s0 = inlined_call_operand.vmem [shape: bf16[64,512], index: 0, kind: input, shape index: {}]
  %s1 = inlined_call_operand.vmem [shape: bf16[512,128], index: 1, kind: input, shape index: {}]
  %s2 = inlined_call_operand.vmem [shape: f32[64,1], index: 2, kind: input, shape index: {}]
  %s3 = inlined_call_operand.vmem [shape: bf16[64,128], index: 3, kind: output, shape index: {}]
  %s4 = sld [smem:[#allocation0]]
  $region22: #{discriminator_forward.8} parent=0
    _
  %s6 = ssub.s32 1, %s4
  %s7 = scalar_select 0, %s6, %s4
  // Predicated region
  $region2: #{discriminator_forward.8} parent=0 // pred_check
    _
  $region3: #{discriminator_forward.8} parent=0 // pred_check_branch
    %9 = sbr.rel (0) target = $region5
  $region4: #{discriminator_forward.8} parent=0 // pred_region
    _
  $region5: #{discriminator_forward.8} parent=0 // pred_fallthru
    _
  // Predicated region
  $region6: #{discriminator_forward.8} parent=0 // pred_check
    _
  $region7: #{discriminator_forward.8} parent=0 // pred_check_branch
    %11 = sbr.rel (0) target = $region9
  $region8: #{discriminator_forward.8} parent=0 // pred_region
    _
  $region9: #{discriminator_forward.8} parent=0 // pred_fallthru
    _
  // Predicated region
  $region10: #{discriminator_forward.8} parent=0 // pred_check
    _
  $region11: #{discriminator_forward.8} parent=0 // pred_check_branch
    %13 = sbr.rel (0) target = $region13
  $region12: #{discriminator_forward.8} parent=0 // pred_region
    _
  $region13: #{discriminator_forward.8} parent=0 // pred_fallthru
    _
  %v14 = vld [vmem:[%s0] sm:$0xff]
  %v15 = vld [vmem:[%s0 + $0x8] sm:$0xff]
  %v16 = vld [vmem:[%s0 + $0x10] sm:$0xff]
  %v17 = vld [vmem:[%s0 + $0x18] sm:$0xff]
  %v18 = vld [vmem:[%s0 + $0x20] sm:$0xff]
  %v19 = vld [vmem:[%s0 + $0x28] sm:$0xff]
  %v20 = vld [vmem:[%s0 + $0x30] sm:$0xff]
  %v21 = vld [vmem:[%s0 + $0x38] sm:$0xff]
  %v22 = vld [vmem:[%s0 + $0x40] sm:$0xff]
  %v23 = vld [vmem:[%s0 + $0x48] sm:$0xff]
  %v24 = vld [vmem:[%s0 + $0x50] sm:$0xff]
  %v25 = vld [vmem:[%s0 + $0x58] sm:$0xff]
  %v26 = vld [vmem:[%s0 + $0x60] sm:$0xff]
  %v27 = vld [vmem:[%s0 + $0x68] sm:$0xff]
  %v28 = vld [vmem:[%s0 + $0x70] sm:$0xff]
  %v29 = vld [vmem:[%s0 + $0x78] sm:$0xff]
  %v30 = vld [vmem:[%s1] sm:$0xf]
  %v31 = vld [vmem:[%s1 + $0x4] sm:$0xf]
  %v32 = vld [vmem:[%s1 + $0x8] sm:$0xf]
  %v33 = vld [vmem:[%s1 + $0xc] sm:$0xf]
  %v34 = vld [vmem:[%s1 + $0x10] sm:$0xf]
  %v35 = vld [vmem:[%s1 + $0x14] sm:$0xf]
  %v36 = vld [vmem:[%s1 + $0x18] sm:$0xf]
  %v37 = vld [vmem:[%s1 + $0x1c] sm:$0xf]
  %v38 = vld [vmem:[%s1 + $0x20] sm:$0xf]
  %v39 = vld [vmem:[%s1 + $0x24] sm:$0xf]
  %v40 = vld [vmem:[%s1 + $0x28] sm:$0xf]
  %v41 = vld [vmem:[%s1 + $0x2c] sm:$0xf]
  %v42 = vld [vmem:[%s1 + $0x30] sm:$0xf]
  %v43 = vld [vmem:[%s1 + $0x34] sm:$0xf]
  %v44 = vld [vmem:[%s1 + $0x38] sm:$0xf]
  %v45 = vld [vmem:[%s1 + $0x3c] sm:$0xf]
  %v46 = vld [vmem:[%s1 + $0x40] sm:$0xf]
  %v47 = vld [vmem:[%s1 + $0x44] sm:$0xf]
  %v48 = vld [vmem:[%s1 + $0x48] sm:$0xf]
  %v49 = vld [vmem:[%s1 + $0x4c] sm:$0xf]
  %v50 = vld [vmem:[%s1 + $0x50] sm:$0xf]
  %v51 = vld [vmem:[%s1 + $0x54] sm:$0xf]
  %v52 = vld [vmem:[%s1 + $0x58] sm:$0xf]
  %v53 = vld [vmem:[%s1 + $0x5c] sm:$0xf]
  %v54 = vld [vmem:[%s1 + $0x60] sm:$0xf]
  %v55 = vld [vmem:[%s1 + $0x64] sm:$0xf]
  %v56 = vld [vmem:[%s1 + $0x68] sm:$0xf]
  %v57 = vld [vmem:[%s1 + $0x6c] sm:$0xf]
  %v58 = vld [vmem:[%s1 + $0x70] sm:$0xf]
  %v59 = vld [vmem:[%s1 + $0x74] sm:$0xf]
  %v60 = vld [vmem:[%s1 + $0x78] sm:$0xf]
  %v61 = vld [vmem:[%s1 + $0x7c] sm:$0xf]
  %v62 = vld [vmem:[%s1 + $0x80] sm:$0xf]
  %v63 = vld [vmem:[%s1 + $0x84] sm:$0xf]
  %v64 = vld [vmem:[%s1 + $0x88] sm:$0xf]
  %v65 = vld [vmem:[%s1 + $0x8c] sm:$0xf]
  %v66 = vld [vmem:[%s1 + $0x90] sm:$0xf]
  %v67 = vld [vmem:[%s1 + $0x94] sm:$0xf]
  %v68 = vld [vmem:[%s1 + $0x98] sm:$0xf]
  %v69 = vld [vmem:[%s1 + $0x9c] sm:$0xf]
  %v70 = vld [vmem:[%s1 + $0xa0] sm:$0xf]
  %v71 = vld [vmem:[%s1 + $0xa4] sm:$0xf]
  %v72 = vld [vmem:[%s1 + $0xa8] sm:$0xf]
  %v73 = vld [vmem:[%s1 + $0xac] sm:$0xf]
  %v74 = vld [vmem:[%s1 + $0xb0] sm:$0xf]
  %v75 = vld [vmem:[%s1 + $0xb4] sm:$0xf]
  %v76 = vld [vmem:[%s1 + $0xb8] sm:$0xf]
  %v77 = vld [vmem:[%s1 + $0xbc] sm:$0xf]
  %v78 = vld [vmem:[%s1 + $0xc0] sm:$0xf]
  %v79 = vld [vmem:[%s1 + $0xc4] sm:$0xf]
  %v80 = vld [vmem:[%s1 + $0xc8] sm:$0xf]
  %v81 = vld [vmem:[%s1 + $0xcc] sm:$0xf]
  %v82 = vld [vmem:[%s1 + $0xd0] sm:$0xf]
  %v83 = vld [vmem:[%s1 + $0xd4] sm:$0xf]
  %v84 = vld [vmem:[%s1 + $0xd8] sm:$0xf]
  %v85 = vld [vmem:[%s1 + $0xdc] sm:$0xf]
  %v86 = vld [vmem:[%s1 + $0xe0] sm:$0xf]
  %v87 = vld [vmem:[%s1 + $0xe4] sm:$0xf]
  %v88 = vld [vmem:[%s1 + $0xe8] sm:$0xf]
  %v89 = vld [vmem:[%s1 + $0xec] sm:$0xf]
  %v90 = vld [vmem:[%s1 + $0xf0] sm:$0xf]
  %v91 = vld [vmem:[%s1 + $0xf4] sm:$0xf]
  %v92 = vld [vmem:[%s1 + $0xf8] sm:$0xf]
  %v93 = vld [vmem:[%s1 + $0xfc] sm:$0xf]
  %v94 = vld [vmem:[%s2] sm:$0xff]
  %v95 = vld [vmem:[%s2 + $0x8] sm:$0xff]
  %v96 = vld [vmem:[%s2 + $0x10] sm:$0xff]
  %v97 = vld [vmem:[%s2 + $0x18] sm:$0xff]
  %v98 = vld [vmem:[%s2 + $0x20] sm:$0xff]
  %v99 = vld [vmem:[%s2 + $0x28] sm:$0xff]
  %v100 = vld [vmem:[%s2 + $0x30] sm:$0xff]
  %v101 = vld [vmem:[%s2 + $0x38] sm:$0xff]
  %103 = vset.pattern.permute.xlu0 0
  %104 = vperm.xlu0 %103, %v94
  %v105 = vpop.permute.xlu0 %104
  %108 = vset.pattern.permute.xlu0 0
  %109 = vperm.xlu0 %108, %v95
  %v110 = vpop.permute.xlu0 %109
  %113 = vset.pattern.permute.xlu0 0
  %114 = vperm.xlu0 %113, %v96
  %v115 = vpop.permute.xlu0 %114
  %118 = vset.pattern.permute.xlu0 0
  %119 = vperm.xlu0 %118, %v97
  %v120 = vpop.permute.xlu0 %119
  %123 = vset.pattern.permute.xlu0 0
  %124 = vperm.xlu0 %123, %v98
  %v125 = vpop.permute.xlu0 %124
  %128 = vset.pattern.permute.xlu0 0
  %129 = vperm.xlu0 %128, %v99
  %v130 = vpop.permute.xlu0 %129
  %133 = vset.pattern.permute.xlu0 0
  %134 = vperm.xlu0 %133, %v100
  %v135 = vpop.permute.xlu0 %134
  %138 = vset.pattern.permute.xlu0 0
  %139 = vperm.xlu0 %138, %v101
  %v140 = vpop.permute.xlu0 %139
  %v158 = vunpack.c.l.b16 %v14
  %v159 = vunpack.c.h.b16 %v14
  %v160 = vunpack.c.l.b16 %v15
  %v161 = vunpack.c.h.b16 %v15
  %v162 = vunpack.c.l.b16 %v16
  %v163 = vunpack.c.h.b16 %v16
  %v164 = vunpack.c.l.b16 %v17
  %v165 = vunpack.c.h.b16 %v17
  %v166 = vunpack.c.l.b16 %v18
  %v167 = vunpack.c.h.b16 %v18
  %v168 = vunpack.c.l.b16 %v19
  %v169 = vunpack.c.h.b16 %v19
  %v170 = vunpack.c.l.b16 %v20
  %v171 = vunpack.c.h.b16 %v20
  %v172 = vunpack.c.l.b16 %v21
  %v173 = vunpack.c.h.b16 %v21
  %v174 = vunpack.c.l.b16 %v22
  %v175 = vunpack.c.h.b16 %v22
  %v176 = vunpack.c.l.b16 %v23
  %v177 = vunpack.c.h.b16 %v23
  %v178 = vunpack.c.l.b16 %v24
  %v179 = vunpack.c.h.b16 %v24
  %v180 = vunpack.c.l.b16 %v25
  %v181 = vunpack.c.h.b16 %v25
  %v182 = vunpack.c.l.b16 %v26
  %v183 = vunpack.c.h.b16 %v26
  %v184 = vunpack.c.l.b16 %v27
  %v185 = vunpack.c.h.b16 %v27
  %v186 = vunpack.c.l.b16 %v28
  %v187 = vunpack.c.h.b16 %v28
  %v188 = vunpack.c.l.b16 %v29
  %v189 = vunpack.c.h.b16 %v29
  %v190 = vpack.c.b16 %v162, %v158
  %v191 = vpack.c.b16 %v163, %v159
  %v192 = vpack.c.b16 %v164, %v160
  %v193 = vpack.c.b16 %v165, %v161
  %v194 = vpack.c.b16 %v170, %v166
  %v195 = vpack.c.b16 %v171, %v167
  %v196 = vpack.c.b16 %v172, %v168
  %v197 = vpack.c.b16 %v173, %v169
  %v198 = vpack.c.b16 %v178, %v174
  %v199 = vpack.c.b16 %v179, %v175
  %v200 = vpack.c.b16 %v180, %v176
  %v201 = vpack.c.b16 %v181, %v177
  %v202 = vpack.c.b16 %v186, %v182
  %v203 = vpack.c.b16 %v187, %v183
  %v204 = vpack.c.b16 %v188, %v184
  %v205 = vpack.c.b16 %v189, %v185
  %v286 = vunpack.c.l.b16 %v30
  %v287 = vunpack.c.l.b16 %v31
  %v288 = vunpack.c.l.b16 %v32
  %v289 = vunpack.c.l.b16 %v33
  %v290 = vunpack.c.l.b16 %v34
  %v291 = vunpack.c.l.b16 %v35
  %v292 = vunpack.c.l.b16 %v36
  %v293 = vunpack.c.l.b16 %v37
  %v294 = vunpack.c.l.b16 %v38
  %v295 = vunpack.c.l.b16 %v39
  %v296 = vunpack.c.l.b16 %v40
  %v297 = vunpack.c.l.b16 %v41
  %v298 = vunpack.c.l.b16 %v42
  %v299 = vunpack.c.l.b16 %v43
  %v300 = vunpack.c.l.b16 %v44
  %v301 = vunpack.c.l.b16 %v45
  %v302 = vunpack.c.l.b16 %v46
  %v303 = vunpack.c.l.b16 %v47
  %v304 = vunpack.c.l.b16 %v48
  %v305 = vunpack.c.l.b16 %v49
  %v306 = vunpack.c.l.b16 %v50
  %v307 = vunpack.c.l.b16 %v51
  %v308 = vunpack.c.l.b16 %v52
  %v309 = vunpack.c.l.b16 %v53
  %v310 = vunpack.c.l.b16 %v54
  %v311 = vunpack.c.l.b16 %v55
  %v312 = vunpack.c.l.b16 %v56
  %v313 = vunpack.c.l.b16 %v57
  %v314 = vunpack.c.l.b16 %v58
  %v315 = vunpack.c.l.b16 %v59
  %v316 = vunpack.c.l.b16 %v60
  %v317 = vunpack.c.l.b16 %v61
  %v318 = vunpack.c.l.b16 %v62
  %v319 = vunpack.c.l.b16 %v63
  %v320 = vunpack.c.l.b16 %v64
  %v321 = vunpack.c.l.b16 %v65
  %v322 = vunpack.c.l.b16 %v66
  %v323 = vunpack.c.l.b16 %v67
  %v324 = vunpack.c.l.b16 %v68
  %v325 = vunpack.c.l.b16 %v69
  %v326 = vunpack.c.l.b16 %v70
  %v327 = vunpack.c.l.b16 %v71
  %v328 = vunpack.c.l.b16 %v72
  %v329 = vunpack.c.l.b16 %v73
  %v330 = vunpack.c.l.b16 %v74
  %v331 = vunpack.c.l.b16 %v75
  %v332 = vunpack.c.l.b16 %v76
  %v333 = vunpack.c.l.b16 %v77
  %v334 = vunpack.c.l.b16 %v78
  %v335 = vunpack.c.l.b16 %v79
  %v336 = vunpack.c.l.b16 %v80
  %v337 = vunpack.c.l.b16 %v81
  %v338 = vunpack.c.l.b16 %v82
  %v339 = vunpack.c.l.b16 %v83
  %v340 = vunpack.c.l.b16 %v84
  %v341 = vunpack.c.l.b16 %v85
  %v342 = vunpack.c.l.b16 %v86
  %v343 = vunpack.c.l.b16 %v87
  %v344 = vunpack.c.l.b16 %v88
  %v345 = vunpack.c.l.b16 %v89
  %v346 = vunpack.c.l.b16 %v90
  %v347 = vunpack.c.l.b16 %v91
  %v348 = vunpack.c.l.b16 %v92
  %v349 = vunpack.c.l.b16 %v93
  %v350 = vpack.c.b16 %v287, %v286
  %v351 = vpack.c.b16 %v289, %v288
  %v352 = vpack.c.b16 %v291, %v290
  %v353 = vpack.c.b16 %v293, %v292
  %v354 = vpack.c.b16 %v295, %v294
  %v355 = vpack.c.b16 %v297, %v296
  %v356 = vpack.c.b16 %v299, %v298
  %v357 = vpack.c.b16 %v301, %v300
  %v358 = vpack.c.b16 %v303, %v302
  %v359 = vpack.c.b16 %v305, %v304
  %v360 = vpack.c.b16 %v307, %v306
  %v361 = vpack.c.b16 %v309, %v308
  %v362 = vpack.c.b16 %v311, %v310
  %v363 = vpack.c.b16 %v313, %v312
  %v364 = vpack.c.b16 %v315, %v314
  %v365 = vpack.c.b16 %v317, %v316
  %v366 = vpack.c.b16 %v319, %v318
  %v367 = vpack.c.b16 %v321, %v320
  %v368 = vpack.c.b16 %v323, %v322
  %v369 = vpack.c.b16 %v325, %v324
  %v370 = vpack.c.b16 %v327, %v326
  %v371 = vpack.c.b16 %v329, %v328
  %v372 = vpack.c.b16 %v331, %v330
  %v373 = vpack.c.b16 %v333, %v332
  %v374 = vpack.c.b16 %v335, %v334
  %v375 = vpack.c.b16 %v337, %v336
  %v376 = vpack.c.b16 %v339, %v338
  %v377 = vpack.c.b16 %v341, %v340
  %v378 = vpack.c.b16 %v343, %v342
  %v379 = vpack.c.b16 %v345, %v344
  %v380 = vpack.c.b16 %v347, %v346
  %v381 = vpack.c.b16 %v349, %v348
  %414 = vmatpush.bf16.msra.mxu0 %v357
  %415 = vmatpush.bf16.msra.mxu0 %v356
  %416 = vmatpush.bf16.msra.mxu0 %v355
  %417 = vmatpush.bf16.msra.mxu0 %v354
  %418 = vmatpush.bf16.msra.mxu0 %v353
  %419 = vmatpush.bf16.msra.mxu0 %v352
  %420 = vmatpush.bf16.msra.mxu0 %v351
  %421 = vmatpush.bf16.msra.mxu0 %v350
  %422 = vmatmul.bf16.gmra.mxu0 %v190
  %v423 = vpop.f32.mrf.mxu0
  %v424 = vadd.f32 %v105, %v423
  %v425 = vpop.f32.mrf.mxu0
  %v426 = vadd.f32 %v110, %v425
  %427 = vmatmul.bf16.gmra.mxu0 %v194
  %v428 = vpop.f32.mrf.mxu0
  %v429 = vadd.f32 %v115, %v428
  %v430 = vpop.f32.mrf.mxu0
  %v431 = vadd.f32 %v120, %v430
  %432 = vmatmul.bf16.gmra.mxu0 %v198
  %v433 = vpop.f32.mrf.mxu0
  %v434 = vadd.f32 %v125, %v433
  %v435 = vpop.f32.mrf.mxu0
  %v436 = vadd.f32 %v130, %v435
  %437 = vmatmul.bf16.gmra.mxu0 %v202
  %v438 = vpop.f32.mrf.mxu0
  %v439 = vadd.f32 %v135, %v438
  %v440 = vpop.f32.mrf.mxu0
  %v441 = vadd.f32 %v140, %v440
  %442 = vdwg.mxu0
  %443 = vmatpush.bf16.msra.mxu0 %v365
  %444 = vmatpush.bf16.msra.mxu0 %v364
  %445 = vmatpush.bf16.msra.mxu0 %v363
  %446 = vmatpush.bf16.msra.mxu0 %v362
  %447 = vmatpush.bf16.msra.mxu0 %v361
  %448 = vmatpush.bf16.msra.mxu0 %v360
  %449 = vmatpush.bf16.msra.mxu0 %v359
  %450 = vmatpush.bf16.msra.mxu0 %v358
  %451 = vmatmul.bf16.gmra.mxu0 %v191
  %v452 = vpop.f32.mrf.mxu0
  %v453 = vadd.f32 %v424, %v452
  %v454 = vpop.f32.mrf.mxu0
  %v455 = vadd.f32 %v426, %v454
  %456 = vmatmul.bf16.gmra.mxu0 %v195
  %v457 = vpop.f32.mrf.mxu0
  %v458 = vadd.f32 %v429, %v457
  %v459 = vpop.f32.mrf.mxu0
  %v460 = vadd.f32 %v431, %v459
  %461 = vmatmul.bf16.gmra.mxu0 %v199
  %v462 = vpop.f32.mrf.mxu0
  %v463 = vadd.f32 %v434, %v462
  %v464 = vpop.f32.mrf.mxu0
  %v465 = vadd.f32 %v436, %v464
  %466 = vmatmul.bf16.gmra.mxu0 %v203
  %v467 = vpop.f32.mrf.mxu0
  %v468 = vadd.f32 %v439, %v467
  %v469 = vpop.f32.mrf.mxu0
  %v470 = vadd.f32 %v441, %v469
  %471 = vdwg.mxu0
  %472 = vmatpush.bf16.msra.mxu0 %v373
  %473 = vmatpush.bf16.msra.mxu0 %v372
  %474 = vmatpush.bf16.msra.mxu0 %v371
  %475 = vmatpush.bf16.msra.mxu0 %v370
  %476 = vmatpush.bf16.msra.mxu0 %v369
  %477 = vmatpush.bf16.msra.mxu0 %v368
  %478 = vmatpush.bf16.msra.mxu0 %v367
  %479 = vmatpush.bf16.msra.mxu0 %v366
  %480 = vmatmul.bf16.gmra.mxu0 %v192
  %v481 = vpop.f32.mrf.mxu0
  %v482 = vadd.f32 %v453, %v481
  %v483 = vpop.f32.mrf.mxu0
  %v484 = vadd.f32 %v455, %v483
  %485 = vmatmul.bf16.gmra.mxu0 %v196
  %v486 = vpop.f32.mrf.mxu0
  %v487 = vadd.f32 %v458, %v486
  %v488 = vpop.f32.mrf.mxu0
  %v489 = vadd.f32 %v460, %v488
  %490 = vmatmul.bf16.gmra.mxu0 %v200
  %v491 = vpop.f32.mrf.mxu0
  %v492 = vadd.f32 %v463, %v491
  %v493 = vpop.f32.mrf.mxu0
  %v494 = vadd.f32 %v465, %v493
  %495 = vmatmul.bf16.gmra.mxu0 %v204
  %v496 = vpop.f32.mrf.mxu0
  %v497 = vadd.f32 %v468, %v496
  %v498 = vpop.f32.mrf.mxu0
  %v499 = vadd.f32 %v470, %v498
  %500 = vdwg.mxu0
  %501 = vmatpush.bf16.msra.mxu0 %v381
  %502 = vmatpush.bf16.msra.mxu0 %v380
  %503 = vmatpush.bf16.msra.mxu0 %v379
  %504 = vmatpush.bf16.msra.mxu0 %v378
  %505 = vmatpush.bf16.msra.mxu0 %v377
  %506 = vmatpush.bf16.msra.mxu0 %v376
  %507 = vmatpush.bf16.msra.mxu0 %v375
  %508 = vmatpush.bf16.msra.mxu0 %v374
  %509 = vmatmul.bf16.gmra.mxu0 %v193
  %v510 = vpop.f32.mrf.mxu0
  %v511 = vadd.f32 %v482, %v510
  %v512 = vpop.f32.mrf.mxu0
  %v513 = vadd.f32 %v484, %v512
  %514 = vmatmul.bf16.gmra.mxu0 %v197
  %v515 = vpop.f32.mrf.mxu0
  %v516 = vadd.f32 %v487, %v515
  %v517 = vpop.f32.mrf.mxu0
  %v518 = vadd.f32 %v489, %v517
  %519 = vmatmul.bf16.gmra.mxu0 %v201
  %v520 = vpop.f32.mrf.mxu0
  %v521 = vadd.f32 %v492, %v520
  %v522 = vpop.f32.mrf.mxu0
  %v523 = vadd.f32 %v494, %v522
  %524 = vmatmul.bf16.gmra.mxu0 %v205
  %v525 = vpop.f32.mrf.mxu0
  %v526 = vadd.f32 %v497, %v525
  %v527 = vpop.f32.mrf.mxu0
  %v528 = vadd.f32 %v499, %v527
  %529 = vdwg.mxu0
  %vm530 = vcmp.gt.f32.partialorder %v511, 0.0
  %vm531 = vcmp.gt.f32.partialorder %v513, 0.0
  %vm532 = vcmp.gt.f32.partialorder %v516, 0.0
  %vm533 = vcmp.gt.f32.partialorder %v518, 0.0
  %vm534 = vcmp.gt.f32.partialorder %v521, 0.0
  %vm535 = vcmp.gt.f32.partialorder %v523, 0.0
  %vm536 = vcmp.gt.f32.partialorder %v526, 0.0
  %vm537 = vcmp.gt.f32.partialorder %v528, 0.0
  %v538 = vmul.f32 %v511, 0.2
  %v539 = vmul.f32 %v513, 0.2
  %v540 = vmul.f32 %v516, 0.2
  %v541 = vmul.f32 %v518, 0.2
  %v542 = vmul.f32 %v521, 0.2
  %v543 = vmul.f32 %v523, 0.2
  %v544 = vmul.f32 %v526, 0.2
  %v545 = vmul.f32 %v528, 0.2
  %v546 = vsel %vm530, %v511, %v538
  %v547 = vsel %vm531, %v513, %v539
  %v548 = vsel %vm532, %v516, %v540
  %v549 = vsel %vm533, %v518, %v541
  %v550 = vsel %vm534, %v521, %v542
  %v551 = vsel %vm535, %v523, %v543
  %v552 = vsel %vm536, %v526, %v544
  %v553 = vsel %vm537, %v528, %v545
  %v554 = vpack.c.bf16 %v546, %v546
  %v555 = vpack.c.bf16 %v547, %v547
  %v556 = vpack.c.bf16 %v548, %v548
  %v557 = vpack.c.bf16 %v549, %v549
  %v558 = vpack.c.bf16 %v550, %v550
  %v559 = vpack.c.bf16 %v551, %v551
  %v560 = vpack.c.bf16 %v552, %v552
  %v561 = vpack.c.bf16 %v553, %v553
  %562 = vst [vmem:[%s3] sm:$0xf] %v554
  %563 = vst [vmem:[%s3 + $0x4] sm:$0xf] %v555
  %564 = vst [vmem:[%s3 + $0x8] sm:$0xf] %v556
  %565 = vst [vmem:[%s3 + $0xc] sm:$0xf] %v557
  %566 = vst [vmem:[%s3 + $0x10] sm:$0xf] %v558
  %567 = vst [vmem:[%s3 + $0x14] sm:$0xf] %v559
  %568 = vst [vmem:[%s3 + $0x18] sm:$0xf] %v560
  %569 = vst [vmem:[%s3 + $0x1c] sm:$0xf] %v561
  // Predicated region
  $region14: #{discriminator_forward.8} parent=0 // pred_check
    _
  $region15: #{discriminator_forward.8} parent=0 // pred_check_branch
    %571 = sbr.rel (0) target = $region17
  $region16: #{discriminator_forward.8} parent=0 // pred_region
    _
  $region17: #{discriminator_forward.8} parent=0 // pred_fallthru
    _
  // Predicated region
  $region18: #{discriminator_forward.8} parent=0 // pred_check
    _
  $region19: #{discriminator_forward.8} parent=0 // pred_check_branch
    %573 = sbr.rel (0) target = $region21
  $region20: #{discriminator_forward.8} parent=0 // pred_region
    _
  $region21: #{discriminator_forward.8} parent=0 // pred_fallthru
    _

// kernel: discriminator_forward.9
$region0: #{discriminator_forward.9}
  #allocation0 [shape = 'u32[]', space=smem, size = 0x4, offset = 0x4, fixed_abs, tag = 'smem constant byte address 0x4 - core index']
  #allocation1 [shape = 'u32[72,128]{1,0:T(1,128)}', space=vmem, size = 0x9000, scoped, tag = 'internal scratch']
  %s0 = inlined_call_operand.vmem [shape: bf16[128,1024], index: 0, kind: input, shape index: {}]
  %s1 = inlined_call_operand.vmem [shape: bf16[1024,128], index: 1, kind: input, shape index: {}]
  %s2 = inlined_call_operand.vmem [shape: f32[128,1], index: 2, kind: input, shape index: {}]
  %s3 = inlined_call_operand.vmem [shape: bf16[128,128], index: 3, kind: output, shape index: {}]
  %s4 = sld [smem:[#allocation0]]
  $region22: #{discriminator_forward.9} parent=0
    _
  %s6 = ssub.s32 1, %s4
  %s7 = scalar_select 0, %s6, %s4
  // Predicated region
  $region2: #{discriminator_forward.9} parent=0 // pred_check
    _
  $region3: #{discriminator_forward.9} parent=0 // pred_check_branch
    %9 = sbr.rel (0) target = $region5
  $region4: #{discriminator_forward.9} parent=0 // pred_region
    _
  $region5: #{discriminator_forward.9} parent=0 // pred_fallthru
    _
  // Predicated region
  $region6: #{discriminator_forward.9} parent=0 // pred_check
    _
  $region7: #{discriminator_forward.9} parent=0 // pred_check_branch
    %11 = sbr.rel (0) target = $region9
  $region8: #{discriminator_forward.9} parent=0 // pred_region
    _
  $region9: #{discriminator_forward.9} parent=0 // pred_fallthru
    _
  // Predicated region
  $region10: #{discriminator_forward.9} parent=0 // pred_check
    _
  $region11: #{discriminator_forward.9} parent=0 // pred_check_branch
    %13 = sbr.rel (0) target = $region13
  $region12: #{discriminator_forward.9} parent=0 // pred_region
    _
  $region13: #{discriminator_forward.9} parent=0 // pred_fallthru
    _
  %v14 = vld [vmem:[%s0] sm:$0xff]
  %v15 = vld [vmem:[%s0 + $0x8] sm:$0xff]
  %v16 = vld [vmem:[%s0 + $0x10] sm:$0xff]
  %v17 = vld [vmem:[%s0 + $0x18] sm:$0xff]
  %v18 = vld [vmem:[%s0 + $0x20] sm:$0xff]
  %v19 = vld [vmem:[%s0 + $0x28] sm:$0xff]
  %v20 = vld [vmem:[%s0 + $0x30] sm:$0xff]
  %v21 = vld [vmem:[%s0 + $0x38] sm:$0xff]
  %v22 = vld [vmem:[%s0 + $0x40] sm:$0xff]
  %v23 = vld [vmem:[%s0 + $0x48] sm:$0xff]
  %v24 = vld [vmem:[%s0 + $0x50] sm:$0xff]
  %v25 = vld [vmem:[%s0 + $0x58] sm:$0xff]
  %v26 = vld [vmem:[%s0 + $0x60] sm:$0xff]
  %v27 = vld [vmem:[%s0 + $0x68] sm:$0xff]
  %v28 = vld [vmem:[%s0 + $0x70] sm:$0xff]
  %v29 = vld [vmem:[%s0 + $0x78] sm:$0xff]
  %v30 = vld [vmem:[%s0 + $0x80] sm:$0xff]
  %v31 = vld [vmem:[%s0 + $0x88] sm:$0xff]
  %v32 = vld [vmem:[%s0 + $0x90] sm:$0xff]
  %v33 = vld [vmem:[%s0 + $0x98] sm:$0xff]
  %v34 = vld [vmem:[%s0 + $0xa0] sm:$0xff]
  %v35 = vld [vmem:[%s0 + $0xa8] sm:$0xff]
  %v36 = vld [vmem:[%s0 + $0xb0] sm:$0xff]
  %v37 = vld [vmem:[%s0 + $0xb8] sm:$0xff]
  %v38 = vld [vmem:[%s0 + $0xc0] sm:$0xff]
  %v39 = vld [vmem:[%s0 + $0xc8] sm:$0xff]
  %v40 = vld [vmem:[%s0 + $0xd0] sm:$0xff]
  %v41 = vld [vmem:[%s0 + $0xd8] sm:$0xff]
  %v42 = vld [vmem:[%s0 + $0xe0] sm:$0xff]
  %v43 = vld [vmem:[%s0 + $0xe8] sm:$0xff]
  %v44 = vld [vmem:[%s0 + $0xf0] sm:$0xff]
  %v45 = vld [vmem:[%s0 + $0xf8] sm:$0xff]
  %v46 = vld [vmem:[%s0 + $0x100] sm:$0xff]
  %v47 = vld [vmem:[%s0 + $0x108] sm:$0xff]
  %v48 = vld [vmem:[%s0 + $0x110] sm:$0xff]
  %v49 = vld [vmem:[%s0 + $0x118] sm:$0xff]
  %v50 = vld [vmem:[%s0 + $0x120] sm:$0xff]
  %v51 = vld [vmem:[%s0 + $0x128] sm:$0xff]
  %v52 = vld [vmem:[%s0 + $0x130] sm:$0xff]
  %v53 = vld [vmem:[%s0 + $0x138] sm:$0xff]
  %v54 = vld [vmem:[%s0 + $0x140] sm:$0xff]
  %v55 = vld [vmem:[%s0 + $0x148] sm:$0xff]
  %v56 = vld [vmem:[%s0 + $0x150] sm:$0xff]
  %v57 = vld [vmem:[%s0 + $0x158] sm:$0xff]
  %v58 = vld [vmem:[%s0 + $0x160] sm:$0xff]
  %v59 = vld [vmem:[%s0 + $0x168] sm:$0xff]
  %v60 = vld [vmem:[%s0 + $0x170] sm:$0xff]
  %v61 = vld [vmem:[%s0 + $0x178] sm:$0xff]
  %v62 = vld [vmem:[%s0 + $0x180] sm:$0xff]
  %v63 = vld [vmem:[%s0 + $0x188] sm:$0xff]
  %v64 = vld [vmem:[%s0 + $0x190] sm:$0xff]
  %v65 = vld [vmem:[%s0 + $0x198] sm:$0xff]
  %v66 = vld [vmem:[%s0 + $0x1a0] sm:$0xff]
  %v67 = vld [vmem:[%s0 + $0x1a8] sm:$0xff]
  %v68 = vld [vmem:[%s0 + $0x1b0] sm:$0xff]
  %v69 = vld [vmem:[%s0 + $0x1b8] sm:$0xff]
  %v70 = vld [vmem:[%s0 + $0x1c0] sm:$0xff]
  %v71 = vld [vmem:[%s0 + $0x1c8] sm:$0xff]
  %v72 = vld [vmem:[%s0 + $0x1d0] sm:$0xff]
  %v73 = vld [vmem:[%s0 + $0x1d8] sm:$0xff]
  %v74 = vld [vmem:[%s0 + $0x1e0] sm:$0xff]
  %v75 = vld [vmem:[%s0 + $0x1e8] sm:$0xff]
  %v76 = vld [vmem:[%s0 + $0x1f0] sm:$0xff]
  %v77 = vld [vmem:[%s0 + $0x1f8] sm:$0xff]
  %v78 = vld [vmem:[%s1] sm:$0xf]
  %v79 = vld [vmem:[%s1 + $0x4] sm:$0xf]
  %v80 = vld [vmem:[%s1 + $0x8] sm:$0xf]
  %v81 = vld [vmem:[%s1 + $0xc] sm:$0xf]
  %v82 = vld [vmem:[%s1 + $0x10] sm:$0xf]
  %v83 = vld [vmem:[%s1 + $0x14] sm:$0xf]
  %v84 = vld [vmem:[%s1 + $0x18] sm:$0xf]
  %v85 = vld [vmem:[%s1 + $0x1c] sm:$0xf]
  %v86 = vld [vmem:[%s1 + $0x20] sm:$0xf]
  %v87 = vld [vmem:[%s1 + $0x24] sm:$0xf]
  %v88 = vld [vmem:[%s1 + $0x28] sm:$0xf]
  %v89 = vld [vmem:[%s1 + $0x2c] sm:$0xf]
  %v90 = vld [vmem:[%s1 + $0x30] sm:$0xf]
  %v91 = vld [vmem:[%s1 + $0x34] sm:$0xf]
  %v92 = vld [vmem:[%s1 + $0x38] sm:$0xf]
  %v93 = vld [vmem:[%s1 + $0x3c] sm:$0xf]
  %v94 = vld [vmem:[%s1 + $0x40] sm:$0xf]
  %v95 = vld [vmem:[%s1 + $0x44] sm:$0xf]
  %v96 = vld [vmem:[%s1 + $0x48] sm:$0xf]
  %v97 = vld [vmem:[%s1 + $0x4c] sm:$0xf]
  %v98 = vld [vmem:[%s1 + $0x50] sm:$0xf]
  %v99 = vld [vmem:[%s1 + $0x54] sm:$0xf]
  %v100 = vld [vmem:[%s1 + $0x58] sm:$0xf]
  %v101 = vld [vmem:[%s1 + $0x5c] sm:$0xf]
  %v102 = vld [vmem:[%s1 + $0x60] sm:$0xf]
  %v103 = vld [vmem:[%s1 + $0x64] sm:$0xf]
  %v104 = vld [vmem:[%s1 + $0x68] sm:$0xf]
  %v105 = vld [vmem:[%s1 + $0x6c] sm:$0xf]
  %v106 = vld [vmem:[%s1 + $0x70] sm:$0xf]
  %v107 = vld [vmem:[%s1 + $0x74] sm:$0xf]
  %v108 = vld [vmem:[%s1 + $0x78] sm:$0xf]
  %v109 = vld [vmem:[%s1 + $0x7c] sm:$0xf]
  %v110 = vld [vmem:[%s1 + $0x80] sm:$0xf]
  %v111 = vld [vmem:[%s1 + $0x84] sm:$0xf]
  %v112 = vld [vmem:[%s1 + $0x88] sm:$0xf]
  %v113 = vld [vmem:[%s1 + $0x8c] sm:$0xf]
  %v114 = vld [vmem:[%s1 + $0x90] sm:$0xf]
  %v115 = vld [vmem:[%s1 + $0x94] sm:$0xf]
  %v116 = vld [vmem:[%s1 + $0x98] sm:$0xf]
  %v117 = vld [vmem:[%s1 + $0x9c] sm:$0xf]
  %v118 = vld [vmem:[%s1 + $0xa0] sm:$0xf]
  %v119 = vld [vmem:[%s1 + $0xa4] sm:$0xf]
  %v120 = vld [vmem:[%s1 + $0xa8] sm:$0xf]
  %v121 = vld [vmem:[%s1 + $0xac] sm:$0xf]
  %v122 = vld [vmem:[%s1 + $0xb0] sm:$0xf]
  %v123 = vld [vmem:[%s1 + $0xb4] sm:$0xf]
  %v124 = vld [vmem:[%s1 + $0xb8] sm:$0xf]
  %v125 = vld [vmem:[%s1 + $0xbc] sm:$0xf]
  %v126 = vld [vmem:[%s1 + $0xc0] sm:$0xf]
  %v127 = vld [vmem:[%s1 + $0xc4] sm:$0xf]
  %v128 = vld [vmem:[%s1 + $0xc8] sm:$0xf]
  %v129 = vld [vmem:[%s1 + $0xcc] sm:$0xf]
  %v130 = vld [vmem:[%s1 + $0xd0] sm:$0xf]
  %v131 = vld [vmem:[%s1 + $0xd4] sm:$0xf]
  %v132 = vld [vmem:[%s1 + $0xd8] sm:$0xf]
  %v133 = vld [vmem:[%s1 + $0xdc] sm:$0xf]
  %v134 = vld [vmem:[%s1 + $0xe0] sm:$0xf]
  %v135 = vld [vmem:[%s1 + $0xe4] sm:$0xf]
  %v136 = vld [vmem:[%s1 + $0xe8] sm:$0xf]
  %v137 = vld [vmem:[%s1 + $0xec] sm:$0xf]
  %v138 = vld [vmem:[%s1 + $0xf0] sm:$0xf]
  %v139 = vld [vmem:[%s1 + $0xf4] sm:$0xf]
  %v140 = vld [vmem:[%s1 + $0xf8] sm:$0xf]
  %v141 = vld [vmem:[%s1 + $0xfc] sm:$0xf]
  %v142 = vld [vmem:[%s1 + $0x100] sm:$0xf]
  %v143 = vld [vmem:[%s1 + $0x104] sm:$0xf]
  %v144 = vld [vmem:[%s1 + $0x108] sm:$0xf]
  %v145 = vld [vmem:[%s1 + $0x10c] sm:$0xf]
  %v146 = vld [vmem:[%s1 + $0x110] sm:$0xf]
  %v147 = vld [vmem:[%s1 + $0x114] sm:$0xf]
  %v148 = vld [vmem:[%s1 + $0x118] sm:$0xf]
  %v149 = vld [vmem:[%s1 + $0x11c] sm:$0xf]
  %v150 = vld [vmem:[%s1 + $0x120] sm:$0xf]
  %v151 = vld [vmem:[%s1 + $0x124] sm:$0xf]
  %v152 = vld [vmem:[%s1 + $0x128] sm:$0xf]
  %v153 = vld [vmem:[%s1 + $0x12c] sm:$0xf]
  %v154 = vld [vmem:[%s1 + $0x130] sm:$0xf]
  %v155 = vld [vmem:[%s1 + $0x134] sm:$0xf]
  %v156 = vld [vmem:[%s1 + $0x138] sm:$0xf]
  %v157 = vld [vmem:[%s1 + $0x13c] sm:$0xf]
  %v158 = vld [vmem:[%s1 + $0x140] sm:$0xf]
  %v159 = vld [vmem:[%s1 + $0x144] sm:$0xf]
  %v160 = vld [vmem:[%s1 + $0x148] sm:$0xf]
  %v161 = vld [vmem:[%s1 + $0x14c] sm:$0xf]
  %v162 = vld [vmem:[%s1 + $0x150] sm:$0xf]
  %v163 = vld [vmem:[%s1 + $0x154] sm:$0xf]
  %v164 = vld [vmem:[%s1 + $0x158] sm:$0xf]
  %v165 = vld [vmem:[%s1 + $0x15c] sm:$0xf]
  %v166 = vld [vmem:[%s1 + $0x160] sm:$0xf]
  %v167 = vld [vmem:[%s1 + $0x164] sm:$0xf]
  %v168 = vld [vmem:[%s1 + $0x168] sm:$0xf]
  %v169 = vld [vmem:[%s1 + $0x16c] sm:$0xf]
  %v170 = vld [vmem:[%s1 + $0x170] sm:$0xf]
  %v171 = vld [vmem:[%s1 + $0x174] sm:$0xf]
  %v172 = vld [vmem:[%s1 + $0x178] sm:$0xf]
  %v173 = vld [vmem:[%s1 + $0x17c] sm:$0xf]
  %v174 = vld [vmem:[%s1 + $0x180] sm:$0xf]
  %v175 = vld [vmem:[%s1 + $0x184] sm:$0xf]
  %v176 = vld [vmem:[%s1 + $0x188] sm:$0xf]
  %v177 = vld [vmem:[%s1 + $0x18c] sm:$0xf]
  %v178 = vld [vmem:[%s1 + $0x190] sm:$0xf]
  %v179 = vld [vmem:[%s1 + $0x194] sm:$0xf]
  %v180 = vld [vmem:[%s1 + $0x198] sm:$0xf]
  %v181 = vld [vmem:[%s1 + $0x19c] sm:$0xf]
  %v182 = vld [vmem:[%s1 + $0x1a0] sm:$0xf]
  %v183 = vld [vmem:[%s1 + $0x1a4] sm:$0xf]
  %v184 = vld [vmem:[%s1 + $0x1a8] sm:$0xf]
  %v185 = vld [vmem:[%s1 + $0x1ac] sm:$0xf]
  %v186 = vld [vmem:[%s1 + $0x1b0] sm:$0xf]
  %v187 = vld [vmem:[%s1 + $0x1b4] sm:$0xf]
  %v188 = vld [vmem:[%s1 + $0x1b8] sm:$0xf]
  %v189 = vld [vmem:[%s1 + $0x1bc] sm:$0xf]
  %v190 = vld [vmem:[%s1 + $0x1c0] sm:$0xf]
  %v191 = vld [vmem:[%s1 + $0x1c4] sm:$0xf]
  %v192 = vld [vmem:[%s1 + $0x1c8] sm:$0xf]
  %v193 = vld [vmem:[%s1 + $0x1cc] sm:$0xf]
  %v194 = vld [vmem:[%s1 + $0x1d0] sm:$0xf]
  %v195 = vld [vmem:[%s1 + $0x1d4] sm:$0xf]
  %v196 = vld [vmem:[%s1 + $0x1d8] sm:$0xf]
  %v197 = vld [vmem:[%s1 + $0x1dc] sm:$0xf]
  %v198 = vld [vmem:[%s1 + $0x1e0] sm:$0xf]
  %v199 = vld [vmem:[%s1 + $0x1e4] sm:$0xf]
  %v200 = vld [vmem:[%s1 + $0x1e8] sm:$0xf]
  %v201 = vld [vmem:[%s1 + $0x1ec] sm:$0xf]
  %v202 = vld [vmem:[%s1 + $0x1f0] sm:$0xf]
  %v203 = vld [vmem:[%s1 + $0x1f4] sm:$0xf]
  %v204 = vld [vmem:[%s1 + $0x1f8] sm:$0xf]
  %v205 = vld [vmem:[%s1 + $0x1fc] sm:$0xf]
  %v206 = vld [vmem:[%s2] sm:$0xff]
  %v207 = vld [vmem:[%s2 + $0x8] sm:$0xff]
  %v208 = vld [vmem:[%s2 + $0x10] sm:$0xff]
  %v209 = vld [vmem:[%s2 + $0x18] sm:$0xff]
  %v210 = vld [vmem:[%s2 + $0x20] sm:$0xff]
  %v211 = vld [vmem:[%s2 + $0x28] sm:$0xff]
  %v212 = vld [vmem:[%s2 + $0x30] sm:$0xff]
  %v213 = vld [vmem:[%s2 + $0x38] sm:$0xff]
  %v214 = vld [vmem:[%s2 + $0x40] sm:$0xff]
  %v215 = vld [vmem:[%s2 + $0x48] sm:$0xff]
  %v216 = vld [vmem:[%s2 + $0x50] sm:$0xff]
  %v217 = vld [vmem:[%s2 + $0x58] sm:$0xff]
  %v218 = vld [vmem:[%s2 + $0x60] sm:$0xff]
  %v219 = vld [vmem:[%s2 + $0x68] sm:$0xff]
  %v220 = vld [vmem:[%s2 + $0x70] sm:$0xff]
  %v221 = vld [vmem:[%s2 + $0x78] sm:$0xff]
  %223 = vset.pattern.permute.xlu0 0
  %224 = vperm.xlu0 %223, %v206
  %v225 = vpop.permute.xlu0 %224
  %228 = vset.pattern.permute.xlu0 0
  %229 = vperm.xlu0 %228, %v207
  %v230 = vpop.permute.xlu0 %229
  %233 = vset.pattern.permute.xlu0 0
  %234 = vperm.xlu0 %233, %v208
  %v235 = vpop.permute.xlu0 %234
  %238 = vset.pattern.permute.xlu0 0
  %239 = vperm.xlu0 %238, %v209
  %v240 = vpop.permute.xlu0 %239
  %243 = vset.pattern.permute.xlu0 0
  %244 = vperm.xlu0 %243, %v210
  %v245 = vpop.permute.xlu0 %244
  %248 = vset.pattern.permute.xlu0 0
  %249 = vperm.xlu0 %248, %v211
  %v250 = vpop.permute.xlu0 %249
  %253 = vset.pattern.permute.xlu0 0
  %254 = vperm.xlu0 %253, %v212
  %v255 = vpop.permute.xlu0 %254
  %258 = vset.pattern.permute.xlu0 0
  %259 = vperm.xlu0 %258, %v213
  %v260 = vpop.permute.xlu0 %259
  %263 = vset.pattern.permute.xlu0 0
  %264 = vperm.xlu0 %263, %v214
  %v265 = vpop.permute.xlu0 %264
  %268 = vset.pattern.permute.xlu0 0
  %269 = vperm.xlu0 %268, %v215
  %v270 = vpop.permute.xlu0 %269
  %273 = vset.pattern.permute.xlu0 0
  %274 = vperm.xlu0 %273, %v216
  %v275 = vpop.permute.xlu0 %274
  %278 = vset.pattern.permute.xlu0 0
  %279 = vperm.xlu0 %278, %v217
  %v280 = vpop.permute.xlu0 %279
  %283 = vset.pattern.permute.xlu0 0
  %284 = vperm.xlu0 %283, %v218
  %v285 = vpop.permute.xlu0 %284
  %288 = vset.pattern.permute.xlu0 0
  %289 = vperm.xlu0 %288, %v219
  %v290 = vpop.permute.xlu0 %289
  %293 = vset.pattern.permute.xlu0 0
  %294 = vperm.xlu0 %293, %v220
  %v295 = vpop.permute.xlu0 %294
  %298 = vset.pattern.permute.xlu0 0
  %299 = vperm.xlu0 %298, %v221
  %v300 = vpop.permute.xlu0 %299
  %v366 = vunpack.c.l.b16 %v14
  %v367 = vunpack.c.h.b16 %v14
  %v368 = vunpack.c.l.b16 %v15
  %v369 = vunpack.c.h.b16 %v15
  %v370 = vunpack.c.l.b16 %v16
  %v371 = vunpack.c.h.b16 %v16
  %v372 = vunpack.c.l.b16 %v17
  %v373 = vunpack.c.h.b16 %v17
  %v374 = vunpack.c.l.b16 %v18
  %v375 = vunpack.c.h.b16 %v18
  %v376 = vunpack.c.l.b16 %v19
  %v377 = vunpack.c.h.b16 %v19
  %v378 = vunpack.c.l.b16 %v20
  %v379 = vunpack.c.h.b16 %v20
  %v380 = vunpack.c.l.b16 %v21
  %v381 = vunpack.c.h.b16 %v21
  %v382 = vunpack.c.l.b16 %v22
  %v383 = vunpack.c.h.b16 %v22
  %v384 = vunpack.c.l.b16 %v23
  %v385 = vunpack.c.h.b16 %v23
  %v386 = vunpack.c.l.b16 %v24
  %v387 = vunpack.c.h.b16 %v24
  %v388 = vunpack.c.l.b16 %v25
  %v389 = vunpack.c.h.b16 %v25
  %v390 = vunpack.c.l.b16 %v26
  %v391 = vunpack.c.h.b16 %v26
  %v392 = vunpack.c.l.b16 %v27
  %v393 = vunpack.c.h.b16 %v27
  %v394 = vunpack.c.l.b16 %v28
  %v395 = vunpack.c.h.b16 %v28
  %v396 = vunpack.c.l.b16 %v29
  %v397 = vunpack.c.h.b16 %v29
  %v398 = vunpack.c.l.b16 %v30
  %v399 = vunpack.c.h.b16 %v30
  %v400 = vunpack.c.l.b16 %v31
  %v401 = vunpack.c.h.b16 %v31
  %v402 = vunpack.c.l.b16 %v32
  %v403 = vunpack.c.h.b16 %v32
  %v404 = vunpack.c.l.b16 %v33
  %v405 = vunpack.c.h.b16 %v33
  %v406 = vunpack.c.l.b16 %v34
  %v407 = vunpack.c.h.b16 %v34
  %v408 = vunpack.c.l.b16 %v35
  %v409 = vunpack.c.h.b16 %v35
  %v410 = vunpack.c.l.b16 %v36
  %v411 = vunpack.c.h.b16 %v36
  %v412 = vunpack.c.l.b16 %v37
  %v413 = vunpack.c.h.b16 %v37
  %v414 = vunpack.c.l.b16 %v38
  %v415 = vunpack.c.h.b16 %v38
  %v416 = vunpack.c.l.b16 %v39
  %v417 = vunpack.c.h.b16 %v39
  %v418 = vunpack.c.l.b16 %v40
  %v419 = vunpack.c.h.b16 %v40
  %v420 = vunpack.c.l.b16 %v41
  %v421 = vunpack.c.h.b16 %v41
  %v422 = vunpack.c.l.b16 %v42
  %v423 = vunpack.c.h.b16 %v42
  %v424 = vunpack.c.l.b16 %v43
  %v425 = vunpack.c.h.b16 %v43
  %v426 = vunpack.c.l.b16 %v44
  %v427 = vunpack.c.h.b16 %v44
  %v428 = vunpack.c.l.b16 %v45
  %v429 = vunpack.c.h.b16 %v45
  %v430 = vunpack.c.l.b16 %v46
  %v431 = vunpack.c.h.b16 %v46
  %v432 = vunpack.c.l.b16 %v47
  %v433 = vunpack.c.h.b16 %v47
  %v434 = vunpack.c.l.b16 %v48
  %v435 = vunpack.c.h.b16 %v48
  %v436 = vunpack.c.l.b16 %v49
  %v437 = vunpack.c.h.b16 %v49
  %v438 = vunpack.c.l.b16 %v50
  %v439 = vunpack.c.h.b16 %v50
  %v440 = vunpack.c.l.b16 %v51
  %v441 = vunpack.c.h.b16 %v51
  %v442 = vunpack.c.l.b16 %v52
  %v443 = vunpack.c.h.b16 %v52
  %v444 = vunpack.c.l.b16 %v53
  %v445 = vunpack.c.h.b16 %v53
  %v446 = vunpack.c.l.b16 %v54
  %v447 = vunpack.c.h.b16 %v54
  %v448 = vunpack.c.l.b16 %v55
  %v449 = vunpack.c.h.b16 %v55
  %v450 = vunpack.c.l.b16 %v56
  %v451 = vunpack.c.h.b16 %v56
  %v452 = vunpack.c.l.b16 %v57
  %v453 = vunpack.c.h.b16 %v57
  %v454 = vunpack.c.l.b16 %v58
  %v455 = vunpack.c.h.b16 %v58
  %v456 = vunpack.c.l.b16 %v59
  %v457 = vunpack.c.h.b16 %v59
  %v458 = vunpack.c.l.b16 %v60
  %v459 = vunpack.c.h.b16 %v60
  %v460 = vunpack.c.l.b16 %v61
  %v461 = vunpack.c.h.b16 %v61
  %v462 = vunpack.c.l.b16 %v62
  %v463 = vunpack.c.h.b16 %v62
  %v464 = vunpack.c.l.b16 %v63
  %v465 = vunpack.c.h.b16 %v63
  %v466 = vunpack.c.l.b16 %v64
  %v467 = vunpack.c.h.b16 %v64
  %v468 = vunpack.c.l.b16 %v65
  %v469 = vunpack.c.h.b16 %v65
  %v470 = vunpack.c.l.b16 %v66
  %v471 = vunpack.c.h.b16 %v66
  %v472 = vunpack.c.l.b16 %v67
  %v473 = vunpack.c.h.b16 %v67
  %v474 = vunpack.c.l.b16 %v68
  %v475 = vunpack.c.h.b16 %v68
  %v476 = vunpack.c.l.b16 %v69
  %v477 = vunpack.c.h.b16 %v69
  %v478 = vunpack.c.l.b16 %v70
  %v479 = vunpack.c.h.b16 %v70
  %v480 = vunpack.c.l.b16 %v71
  %v481 = vunpack.c.h.b16 %v71
  %v482 = vunpack.c.l.b16 %v72
  %v483 = vunpack.c.h.b16 %v72
  %v484 = vunpack.c.l.b16 %v73
  %v485 = vunpack.c.h.b16 %v73
  %v486 = vunpack.c.l.b16 %v74
  %v487 = vunpack.c.h.b16 %v74
  %v488 = vunpack.c.l.b16 %v75
  %v489 = vunpack.c.h.b16 %v75
  %v490 = vunpack.c.l.b16 %v76
  %v491 = vunpack.c.h.b16 %v76
  %v492 = vunpack.c.l.b16 %v77
  %v493 = vunpack.c.h.b16 %v77
  %v494 = vpack.c.b16 %v374, %v366
  %v495 = vpack.c.b16 %v375, %v367
  %v496 = vpack.c.b16 %v376, %v368
  %v497 = vpack.c.b16 %v377, %v369
  %v498 = vpack.c.b16 %v378, %v370
  %v499 = vpack.c.b16 %v379, %v371
  %v500 = vpack.c.b16 %v380, %v372
  %v501 = vpack.c.b16 %v381, %v373
  %v502 = vpack.c.b16 %v390, %v382
  %v503 = vpack.c.b16 %v391, %v383
  %v504 = vpack.c.b16 %v392, %v384
  %v505 = vpack.c.b16 %v393, %v385
  %v506 = vpack.c.b16 %v394, %v386
  %v507 = vpack.c.b16 %v395, %v387
  %v508 = vpack.c.b16 %v396, %v388
  %v509 = vpack.c.b16 %v397, %v389
  %v510 = vpack.c.b16 %v406, %v398
  %v511 = vpack.c.b16 %v407, %v399
  %v512 = vpack.c.b16 %v408, %v400
  %v513 = vpack.c.b16 %v409, %v401
  %v514 = vpack.c.b16 %v410, %v402
  %v515 = vpack.c.b16 %v411, %v403
  %v516 = vpack.c.b16 %v412, %v404
  %v517 = vpack.c.b16 %v413, %v405
  %v518 = vpack.c.b16 %v422, %v414
  %v519 = vpack.c.b16 %v423, %v415
  %v520 = vpack.c.b16 %v424, %v416
  %v521 = vpack.c.b16 %v425, %v417
  %v522 = vpack.c.b16 %v426, %v418
  %v523 = vpack.c.b16 %v427, %v419
  %v524 = vpack.c.b16 %v428, %v420
  %v525 = vpack.c.b16 %v429, %v421
  %v526 = vpack.c.b16 %v438, %v430
  %v527 = vpack.c.b16 %v439, %v431
  %v528 = vpack.c.b16 %v440, %v432
  %v529 = vpack.c.b16 %v441, %v433
  %v530 = vpack.c.b16 %v442, %v434
  %v531 = vpack.c.b16 %v443, %v435
  %v532 = vpack.c.b16 %v444, %v436
  %v533 = vpack.c.b16 %v445, %v437
  %v534 = vpack.c.b16 %v454, %v446
  %v535 = vpack.c.b16 %v455, %v447
  %v536 = vpack.c.b16 %v456, %v448
  %v537 = vpack.c.b16 %v457, %v449
  %v538 = vpack.c.b16 %v458, %v450
  %v539 = vpack.c.b16 %v459, %v451
  %v540 = vpack.c.b16 %v460, %v452
  %v541 = vpack.c.b16 %v461, %v453
  %v542 = vpack.c.b16 %v470, %v462
  %v543 = vpack.c.b16 %v471, %v463
  %v544 = vpack.c.b16 %v472, %v464
  %v545 = vpack.c.b16 %v473, %v465
  %v546 = vpack.c.b16 %v474, %v466
  %v547 = vpack.c.b16 %v475, %v467
  %v548 = vpack.c.b16 %v476, %v468
  %v549 = vpack.c.b16 %v477, %v469
  %v550 = vpack.c.b16 %v486, %v478
  %v551 = vpack.c.b16 %v487, %v479
  %v552 = vpack.c.b16 %v488, %v480
  %v553 = vpack.c.b16 %v489, %v481
  %v554 = vpack.c.b16 %v490, %v482
  %v555 = vpack.c.b16 %v491, %v483
  %v556 = vpack.c.b16 %v492, %v484
  %v557 = vpack.c.b16 %v493, %v485
  %v750 = vunpack.c.l.b16 %v78
  %v751 = vunpack.c.l.b16 %v79
  %v752 = vunpack.c.l.b16 %v80
  %v753 = vunpack.c.l.b16 %v81
  %v754 = vunpack.c.l.b16 %v82
  %v755 = vunpack.c.l.b16 %v83
  %v756 = vunpack.c.l.b16 %v84
  %v757 = vunpack.c.l.b16 %v85
  %v758 = vunpack.c.l.b16 %v86
  %v759 = vunpack.c.l.b16 %v87
  %v760 = vunpack.c.l.b16 %v88
  %v761 = vunpack.c.l.b16 %v89
  %v762 = vunpack.c.l.b16 %v90
  %v763 = vunpack.c.l.b16 %v91
  %v764 = vunpack.c.l.b16 %v92
  %v765 = vunpack.c.l.b16 %v93
  %v766 = vunpack.c.l.b16 %v94
  %v767 = vunpack.c.l.b16 %v95
  %v768 = vunpack.c.l.b16 %v96
  %v769 = vunpack.c.l.b16 %v97
  %v770 = vunpack.c.l.b16 %v98
  %v771 = vunpack.c.l.b16 %v99
  %v772 = vunpack.c.l.b16 %v100
  %v773 = vunpack.c.l.b16 %v101
  %v774 = vunpack.c.l.b16 %v102
  %v775 = vunpack.c.l.b16 %v103
  %v776 = vunpack.c.l.b16 %v104
  %v777 = vunpack.c.l.b16 %v105
  %v778 = vunpack.c.l.b16 %v106
  %v779 = vunpack.c.l.b16 %v107
  %v780 = vunpack.c.l.b16 %v108
  %v781 = vunpack.c.l.b16 %v109
  %v782 = vunpack.c.l.b16 %v110
  %v783 = vunpack.c.l.b16 %v111
  %v784 = vunpack.c.l.b16 %v112
  %v785 = vunpack.c.l.b16 %v113
  %v786 = vunpack.c.l.b16 %v114
  %v787 = vunpack.c.l.b16 %v115
  %v788 = vunpack.c.l.b16 %v116
  %v789 = vunpack.c.l.b16 %v117
  %v790 = vunpack.c.l.b16 %v118
  %v791 = vunpack.c.l.b16 %v119
  %v792 = vunpack.c.l.b16 %v120
  %v793 = vunpack.c.l.b16 %v121
  %v794 = vunpack.c.l.b16 %v122
  %v795 = vunpack.c.l.b16 %v123
  %v796 = vunpack.c.l.b16 %v124
  %v797 = vunpack.c.l.b16 %v125
  %v798 = vunpack.c.l.b16 %v126
  %v799 = vunpack.c.l.b16 %v127
  %v800 = vunpack.c.l.b16 %v128
  %v801 = vunpack.c.l.b16 %v129
  %v802 = vunpack.c.l.b16 %v130
  %v803 = vunpack.c.l.b16 %v131
  %v804 = vunpack.c.l.b16 %v132
  %v805 = vunpack.c.l.b16 %v133
  %v806 = vunpack.c.l.b16 %v134
  %v807 = vunpack.c.l.b16 %v135
  %v808 = vunpack.c.l.b16 %v136
  %v809 = vunpack.c.l.b16 %v137
  %v810 = vunpack.c.l.b16 %v138
  %v811 = vunpack.c.l.b16 %v139
  %v812 = vunpack.c.l.b16 %v140
  %v813 = vunpack.c.l.b16 %v141
  %v814 = vunpack.c.l.b16 %v142
  %v815 = vunpack.c.l.b16 %v143
  %v816 = vunpack.c.l.b16 %v144
  %v817 = vunpack.c.l.b16 %v145
  %v818 = vunpack.c.l.b16 %v146
  %v819 = vunpack.c.l.b16 %v147
  %v820 = vunpack.c.l.b16 %v148
  %v821 = vunpack.c.l.b16 %v149
  %v822 = vunpack.c.l.b16 %v150
  %v823 = vunpack.c.l.b16 %v151
  %v824 = vunpack.c.l.b16 %v152
  %v825 = vunpack.c.l.b16 %v153
  %v826 = vunpack.c.l.b16 %v154
  %v827 = vunpack.c.l.b16 %v155
  %v828 = vunpack.c.l.b16 %v156
  %v829 = vunpack.c.l.b16 %v157
  %v830 = vunpack.c.l.b16 %v158
  %v831 = vunpack.c.l.b16 %v159
  %v832 = vunpack.c.l.b16 %v160
  %v833 = vunpack.c.l.b16 %v161
  %v834 = vunpack.c.l.b16 %v162
  %v835 = vunpack.c.l.b16 %v163
  %v836 = vunpack.c.l.b16 %v164
  %v837 = vunpack.c.l.b16 %v165
  %v838 = vunpack.c.l.b16 %v166
  %v839 = vunpack.c.l.b16 %v167
  %v840 = vunpack.c.l.b16 %v168
  %v841 = vunpack.c.l.b16 %v169
  %v842 = vunpack.c.l.b16 %v170
  %v843 = vunpack.c.l.b16 %v171
  %v844 = vunpack.c.l.b16 %v172
  %v845 = vunpack.c.l.b16 %v173
  %v846 = vunpack.c.l.b16 %v174
  %v847 = vunpack.c.l.b16 %v175
  %v848 = vunpack.c.l.b16 %v176
  %v849 = vunpack.c.l.b16 %v177
  %v850 = vunpack.c.l.b16 %v178
  %v851 = vunpack.c.l.b16 %v179
  %v852 = vunpack.c.l.b16 %v180
  %v853 = vunpack.c.l.b16 %v181
  %v854 = vunpack.c.l.b16 %v182
  %v855 = vunpack.c.l.b16 %v183
  %v856 = vunpack.c.l.b16 %v184
  %v857 = vunpack.c.l.b16 %v185
  %v858 = vunpack.c.l.b16 %v186
  %v859 = vunpack.c.l.b16 %v187
  %v860 = vunpack.c.l.b16 %v188
  %v861 = vunpack.c.l.b16 %v189
  %v862 = vunpack.c.l.b16 %v190
  %v863 = vunpack.c.l.b16 %v191
  %v864 = vunpack.c.l.b16 %v192
  %v865 = vunpack.c.l.b16 %v193
  %v866 = vunpack.c.l.b16 %v194
  %v867 = vunpack.c.l.b16 %v195
  %v868 = vunpack.c.l.b16 %v196
  %v869 = vunpack.c.l.b16 %v197
  %v870 = vunpack.c.l.b16 %v198
  %v871 = vunpack.c.l.b16 %v199
  %v872 = vunpack.c.l.b16 %v200
  %v873 = vunpack.c.l.b16 %v201
  %v874 = vunpack.c.l.b16 %v202
  %v875 = vunpack.c.l.b16 %v203
  %v876 = vunpack.c.l.b16 %v204
  %v877 = vunpack.c.l.b16 %v205
  %v878 = vpack.c.b16 %v751, %v750
  %v879 = vpack.c.b16 %v753, %v752
  %v880 = vpack.c.b16 %v755, %v754
  %v881 = vpack.c.b16 %v757, %v756
  %v882 = vpack.c.b16 %v759, %v758
  %v883 = vpack.c.b16 %v761, %v760
  %v884 = vpack.c.b16 %v763, %v762
  %v885 = vpack.c.b16 %v765, %v764
  %v886 = vpack.c.b16 %v767, %v766
  %v887 = vpack.c.b16 %v769, %v768
  %v888 = vpack.c.b16 %v771, %v770
  %v889 = vpack.c.b16 %v773, %v772
  %v890 = vpack.c.b16 %v775, %v774
  %v891 = vpack.c.b16 %v777, %v776
  %v892 = vpack.c.b16 %v779, %v778
  %v893 = vpack.c.b16 %v781, %v780
  %v894 = vpack.c.b16 %v783, %v782
  %v895 = vpack.c.b16 %v785, %v784
  %v896 = vpack.c.b16 %v787, %v786
  %v897 = vpack.c.b16 %v789, %v788
  %v898 = vpack.c.b16 %v791, %v790
  %v899 = vpack.c.b16 %v793, %v792
  %v900 = vpack.c.b16 %v795, %v794
  %v901 = vpack.c.b16 %v797, %v796
  %v902 = vpack.c.b16 %v799, %v798
  %v903 = vpack.c.b16 %v801, %v800
  %v904 = vpack.c.b16 %v803, %v802
  %v905 = vpack.c.b16 %v805, %v804
  %v906 = vpack.c.b16 %v807, %v806
  %v907 = vpack.c.b16 %v809, %v808
  %v908 = vpack.c.b16 %v811, %v810
  %v909 = vpack.c.b16 %v813, %v812
  %v910 = vpack.c.b16 %v815, %v814
  %v911 = vpack.c.b16 %v817, %v816
  %v912 = vpack.c.b16 %v819, %v818
  %v913 = vpack.c.b16 %v821, %v820
  %v914 = vpack.c.b16 %v823, %v822
  %v915 = vpack.c.b16 %v825, %v824
  %v916 = vpack.c.b16 %v827, %v826
  %v917 = vpack.c.b16 %v829, %v828
  %v918 = vpack.c.b16 %v831, %v830
  %v919 = vpack.c.b16 %v833, %v832
  %v920 = vpack.c.b16 %v835, %v834
  %v921 = vpack.c.b16 %v837, %v836
  %v922 = vpack.c.b16 %v839, %v838
  %v923 = vpack.c.b16 %v841, %v840
  %v924 = vpack.c.b16 %v843, %v842
  %v925 = vpack.c.b16 %v845, %v844
  %v926 = vpack.c.b16 %v847, %v846
  %v927 = vpack.c.b16 %v849, %v848
  %v928 = vpack.c.b16 %v851, %v850
  %v929 = vpack.c.b16 %v853, %v852
  %v930 = vpack.c.b16 %v855, %v854
  %v931 = vpack.c.b16 %v857, %v856
  %v932 = vpack.c.b16 %v859, %v858
  %v933 = vpack.c.b16 %v861, %v860
  %v934 = vpack.c.b16 %v863, %v862
  %v935 = vpack.c.b16 %v865, %v864
  %v936 = vpack.c.b16 %v867, %v866
  %v937 = vpack.c.b16 %v869, %v868
  %v938 = vpack.c.b16 %v871, %v870
  %v939 = vpack.c.b16 %v873, %v872
  %v940 = vpack.c.b16 %v875, %v874
  %v941 = vpack.c.b16 %v877, %v876
  %1006 = vmatpush.bf16.msra.mxu0 %v885
  %1007 = vmatpush.bf16.msra.mxu0 %v884
  %1008 = vmatpush.bf16.msra.mxu0 %v883
  %1009 = vmatpush.bf16.msra.mxu0 %v882
  %1010 = vmatpush.bf16.msra.mxu0 %v881
  %1011 = vmatpush.bf16.msra.mxu0 %v880
  %1012 = vmatpush.bf16.msra.mxu0 %v879
  %1013 = vmatpush.bf16.msra.mxu0 %v878
  %1014 = vmatmul.bf16.gmra.mxu0 %v494
  %v1015 = vpop.f32.mrf.mxu0
  %v1016 = vadd.f32 %v225, %v1015
  %v1017 = vpop.f32.mrf.mxu0
  %v1018 = vadd.f32 %v230, %v1017
  %1019 = vmatmul.bf16.gmra.mxu0 %v502
  %v1020 = vpop.f32.mrf.mxu0
  %v1021 = vadd.f32 %v235, %v1020
  %v1022 = vpop.f32.mrf.mxu0
  %v1023 = vadd.f32 %v240, %v1022
  %1024 = vmatmul.bf16.gmra.mxu0 %v510
  %v1025 = vpop.f32.mrf.mxu0
  %v1026 = vadd.f32 %v245, %v1025
  %v1027 = vpop.f32.mrf.mxu0
  %v1028 = vadd.f32 %v250, %v1027
  %1029 = vmatmul.bf16.gmra.mxu0 %v518
  %v1030 = vpop.f32.mrf.mxu0
  %v1031 = vadd.f32 %v255, %v1030
  %v1032 = vpop.f32.mrf.mxu0
  %v1033 = vadd.f32 %v260, %v1032
  %1034 = vmatmul.bf16.gmra.mxu0 %v526
  %v1035 = vpop.f32.mrf.mxu0
  %v1036 = vadd.f32 %v265, %v1035
  %v1037 = vpop.f32.mrf.mxu0
  %v1038 = vadd.f32 %v270, %v1037
  %1039 = vmatmul.bf16.gmra.mxu0 %v534
  %v1040 = vpop.f32.mrf.mxu0
  %v1041 = vadd.f32 %v275, %v1040
  %v1042 = vpop.f32.mrf.mxu0
  %v1043 = vadd.f32 %v280, %v1042
  %1044 = vmatmul.bf16.gmra.mxu0 %v542
  %v1045 = vpop.f32.mrf.mxu0
  %v1046 = vadd.f32 %v285, %v1045
  %v1047 = vpop.f32.mrf.mxu0
  %v1048 = vadd.f32 %v290, %v1047
  %1049 = vmatmul.bf16.gmra.mxu0 %v550
  %v1050 = vpop.f32.mrf.mxu0
  %v1051 = vadd.f32 %v295, %v1050
  %v1052 = vpop.f32.mrf.mxu0
  %v1053 = vadd.f32 %v300, %v1052
  %1054 = vdwg.mxu0
  %1055 = vmatpush.bf16.msra.mxu0 %v893
  %1056 = vmatpush.bf16.msra.mxu0 %v892
  %1057 = vmatpush.bf16.msra.mxu0 %v891
  %1058 = vmatpush.bf16.msra.mxu0 %v890
  %1059 = vmatpush.bf16.msra.mxu0 %v889
  %1060 = vmatpush.bf16.msra.mxu0 %v888
  %1061 = vmatpush.bf16.msra.mxu0 %v887
  %1062 = vmatpush.bf16.msra.mxu0 %v886
  %1063 = vmatmul.bf16.gmra.mxu0 %v495
  %v1064 = vpop.f32.mrf.mxu0
  %v1065 = vadd.f32 %v1016, %v1064
  %v1066 = vpop.f32.mrf.mxu0
  %v1067 = vadd.f32 %v1018, %v1066
  %1068 = vmatmul.bf16.gmra.mxu0 %v503
  %v1069 = vpop.f32.mrf.mxu0
  %v1070 = vadd.f32 %v1021, %v1069
  %v1071 = vpop.f32.mrf.mxu0
  %v1072 = vadd.f32 %v1023, %v1071
  %1073 = vmatmul.bf16.gmra.mxu0 %v511
  %v1074 = vpop.f32.mrf.mxu0
  %v1075 = vadd.f32 %v1026, %v1074
  %v1076 = vpop.f32.mrf.mxu0
  %v1077 = vadd.f32 %v1028, %v1076
  %1078 = vmatmul.bf16.gmra.mxu0 %v519
  %v1079 = vpop.f32.mrf.mxu0
  %v1080 = vadd.f32 %v1031, %v1079
  %v1081 = vpop.f32.mrf.mxu0
  %v1082 = vadd.f32 %v1033, %v1081
  %1083 = vmatmul.bf16.gmra.mxu0 %v527
  %v1084 = vpop.f32.mrf.mxu0
  %v1085 = vadd.f32 %v1036, %v1084
  %v1086 = vpop.f32.mrf.mxu0
  %v1087 = vadd.f32 %v1038, %v1086
  %1088 = vmatmul.bf16.gmra.mxu0 %v535
  %v1089 = vpop.f32.mrf.mxu0
  %v1090 = vadd.f32 %v1041, %v1089
  %v1091 = vpop.f32.mrf.mxu0
  %v1092 = vadd.f32 %v1043, %v1091
  %1093 = vmatmul.bf16.gmra.mxu0 %v543
  %v1094 = vpop.f32.mrf.mxu0
  %v1095 = vadd.f32 %v1046, %v1094
  %v1096 = vpop.f32.mrf.mxu0
  %v1097 = vadd.f32 %v1048, %v1096
  %1098 = vmatmul.bf16.gmra.mxu0 %v551
  %v1099 = vpop.f32.mrf.mxu0
  %v1100 = vadd.f32 %v1051, %v1099
  %v1101 = vpop.f32.mrf.mxu0
  %v1102 = vadd.f32 %v1053, %v1101
  %1103 = vdwg.mxu0
  %1104 = vmatpush.bf16.msra.mxu0 %v901
  %1105 = vmatpush.bf16.msra.mxu0 %v900
  %1106 = vmatpush.bf16.msra.mxu0 %v899
  %1107 = vmatpush.bf16.msra.mxu0 %v898
  %1108 = vmatpush.bf16.msra.mxu0 %v897
  %1109 = vmatpush.bf16.msra.mxu0 %v896
  %1110 = vmatpush.bf16.msra.mxu0 %v895
  %1111 = vmatpush.bf16.msra.mxu0 %v894
  %1112 = vmatmul.bf16.gmra.mxu0 %v496
  %v1113 = vpop.f32.mrf.mxu0
  %v1114 = vadd.f32 %v1065, %v1113
  %v1115 = vpop.f32.mrf.mxu0
  %v1116 = vadd.f32 %v1067, %v1115
  %1117 = vmatmul.bf16.gmra.mxu0 %v504
  %v1118 = vpop.f32.mrf.mxu0
  %v1119 = vadd.f32 %v1070, %v1118
  %v1120 = vpop.f32.mrf.mxu0
  %v1121 = vadd.f32 %v1072, %v1120
  %1122 = vmatmul.bf16.gmra.mxu0 %v512
  %v1123 = vpop.f32.mrf.mxu0
  %v1124 = vadd.f32 %v1075, %v1123
  %v1125 = vpop.f32.mrf.mxu0
  %v1126 = vadd.f32 %v1077, %v1125
  %1127 = vmatmul.bf16.gmra.mxu0 %v520
  %v1128 = vpop.f32.mrf.mxu0
  %v1129 = vadd.f32 %v1080, %v1128
  %v1130 = vpop.f32.mrf.mxu0
  %v1131 = vadd.f32 %v1082, %v1130
  %1132 = vmatmul.bf16.gmra.mxu0 %v528
  %v1133 = vpop.f32.mrf.mxu0
  %v1134 = vadd.f32 %v1085, %v1133
  %v1135 = vpop.f32.mrf.mxu0
  %v1136 = vadd.f32 %v1087, %v1135
  %1137 = vmatmul.bf16.gmra.mxu0 %v536
  %v1138 = vpop.f32.mrf.mxu0
  %v1139 = vadd.f32 %v1090, %v1138
  %v1140 = vpop.f32.mrf.mxu0
  %v1141 = vadd.f32 %v1092, %v1140
  %1142 = vmatmul.bf16.gmra.mxu0 %v544
  %v1143 = vpop.f32.mrf.mxu0
  %v1144 = vadd.f32 %v1095, %v1143
  %v1145 = vpop.f32.mrf.mxu0
  %v1146 = vadd.f32 %v1097, %v1145
  %1147 = vmatmul.bf16.gmra.mxu0 %v552
  %v1148 = vpop.f32.mrf.mxu0
  %v1149 = vadd.f32 %v1100, %v1148
  %v1150 = vpop.f32.mrf.mxu0
  %v1151 = vadd.f32 %v1102, %v1150
  %1152 = vdwg.mxu0
  %1153 = vmatpush.bf16.msra.mxu0 %v909
  %1154 = vmatpush.bf16.msra.mxu0 %v908
  %1155 = vmatpush.bf16.msra.mxu0 %v907
  %1156 = vmatpush.bf16.msra.mxu0 %v906
  %1157 = vmatpush.bf16.msra.mxu0 %v905
  %1158 = vmatpush.bf16.msra.mxu0 %v904
  %1159 = vmatpush.bf16.msra.mxu0 %v903
  %1160 = vmatpush.bf16.msra.mxu0 %v902
  %1161 = vmatmul.bf16.gmra.mxu0 %v497
  %v1162 = vpop.f32.mrf.mxu0
  %v1163 = vadd.f32 %v1114, %v1162
  %v1164 = vpop.f32.mrf.mxu0
  %v1165 = vadd.f32 %v1116, %v1164
  %1166 = vmatmul.bf16.gmra.mxu0 %v505
  %v1167 = vpop.f32.mrf.mxu0
  %v1168 = vadd.f32 %v1119, %v1167
  %v1169 = vpop.f32.mrf.mxu0
  %v1170 = vadd.f32 %v1121, %v1169
  %1171 = vmatmul.bf16.gmra.mxu0 %v513
  %v1172 = vpop.f32.mrf.mxu0
  %v1173 = vadd.f32 %v1124, %v1172
  %v1174 = vpop.f32.mrf.mxu0
  %v1175 = vadd.f32 %v1126, %v1174
  %1176 = vmatmul.bf16.gmra.mxu0 %v521
  %v1177 = vpop.f32.mrf.mxu0
  %v1178 = vadd.f32 %v1129, %v1177
  %v1179 = vpop.f32.mrf.mxu0
  %v1180 = vadd.f32 %v1131, %v1179
  %1181 = vmatmul.bf16.gmra.mxu0 %v529
  %v1182 = vpop.f32.mrf.mxu0
  %v1183 = vadd.f32 %v1134, %v1182
  %v1184 = vpop.f32.mrf.mxu0
  %v1185 = vadd.f32 %v1136, %v1184
  %1186 = vmatmul.bf16.gmra.mxu0 %v537
  %v1187 = vpop.f32.mrf.mxu0
  %v1188 = vadd.f32 %v1139, %v1187
  %v1189 = vpop.f32.mrf.mxu0
  %v1190 = vadd.f32 %v1141, %v1189
  %1191 = vmatmul.bf16.gmra.mxu0 %v545
  %v1192 = vpop.f32.mrf.mxu0
  %v1193 = vadd.f32 %v1144, %v1192
  %v1194 = vpop.f32.mrf.mxu0
  %v1195 = vadd.f32 %v1146, %v1194
  %1196 = vmatmul.bf16.gmra.mxu0 %v553
  %v1197 = vpop.f32.mrf.mxu0
  %v1198 = vadd.f32 %v1149, %v1197
  %v1199 = vpop.f32.mrf.mxu0
  %v1200 = vadd.f32 %v1151, %v1199
  %1201 = vdwg.mxu0
  %1202 = vmatpush.bf16.msra.mxu0 %v917
  %1203 = vmatpush.bf16.msra.mxu0 %v916
  %1204 = vmatpush.bf16.msra.mxu0 %v915
  %1205 = vmatpush.bf16.msra.mxu0 %v914
  %1206 = vmatpush.bf16.msra.mxu0 %v913
  %1207 = vmatpush.bf16.msra.mxu0 %v912
  %1208 = vmatpush.bf16.msra.mxu0 %v911
  %1209 = vmatpush.bf16.msra.mxu0 %v910
  %1210 = vmatmul.bf16.gmra.mxu0 %v498
  %v1211 = vpop.f32.mrf.mxu0
  %v1212 = vadd.f32 %v1163, %v1211
  %v1213 = vpop.f32.mrf.mxu0
  %v1214 = vadd.f32 %v1165, %v1213
  %1215 = vmatmul.bf16.gmra.mxu0 %v506
  %v1216 = vpop.f32.mrf.mxu0
  %v1217 = vadd.f32 %v1168, %v1216
  %v1218 = vpop.f32.mrf.mxu0
  %v1219 = vadd.f32 %v1170, %v1218
  %1220 = vmatmul.bf16.gmra.mxu0 %v514
  %v1221 = vpop.f32.mrf.mxu0
  %v1222 = vadd.f32 %v1173, %v1221
  %v1223 = vpop.f32.mrf.mxu0
  %v1224 = vadd.f32 %v1175, %v1223
  %1225 = vmatmul.bf16.gmra.mxu0 %v522
  %v1226 = vpop.f32.mrf.mxu0
  %v1227 = vadd.f32 %v1178, %v1226
  %v1228 = vpop.f32.mrf.mxu0
  %v1229 = vadd.f32 %v1180, %v1228
  %1230 = vmatmul.bf16.gmra.mxu0 %v530
  %v1231 = vpop.f32.mrf.mxu0
  %v1232 = vadd.f32 %v1183, %v1231
  %v1233 = vpop.f32.mrf.mxu0
  %v1234 = vadd.f32 %v1185, %v1233
  %1235 = vmatmul.bf16.gmra.mxu0 %v538
  %v1236 = vpop.f32.mrf.mxu0
  %v1237 = vadd.f32 %v1188, %v1236
  %v1238 = vpop.f32.mrf.mxu0
  %v1239 = vadd.f32 %v1190, %v1238
  %1240 = vmatmul.bf16.gmra.mxu0 %v546
  %v1241 = vpop.f32.mrf.mxu0
  %v1242 = vadd.f32 %v1193, %v1241
  %v1243 = vpop.f32.mrf.mxu0
  %v1244 = vadd.f32 %v1195, %v1243
  %1245 = vmatmul.bf16.gmra.mxu0 %v554
  %v1246 = vpop.f32.mrf.mxu0
  %v1247 = vadd.f32 %v1198, %v1246
  %v1248 = vpop.f32.mrf.mxu0
  %v1249 = vadd.f32 %v1200, %v1248
  %1250 = vdwg.mxu0
  %1251 = vmatpush.bf16.msra.mxu0 %v925
  %1252 = vmatpush.bf16.msra.mxu0 %v924
  %1253 = vmatpush.bf16.msra.mxu0 %v923
  %1254 = vmatpush.bf16.msra.mxu0 %v922
  %1255 = vmatpush.bf16.msra.mxu0 %v921
  %1256 = vmatpush.bf16.msra.mxu0 %v920
  %1257 = vmatpush.bf16.msra.mxu0 %v919
  %1258 = vmatpush.bf16.msra.mxu0 %v918
  %1259 = vmatmul.bf16.gmra.mxu0 %v499
  %v1260 = vpop.f32.mrf.mxu0
  %v1261 = vadd.f32 %v1212, %v1260
  %v1262 = vpop.f32.mrf.mxu0
  %v1263 = vadd.f32 %v1214, %v1262
  %1264 = vmatmul.bf16.gmra.mxu0 %v507
  %v1265 = vpop.f32.mrf.mxu0
  %v1266 = vadd.f32 %v1217, %v1265
  %v1267 = vpop.f32.mrf.mxu0
  %v1268 = vadd.f32 %v1219, %v1267
  %1269 = vmatmul.bf16.gmra.mxu0 %v515
  %v1270 = vpop.f32.mrf.mxu0
  %v1271 = vadd.f32 %v1222, %v1270
  %v1272 = vpop.f32.mrf.mxu0
  %v1273 = vadd.f32 %v1224, %v1272
  %1274 = vmatmul.bf16.gmra.mxu0 %v523
  %v1275 = vpop.f32.mrf.mxu0
  %v1276 = vadd.f32 %v1227, %v1275
  %v1277 = vpop.f32.mrf.mxu0
  %v1278 = vadd.f32 %v1229, %v1277
  %1279 = vmatmul.bf16.gmra.mxu0 %v531
  %v1280 = vpop.f32.mrf.mxu0
  %v1281 = vadd.f32 %v1232, %v1280
  %v1282 = vpop.f32.mrf.mxu0
  %v1283 = vadd.f32 %v1234, %v1282
  %1284 = vmatmul.bf16.gmra.mxu0 %v539
  %v1285 = vpop.f32.mrf.mxu0
  %v1286 = vadd.f32 %v1237, %v1285
  %v1287 = vpop.f32.mrf.mxu0
  %v1288 = vadd.f32 %v1239, %v1287
  %1289 = vmatmul.bf16.gmra.mxu0 %v547
  %v1290 = vpop.f32.mrf.mxu0
  %v1291 = vadd.f32 %v1242, %v1290
  %v1292 = vpop.f32.mrf.mxu0
  %v1293 = vadd.f32 %v1244, %v1292
  %1294 = vmatmul.bf16.gmra.mxu0 %v555
  %v1295 = vpop.f32.mrf.mxu0
  %v1296 = vadd.f32 %v1247, %v1295
  %v1297 = vpop.f32.mrf.mxu0
  %v1298 = vadd.f32 %v1249, %v1297
  %1299 = vdwg.mxu0
  %1300 = vmatpush.bf16.msra.mxu0 %v933
  %1301 = vmatpush.bf16.msra.mxu0 %v932
  %1302 = vmatpush.bf16.msra.mxu0 %v931
  %1303 = vmatpush.bf16.msra.mxu0 %v930
  %1304 = vmatpush.bf16.msra.mxu0 %v929
  %1305 = vmatpush.bf16.msra.mxu0 %v928
  %1306 = vmatpush.bf16.msra.mxu0 %v927
  %1307 = vmatpush.bf16.msra.mxu0 %v926
  %1308 = vmatmul.bf16.gmra.mxu0 %v500
  %v1309 = vpop.f32.mrf.mxu0
  %v1310 = vadd.f32 %v1261, %v1309
  %v1311 = vpop.f32.mrf.mxu0
  %v1312 = vadd.f32 %v1263, %v1311
  %1313 = vmatmul.bf16.gmra.mxu0 %v508
  %v1314 = vpop.f32.mrf.mxu0
  %v1315 = vadd.f32 %v1266, %v1314
  %v1316 = vpop.f32.mrf.mxu0
  %v1317 = vadd.f32 %v1268, %v1316
  %1318 = vmatmul.bf16.gmra.mxu0 %v516
  %v1319 = vpop.f32.mrf.mxu0
  %v1320 = vadd.f32 %v1271, %v1319
  %v1321 = vpop.f32.mrf.mxu0
  %v1322 = vadd.f32 %v1273, %v1321
  %1323 = vmatmul.bf16.gmra.mxu0 %v524
  %v1324 = vpop.f32.mrf.mxu0
  %v1325 = vadd.f32 %v1276, %v1324
  %v1326 = vpop.f32.mrf.mxu0
  %v1327 = vadd.f32 %v1278, %v1326
  %1328 = vmatmul.bf16.gmra.mxu0 %v532
  %v1329 = vpop.f32.mrf.mxu0
  %v1330 = vadd.f32 %v1281, %v1329
  %v1331 = vpop.f32.mrf.mxu0
  %v1332 = vadd.f32 %v1283, %v1331
  %1333 = vmatmul.bf16.gmra.mxu0 %v540
  %v1334 = vpop.f32.mrf.mxu0
  %v1335 = vadd.f32 %v1286, %v1334
  %v1336 = vpop.f32.mrf.mxu0
  %v1337 = vadd.f32 %v1288, %v1336
  %1338 = vmatmul.bf16.gmra.mxu0 %v548
  %v1339 = vpop.f32.mrf.mxu0
  %v1340 = vadd.f32 %v1291, %v1339
  %v1341 = vpop.f32.mrf.mxu0
  %v1342 = vadd.f32 %v1293, %v1341
  %1343 = vmatmul.bf16.gmra.mxu0 %v556
  %v1344 = vpop.f32.mrf.mxu0
  %v1345 = vadd.f32 %v1296, %v1344
  %v1346 = vpop.f32.mrf.mxu0
  %v1347 = vadd.f32 %v1298, %v1346
  %1348 = vdwg.mxu0
  %1349 = vmatpush.bf16.msra.mxu0 %v941
  %1350 = vmatpush.bf16.msra.mxu0 %v940
  %1351 = vmatpush.bf16.msra.mxu0 %v939
  %1352 = vmatpush.bf16.msra.mxu0 %v938
  %1353 = vmatpush.bf16.msra.mxu0 %v937
  %1354 = vmatpush.bf16.msra.mxu0 %v936
  %1355 = vmatpush.bf16.msra.mxu0 %v935
  %1356 = vmatpush.bf16.msra.mxu0 %v934
  %1357 = vmatmul.bf16.gmra.mxu0 %v501
  %v1358 = vpop.f32.mrf.mxu0
  %v1359 = vadd.f32 %v1310, %v1358
  %v1360 = vpop.f32.mrf.mxu0
  %v1361 = vadd.f32 %v1312, %v1360
  %1362 = vmatmul.bf16.gmra.mxu0 %v509
  %v1363 = vpop.f32.mrf.mxu0
  %v1364 = vadd.f32 %v1315, %v1363
  %v1365 = vpop.f32.mrf.mxu0
  %v1366 = vadd.f32 %v1317, %v1365
  %1367 = vmatmul.bf16.gmra.mxu0 %v517
  %v1368 = vpop.f32.mrf.mxu0
  %v1369 = vadd.f32 %v1320, %v1368
  %v1370 = vpop.f32.mrf.mxu0
  %v1371 = vadd.f32 %v1322, %v1370
  %1372 = vmatmul.bf16.gmra.mxu0 %v525
  %v1373 = vpop.f32.mrf.mxu0
  %v1374 = vadd.f32 %v1325, %v1373
  %v1375 = vpop.f32.mrf.mxu0
  %v1376 = vadd.f32 %v1327, %v1375
  %1377 = vmatmul.bf16.gmra.mxu0 %v533
  %v1378 = vpop.f32.mrf.mxu0
  %v1379 = vadd.f32 %v1330, %v1378
  %v1380 = vpop.f32.mrf.mxu0
  %v1381 = vadd.f32 %v1332, %v1380
  %1382 = vmatmul.bf16.gmra.mxu0 %v541
  %v1383 = vpop.f32.mrf.mxu0
  %v1384 = vadd.f32 %v1335, %v1383
  %v1385 = vpop.f32.mrf.mxu0
  %v1386 = vadd.f32 %v1337, %v1385
  %1387 = vmatmul.bf16.gmra.mxu0 %v549
  %v1388 = vpop.f32.mrf.mxu0
  %v1389 = vadd.f32 %v1340, %v1388
  %v1390 = vpop.f32.mrf.mxu0
  %v1391 = vadd.f32 %v1342, %v1390
  %1392 = vmatmul.bf16.gmra.mxu0 %v557
  %v1393 = vpop.f32.mrf.mxu0
  %v1394 = vadd.f32 %v1345, %v1393
  %v1395 = vpop.f32.mrf.mxu0
  %v1396 = vadd.f32 %v1347, %v1395
  %1397 = vdwg.mxu0
  %vm1398 = vcmp.gt.f32.partialorder %v1359, 0.0
  %vm1399 = vcmp.gt.f32.partialorder %v1361, 0.0
  %vm1400 = vcmp.gt.f32.partialorder %v1364, 0.0
  %vm1401 = vcmp.gt.f32.partialorder %v1366, 0.0
  %vm1402 = vcmp.gt.f32.partialorder %v1369, 0.0
  %vm1403 = vcmp.gt.f32.partialorder %v1371, 0.0
  %vm1404 = vcmp.gt.f32.partialorder %v1374, 0.0
  %vm1405 = vcmp.gt.f32.partialorder %v1376, 0.0
  %vm1406 = vcmp.gt.f32.partialorder %v1379, 0.0
  %vm1407 = vcmp.gt.f32.partialorder %v1381, 0.0
  %vm1408 = vcmp.gt.f32.partialorder %v1384, 0.0
  %vm1409 = vcmp.gt.f32.partialorder %v1386, 0.0
  %vm1410 = vcmp.gt.f32.partialorder %v1389, 0.0
  %vm1411 = vcmp.gt.f32.partialorder %v1391, 0.0
  %vm1412 = vcmp.gt.f32.partialorder %v1394, 0.0
  %vm1413 = vcmp.gt.f32.partialorder %v1396, 0.0
  %v1414 = vmul.f32 %v1359, 0.2
  %v1415 = vmul.f32 %v1361, 0.2
  %v1416 = vmul.f32 %v1364, 0.2
  %v1417 = vmul.f32 %v1366, 0.2
  %v1418 = vmul.f32 %v1369, 0.2
  %v1419 = vmul.f32 %v1371, 0.2
  %v1420 = vmul.f32 %v1374, 0.2
  %v1421 = vmul.f32 %v1376, 0.2
  %v1422 = vmul.f32 %v1379, 0.2
  %v1423 = vmul.f32 %v1381, 0.2
  %v1424 = vmul.f32 %v1384, 0.2
  %v1425 = vmul.f32 %v1386, 0.2
  %v1426 = vmul.f32 %v1389, 0.2
  %v1427 = vmul.f32 %v1391, 0.2
  %v1428 = vmul.f32 %v1394, 0.2
  %v1429 = vmul.f32 %v1396, 0.2
  %v1430 = vsel %vm1398, %v1359, %v1414
  %v1431 = vsel %vm1399, %v1361, %v1415
  %v1432 = vsel %vm1400, %v1364, %v1416
  %v1433 = vsel %vm1401, %v1366, %v1417
  %v1434 = vsel %vm1402, %v1369, %v1418
  %v1435 = vsel %vm1403, %v1371, %v1419
  %v1436 = vsel %vm1404, %v1374, %v1420
  %v1437 = vsel %vm1405, %v1376, %v1421
  %v1438 = vsel %vm1406, %v1379, %v1422
  %v1439 = vsel %vm1407, %v1381, %v1423
  %v1440 = vsel %vm1408, %v1384, %v1424
  %v1441 = vsel %vm1409, %v1386, %v1425
  %v1442 = vsel %vm1410, %v1389, %v1426
  %v1443 = vsel %vm1411, %v1391, %v1427
  %v1444 = vsel %vm1412, %v1394, %v1428
  %v1445 = vsel %vm1413, %v1396, %v1429
  %v1446 = vpack.c.bf16 %v1430, %v1430
  %v1447 = vpack.c.bf16 %v1431, %v1431
  %v1448 = vpack.c.bf16 %v1432, %v1432
  %v1449 = vpack.c.bf16 %v1433, %v1433
  %v1450 = vpack.c.bf16 %v1434, %v1434
  %v1451 = vpack.c.bf16 %v1435, %v1435
  %v1452 = vpack.c.bf16 %v1436, %v1436
  %v1453 = vpack.c.bf16 %v1437, %v1437
  %v1454 = vpack.c.bf16 %v1438, %v1438
  %v1455 = vpack.c.bf16 %v1439, %v1439
  %v1456 = vpack.c.bf16 %v1440, %v1440
  %v1457 = vpack.c.bf16 %v1441, %v1441
  %v1458 = vpack.c.bf16 %v1442, %v1442
  %v1459 = vpack.c.bf16 %v1443, %v1443
  %v1460 = vpack.c.bf16 %v1444, %v1444
  %v1461 = vpack.c.bf16 %v1445, %v1445
  %1462 = vst [vmem:[%s3] sm:$0xf] %v1446
  %1463 = vst [vmem:[%s3 + $0x4] sm:$0xf] %v1447
  %1464 = vst [vmem:[%s3 + $0x8] sm:$0xf] %v1448
  %1465 = vst [vmem:[%s3 + $0xc] sm:$0xf] %v1449
  %1466 = vst [vmem:[%s3 + $0x10] sm:$0xf] %v1450
  %1467 = vst [vmem:[%s3 + $0x14] sm:$0xf] %v1451
  %1468 = vst [vmem:[%s3 + $0x18] sm:$0xf] %v1452
  %1469 = vst [vmem:[%s3 + $0x1c] sm:$0xf] %v1453
  %1470 = vst [vmem:[%s3 + $0x20] sm:$0xf] %v1454
  %1471 = vst [vmem:[%s3 + $0x24] sm:$0xf] %v1455
  %1472 = vst [vmem:[%s3 + $0x28] sm:$0xf] %v1456
  %1473 = vst [vmem:[%s3 + $0x2c] sm:$0xf] %v1457
  %1474 = vst [vmem:[%s3 + $0x30] sm:$0xf] %v1458
  %1475 = vst [vmem:[%s3 + $0x34] sm:$0xf] %v1459
  %1476 = vst [vmem:[%s3 + $0x38] sm:$0xf] %v1460
  %1477 = vst [vmem:[%s3 + $0x3c] sm:$0xf] %v1461
  // Predicated region
  $region14: #{discriminator_forward.9} parent=0 // pred_check
    _
  $region15: #{discriminator_forward.9} parent=0 // pred_check_branch
    %1479 = sbr.rel (0) target = $region17
  $region16: #{discriminator_forward.9} parent=0 // pred_region
    _
  $region17: #{discriminator_forward.9} parent=0 // pred_fallthru
    _
  // Predicated region
  $region18: #{discriminator_forward.9} parent=0 // pred_check
    _
  $region19: #{discriminator_forward.9} parent=0 // pred_check_branch
    %1481 = sbr.rel (0) target = $region21
  $region20: #{discriminator_forward.9} parent=0 // pred_region
    _
  $region21: #{discriminator_forward.9} parent=0 // pred_fallthru
    _

</llo_original>
